<compile_context>
chip_gen: v6e
topology: v6e:2x2x1
jax: 0.10.0
libtpu: 0.0.40
codegen_flags: <defaults>
</compile_context>

<pallas_src>
import functools

import jax
import jax.numpy as jnp
from jax import lax
from jax.experimental import pallas as pl
from jax.experimental.pallas import tpu as pltpu


def _round_up(x, m):
    return (x + m - 1) // m * m


def _pad_cols(v, cp):
    v = v.astype(jnp.float32)
    return jnp.pad(v, ((0, 0), (0, cp - v.shape[-1])))


def _prep_conv3x3(w_hwio, cin_pad, cout_pad, fuse_rows):
    """HWIO 3x3 weight -> bf16 matmul layout.

    fuse_rows=True : (3, 3*cin_pad, cout_pad)   one K-fused matrix per kernel row
    fuse_rows=False: (9, cin_pad,   cout_pad)   one thin matrix per tap (t = 3*i+j)
    """
    kh, kw, cin, cout = w_hwio.shape
    wp = jnp.pad(w_hwio, ((0, 0), (0, 0),
                          (0, cin_pad - cin), (0, cout_pad - cout)))
    if fuse_rows:
        return wp.reshape(kh, kw * cin_pad, cout_pad).astype(jnp.bfloat16)
    return wp.reshape(kh * kw, cin_pad, cout_pad).astype(jnp.bfloat16)


def _bn_fold(psum, psumsq, count, gamma, beta, eps):
    """Single-pass batch stats -> folded affine (scale, bias)."""
    mean = psum / count
    var = jnp.maximum(psumsq / count - mean * mean, 0.0)
    scale = gamma * lax.rsqrt(var + eps)
    return scale, beta - mean * scale


def _pad_hw1(a):
    """Zero-pad a (H, W, C) tile by 1 on each side of H and W, in-register."""
    h, w, c = a.shape
    zr = jnp.zeros((1, w, c), a.dtype)
    a = jnp.concatenate([zr, a, zr], axis=0)
    zc = jnp.zeros((h + 2, 1, c), a.dtype)
    return jnp.concatenate([zc, a, zc], axis=1)


def _compiler_params():
    return pltpu.CompilerParams(dimension_semantics=("parallel",),
                                vmem_limit_bytes=48 * 1024 * 1024)


# ---------------------------------------------------------------------------
# Pass 1: conv1 (3x3) + fused 1x1 shortcut conv, shifted matmuls on the MXU,
#         emitting bf16 pre-BN outputs + packed per-image sum / sum-of-squares.
# ---------------------------------------------------------------------------
def _conv1_kernel(*refs, row_taps, sc_tap, ho, wo, cp, cin, n_planes,
                  pad_in_kernel, fuse_k):
    pos = 0
    plane_refs = refs[pos:pos + n_planes]
    pos += n_planes
    w1_ref = refs[pos]
    pos += 1
    has_sc = sc_tap is not None
    ws_ref = None
    if has_sc:
        ws_ref = refs[pos]
        pos += 1
    y1_ref = refs[pos]
    st_ref = refs[pos + 1]
    pos += 2
    res_ref = refs[pos] if has_sc else None

    if pad_in_kernel:
        # stride == 1: the single plane is the raw (H, W, Cin) bf16 activation;
        # build the 1-pixel zero halo in-register (no HBM pad round trip).
        planes = [_pad_hw1(plane_refs[0][0])]
    else:
        planes = [r[0] for r in plane_refs]

    m = ho * wo
    acc = jnp.zeros((m, cp), jnp.float32)
    if fuse_k:
        # 3 K-fused matmuls, K = 3*cin.
        for i, rt in enumerate(row_taps):
            cols = [planes[p][oi:oi + ho, oj:oj + wo, :] for (p, oi, oj) in rt]
            tap = jnp.concatenate(cols, axis=-1).reshape(m, 3 * cin)
            acc = acc + jnp.dot(tap, w1_ref[i],
                                preferred_element_type=jnp.float32)
    else:
        # 9 thin matmuls (small Cin); tap order t = 3*i + j matches the weight.
        flat = [t for rt in row_taps for t in rt]
        for t, (p, oi, oj) in enumerate(flat):
            tap = planes[p][oi:oi + ho, oj:oj + wo, :].reshape(m, cin)
            acc = acc + jnp.dot(tap, w1_ref[t],
                                preferred_element_type=jnp.float32)

    y1_ref[0] = acc.reshape(ho, wo, cp).astype(jnp.bfloat16)
    stats_rows = [jnp.sum(acc, axis=0, keepdims=True),
                  jnp.sum(acc * acc, axis=0, keepdims=True)]

    if has_sc:
        p, oi, oj = sc_tap
        tap = planes[p][oi:oi + ho, oj:oj + wo, :].reshape(m, cin)
        s = jnp.dot(tap, ws_ref[...], preferred_element_type=jnp.float32)
        res_ref[0] = s.reshape(ho, wo, cp).astype(jnp.bfloat16)
        stats_rows += [jnp.sum(s, axis=0, keepdims=True),
                       jnp.sum(s * s, axis=0, keepdims=True)]

    st_ref[0] = jnp.concatenate(stats_rows, axis=0)


def _conv1_pass(plane_arrays, w1, ws, ho, wo, cp, cin, row_taps, sc_tap,
                pad_in_kernel, fuse_k):
    n = plane_arrays[0].shape[0]
    has_sc = sc_tap is not None
    nstat = 4 if has_sc else 2
    kernel = functools.partial(
        _conv1_kernel, row_taps=row_taps, sc_tap=sc_tap, ho=ho, wo=wo, cp=cp,
        cin=cin, n_planes=len(plane_arrays), pad_in_kernel=pad_in_kernel,
        fuse_k=fuse_k)

    inputs = list(plane_arrays) + [w1] + ([ws] if has_sc else [])
    in_specs = [pl.BlockSpec((1,) + a.shape[1:], lambda i: (i, 0, 0, 0))
                for a in plane_arrays]
    in_specs.append(pl.BlockSpec(w1.shape, lambda i: (0, 0, 0)))
    if has_sc:
        in_specs.append(pl.BlockSpec(ws.shape, lambda i: (0, 0)))

    out_shape = [jax.ShapeDtypeStruct((n, ho, wo, cp), jnp.bfloat16),   # y1 pre-BN
                 jax.ShapeDtypeStruct((n, nstat, cp), jnp.float32)]     # packed stats
    out_specs = [pl.BlockSpec((1, ho, wo, cp), lambda i: (i, 0, 0, 0)),
                 pl.BlockSpec((1, nstat, cp), lambda i: (i, 0, 0))]
    if has_sc:
        out_shape.append(jax.ShapeDtypeStruct((n, ho, wo, cp), jnp.bfloat16))
        out_specs.append(pl.BlockSpec((1, ho, wo, cp), lambda i: (i, 0, 0, 0)))

    flops = 2 * n * ho * wo * (9 * cin) * cp
    if has_sc:
        flops += 2 * n * ho * wo * cin * cp
    bytes_in = sum(int(a.size) * a.dtype.itemsize for a in inputs)
    bytes_out = (n * ho * wo * cp * 2 * (2 if has_sc else 1)
                 + n * nstat * cp * 4)

    return pl.pallas_call(
        kernel,
        out_shape=tuple(out_shape),
        grid=(n,),
        in_specs=in_specs,
        out_specs=tuple(out_specs),
        compiler_params=_compiler_params(),
        cost_estimate=pl.CostEstimate(flops=int(flops), transcendentals=0,
                                      bytes_accessed=int(bytes_in + bytes_out)),
    )(*inputs)


# ---------------------------------------------------------------------------
# Pass 2: fused BN1 + ReLU + conv2 (3x3, stride 1, K-fused) + BN2 partial stats.
# ---------------------------------------------------------------------------
def _conv2_kernel(y1_ref, s1_ref, b1_ref, w2_ref, y2_ref, st_ref, *, ho, wo, cp):
    a = jnp.maximum(y1_ref[0].astype(jnp.float32) * s1_ref[...] + b1_ref[...],
                    0.0).astype(jnp.bfloat16)
    ap = _pad_hw1(a)                           # (ho+2, wo+2, cp), zero halo

    m = ho * wo
    acc = jnp.zeros((m, cp), jnp.float32)
    for i in range(3):
        tap = jnp.concatenate([ap[i:i + ho, j:j + wo, :] for j in range(3)],
                              axis=-1).reshape(m, 3 * cp)
        acc = acc + jnp.dot(tap, w2_ref[i], preferred_element_type=jnp.float32)

    y2_ref[0] = acc.reshape(ho, wo, cp).astype(jnp.bfloat16)
    st_ref[0] = jnp.concatenate([jnp.sum(acc, axis=0, keepdims=True),
                                 jnp.sum(acc * acc, axis=0, keepdims=True)],
                                axis=0)


def _conv2_pass(y1, scale1, bias1, w2, ho, wo, cp):
    n = y1.shape[0]
    kernel = functools.partial(_conv2_kernel, ho=ho, wo=wo, cp=cp)
    flops = 2 * n * ho * wo * (9 * cp) * cp
    bytes_acc = (int(y1.size) * 2 + int(w2.size) * 2 + 2 * cp * 4 * 2
                 + n * ho * wo * cp * 2 + n * 2 * cp * 4)
    return pl.pallas_call(
        kernel,
        out_shape=(jax.ShapeDtypeStruct((n, ho, wo, cp), jnp.bfloat16),
                   jax.ShapeDtypeStruct((n, 2, cp), jnp.float32)),
        grid=(n,),
        in_specs=[pl.BlockSpec((1, ho, wo, cp), lambda i: (i, 0, 0, 0)),
                  pl.BlockSpec((1, cp), lambda i: (0, 0)),
                  pl.BlockSpec((1, cp), lambda i: (0, 0)),
                  pl.BlockSpec(w2.shape, lambda i: (0, 0, 0))],
        out_specs=(pl.BlockSpec((1, ho, wo, cp), lambda i: (i, 0, 0, 0)),
                   pl.BlockSpec((1, 2, cp), lambda i: (i, 0, 0))),
        compiler_params=_compiler_params(),
        cost_estimate=pl.CostEstimate(flops=int(flops), transcendentals=0,
                                      bytes_accessed=int(bytes_acc)),
    )(y1, scale1, bias1, w2)


# ---------------------------------------------------------------------------
# Pass 3: BN2 + (shortcut BN) + residual add + ReLU.
# ---------------------------------------------------------------------------
def _finalize_kernel(y2_ref, res_ref, s2_ref, b2_ref, *rest, has_sc):
    if has_sc:
        ss_ref, bs_ref, o_ref = rest
    else:
        (o_ref,) = rest
    out = y2_ref[0].astype(jnp.float32) * s2_ref[...] + b2_ref[...]
    res = res_ref[0].astype(jnp.float32)
    if has_sc:
        res = res * ss_ref[...] + bs_ref[...]
    o_ref[0] = jnp.maximum(out + res, 0.0)


def _finalize_pass(y2, res, scale2, bias2, scale_s, bias_s, has_sc):
    n, ho, wo, cp = y2.shape
    kernel = functools.partial(_finalize_kernel, has_sc=has_sc)
    vec = pl.BlockSpec((1, cp), lambda i: (0, 0))
    tile = pl.BlockSpec((1, ho, wo, cp), lambda i: (i, 0, 0, 0))
    inputs = [y2, res, scale2, bias2] + ([scale_s, bias_s] if has_sc else [])
    in_specs = [tile, tile, vec, vec] + ([vec, vec] if has_sc else [])
    bytes_acc = (sum(int(a.size) * a.dtype.itemsize for a in inputs)
                 + n * ho * wo * cp * 4)
    return pl.pallas_call(
        kernel,
        out_shape=jax.ShapeDtypeStruct((n, ho, wo, cp), jnp.float32),
        grid=(n,),
        in_specs=in_specs,
        out_specs=tile,
        compiler_params=_compiler_params(),
        cost_estimate=pl.CostEstimate(flops=int(6 * n * ho * wo * cp),
                                      transcendentals=0,
                                      bytes_accessed=int(bytes_acc)),
    )(*inputs)


# ---------------------------------------------------------------------------
# SlimmableBasicBlock forward, NHWC.
# ---------------------------------------------------------------------------
def slimmable_basic_block(x, params, *, in_planes, planes, stride,
                          width_mult=1.0, eps=1e-5):
    assert stride in (1, 2)
    assert width_mult > 0.0
    n, h, w, _ = x.shape
    ho = (h - 1) // stride + 1
    wo = (w - 1) // stride + 1
    cp = _round_up(planes, 128)        # lane-dense channel layout
    count = n * ho * wo
    has_sc = (stride != 1) or (in_planes != planes)
    fuse_k1 = (in_planes % 64 == 0)    # K-fuse conv1 only when concat is cheap

    if width_mult != 1.0:
        x = x * width_mult             # feeds both conv1 and the shortcut

    # kernel-ready parameters (channel padded, bf16 weights)
    w1 = _prep_conv3x3(params["w1_hwio"], in_planes, cp, fuse_k1)
    w2 = _prep_conv3x3(params["w2_hwio"], cp, cp, True)
    g1, b1 = _pad_cols(params["g1"], cp), _pad_cols(params["b1"], cp)
    g2, b2 = _pad_cols(params["g2"], cp), _pad_cols(params["b2"], cp)
    ws = gs = bs = None
    if has_sc:
        ws = jnp.pad(params["ws_hwio"],
                     ((0, 0), (0, 0), (0, 0), (0, cp - planes)))
        ws = ws.reshape(in_planes, cp).astype(jnp.bfloat16)
        gs, bs = _pad_cols(params["gs"], cp), _pad_cols(params["bs"], cp)

    x_bf = x.astype(jnp.bfloat16)      # fuses with the producer in a real net
    if stride == 1:
        plane_arrays = [x_bf]          # 1-pixel halo built in-kernel
        row_taps = tuple(tuple((0, i, j) for j in range(3)) for i in range(3))
        sc_tap = (0, 1, 1) if has_sc else None
        pad_in_kernel = True
    else:
        # one-time parity split so every in-kernel tap slice is contiguous
        xpad = jnp.pad(x_bf, ((0, 0), (1, 1), (1, 1), (0, 0)))
        plane_arrays = [xpad[:, pi::2, pj::2, :] for pi in (0, 1) for pj in (0, 1)]
        row_taps = tuple(tuple(((i % 2) * 2 + (j % 2), i // 2, j // 2)
                               for j in range(3)) for i in range(3))
        sc_tap = (3, 0, 0) if has_sc else None
        pad_in_kernel = False

    # ---- pass 1: conv1 + fused 1x1 shortcut conv + packed BN partial stats --
    outs = _conv1_pass(plane_arrays, w1, ws, ho, wo, cp, in_planes,
                       row_taps, sc_tap, pad_in_kernel, fuse_k1)
    if has_sc:
        y1, stats1, res = outs
    else:
        y1, stats1 = outs
        # identity shortcut: the residual is x itself (bf16, lane-padded only
        # when planes is not already a multiple of 128)
        res = x_bf if cp == in_planes else jnp.pad(
            x_bf, ((0, 0), (0, 0), (0, 0), (0, cp - in_planes)))
    st1 = stats1.sum(axis=0)
    scale1, bias1 = _bn_fold(st1[0], st1[1], count, g1, b1, eps)
    if width_mult != 1.0:
        # reference multiplies the activation by width_mult again before conv2;
        # relu(z) * wm == relu(z * wm) for wm > 0, so fold it into the affine.
        scale1, bias1 = scale1 * width_mult, bias1 * width_mult
    scale_s = bias_s = None
    if has_sc:
        scale_s, bias_s = _bn_fold(st1[2], st1[3], count, gs, bs, eps)

    # ---- pass 2: fused BN1+ReLU + conv2 (K-fused) + packed BN partial stats -
    y2, stats2 = _conv2_pass(y1, scale1, bias1, w2, ho, wo, cp)
    st2 = stats2.sum(axis=0)
    scale2, bias2 = _bn_fold(st2[0], st2[1], count, g2, b2, eps)

    # ---- pass 3: BN2 + shortcut BN + residual add + ReLU --------------------
    out = _finalize_pass(y2, res, scale2, bias2, scale_s, bias_s, has_sc)
    return out[..., :planes]


# ---------------------------------------------------------------------------
# Pure-JAX reference (matching precision: bf16 conv inputs, f32 accumulation)
# ---------------------------------------------------------------------------
def _ref_conv(x, w_hwio, stride, padding):
    return lax.conv_general_dilated(
        x.astype(jnp.bfloat16), w_hwio.astype(jnp.bfloat16),
        (stride, stride), [(padding, padding)] * 2,
        dimension_numbers=("NHWC", "HWIO", "NHWC"),
        preferred_element_type=jnp.float32)


def _ref_bn(x, gamma, beta, eps=1e-5):
    mean = x.mean(axis=(0, 1, 2), keepdims=True)
    var = ((x - mean) ** 2).mean(axis=(0, 1, 2), keepdims=True)
    return (x - mean) * lax.rsqrt(var + eps) * gamma + beta


def reference_block(x, p, *, in_planes, planes, stride, width_mult=1.0):
    x = x * width_mult
    out = jax.nn.relu(_ref_bn(_ref_conv(x, p["w1_hwio"], stride, 1),
                              p["g1"], p["b1"]))
    out = _ref_bn(_ref_conv(out * width_mult, p["w2_hwio"], 1, 1),
                  p["g2"], p["b2"])
    if stride != 1 or in_planes != planes:
        short = _ref_bn(_ref_conv(x, p["ws_hwio"], stride, 0),
                        p["gs"], p["bs"])
    else:
        short = x
    return jax.nn.relu(out + short)


# ---------------------------------------------------------------------------
# Deterministic parameter init
# ---------------------------------------------------------------------------
def make_params(key, in_planes, planes, stride):
    keys = jax.random.split(key, 10)
    w1 = jax.random.normal(keys[0], (3, 3, in_planes, planes), jnp.float32) * 0.1
    w2 = jax.random.normal(keys[1], (3, 3, planes, planes), jnp.float32) * 0.1
    p = {
        "w1_hwio": w1, "w2_hwio": w2,
        "g1": 1.0 + 0.1 * jax.random.normal(keys[2], (1, planes), jnp.float32),
        "b1": 0.1 * jax.random.normal(keys[3], (1, planes), jnp.float32),
        "g2": 1.0 + 0.1 * jax.random.normal(keys[4], (1, planes), jnp.float32),
        "b2": 0.1 * jax.random.normal(keys[5], (1, planes), jnp.float32),
    }
    if stride != 1 or in_planes != planes:
        p["ws_hwio"] = jax.random.normal(
            keys[6], (1, 1, in_planes, planes), jnp.float32) * 0.1
        p["gs"] = 1.0 + 0.1 * jax.random.normal(keys[7], (1, planes), jnp.float32)
        p["bs"] = 0.1 * jax.random.normal(keys[8], (1, planes), jnp.float32)
    return p


if __name__ == "__main__":
    key = jax.random.PRNGKey(0)
    k_x, k_p, k_x2, k_p2 = jax.random.split(key, 4)

    # Case 1: downsample block (stride=2, in_planes != planes) -> conv shortcut
    in_planes, planes, stride = 4, 8, 2
    x_nchw = jax.random.normal(k_x, (2, in_planes, 16, 16), jnp.float32)
    x_nhwc = jnp.transpose(x_nchw, (0, 2, 3, 1))                 # NCHW -> NHWC
    params = make_params(k_p, in_planes, planes, stride)

    fwd = jax.jit(functools.partial(slimmable_basic_block, in_planes=in_planes,
                                    planes=planes, stride=stride))
    out = jax.block_until_ready(fwd(x_nhwc, params))
    ref = reference_block(x_nhwc, params, in_planes=in_planes,
                          planes=planes, stride=stride)
    assert out.shape == (2, 8, 8, planes)
    assert jnp.allclose(out, ref, rtol=2e-2, atol=2e-2), "downsample block mismatch"

    # Case 2: identity-shortcut block (stride=1, in_planes == planes)
    in_planes2, planes2, stride2 = 8, 8, 1
    x2 = jnp.transpose(
        jax.random.normal(k_x2, (2, in_planes2, 16, 16), jnp.float32),
        (0, 2, 3, 1))
    params2 = make_params(k_p2, in_planes2, planes2, stride2)
    fwd2 = jax.jit(functools.partial(slimmable_basic_block, in_planes=in_planes2,
                                     planes=planes2, stride=stride2))
    out2 = jax.block_until_ready(fwd2(x2, params2))
    ref2 = reference_block(x2, params2, in_planes=in_planes2,
                           planes=planes2, stride=stride2)
    assert out2.shape == (2, 16, 16, planes2)
    assert jnp.allclose(out2, ref2, rtol=2e-2, atol=2e-2), "identity block mismatch"

    print("KERNEL_OK")
</pallas_src>

<mosaic_0001>
module attributes {stable_mosaic.version = 11 : i64} {
  func.func @_conv1_kernel(%arg0: i32, %arg1: memref<1x9x9x4xbf16, #tpu.memory_space<vmem>>, %arg2: memref<1x9x9x4xbf16, #tpu.memory_space<vmem>>, %arg3: memref<1x9x9x4xbf16, #tpu.memory_space<vmem>>, %arg4: memref<1x9x9x4xbf16, #tpu.memory_space<vmem>>, %arg5: memref<9x4x128xbf16, #tpu.memory_space<vmem>>, %arg6: memref<4x128xbf16, #tpu.memory_space<vmem>>, %arg7: memref<1x8x8x128xbf16, #tpu.memory_space<vmem>>, %arg8: memref<1x4x128xf32, #tpu.memory_space<vmem>>, %arg9: memref<1x8x8x128xbf16, #tpu.memory_space<vmem>>) attributes {dimension_semantics = [#tpu.dimension_semantics<parallel>], iteration_bounds = array<i64: 2>, scalar_prefetch = 0 : i64, scratch_operands = 0 : i64, tpu.core_type = #tpu.core_type<tc>, window_params = [{transform_indices = @transform_0, window_bounds = array<i64: 1, 9, 9, 4>}, {transform_indices = @transform_1, window_bounds = array<i64: 1, 9, 9, 4>}, {transform_indices = @transform_2, window_bounds = array<i64: 1, 9, 9, 4>}, {transform_indices = @transform_3, window_bounds = array<i64: 1, 9, 9, 4>}, {pipeline_mode = #tpu.pipeline_mode<synchronous>, transform_indices = @transform_4, window_bounds = array<i64: 9, 4, 128>}, {pipeline_mode = #tpu.pipeline_mode<synchronous>, transform_indices = @transform_5, window_bounds = array<i64: 4, 128>}, {transform_indices = @transform_6, window_bounds = array<i64: 1, 8, 8, 128>}, {transform_indices = @transform_7, window_bounds = array<i64: 1, 4, 128>}, {transform_indices = @transform_8, window_bounds = array<i64: 1, 8, 8, 128>}]} {
    %c0 = arith.constant 0 : index
    %c0_0 = arith.constant 0 : index
    %c0_1 = arith.constant 0 : index
    %c0_2 = arith.constant 0 : index
    %0 = vector.load %arg1[%c0, %c0_0, %c0_1, %c0_2] : memref<1x9x9x4xbf16, #tpu.memory_space<vmem>>, vector<1x9x9x4xbf16>
    %1 = vector.shape_cast %0 : vector<1x9x9x4xbf16> to vector<9x9x4xbf16>
    %c0_3 = arith.constant 0 : index
    %c0_4 = arith.constant 0 : index
    %c0_5 = arith.constant 0 : index
    %c0_6 = arith.constant 0 : index
    %2 = vector.load %arg2[%c0_3, %c0_4, %c0_5, %c0_6] : memref<1x9x9x4xbf16, #tpu.memory_space<vmem>>, vector<1x9x9x4xbf16>
    %3 = vector.shape_cast %2 : vector<1x9x9x4xbf16> to vector<9x9x4xbf16>
    %c0_7 = arith.constant 0 : index
    %c0_8 = arith.constant 0 : index
    %c0_9 = arith.constant 0 : index
    %c0_10 = arith.constant 0 : index
    %4 = vector.load %arg3[%c0_7, %c0_8, %c0_9, %c0_10] : memref<1x9x9x4xbf16, #tpu.memory_space<vmem>>, vector<1x9x9x4xbf16>
    %5 = vector.shape_cast %4 : vector<1x9x9x4xbf16> to vector<9x9x4xbf16>
    %c0_11 = arith.constant 0 : index
    %c0_12 = arith.constant 0 : index
    %c0_13 = arith.constant 0 : index
    %c0_14 = arith.constant 0 : index
    %6 = vector.load %arg4[%c0_11, %c0_12, %c0_13, %c0_14] : memref<1x9x9x4xbf16, #tpu.memory_space<vmem>>, vector<1x9x9x4xbf16>
    %7 = vector.shape_cast %6 : vector<1x9x9x4xbf16> to vector<9x9x4xbf16>
    %cst = arith.constant 0.000000e+00 : f32
    %8 = vector.broadcast %cst : f32 to vector<64x128xf32>
    %9 = vector.extract_strided_slice %1 {offsets = [0, 0, 0], sizes = [8, 8, 4], strides = [1, 1, 1]} : vector<9x9x4xbf16> to vector<8x8x4xbf16>
    %10 = vector.shape_cast %9 : vector<8x8x4xbf16> to vector<64x4xbf16>
    %c0_15 = arith.constant 0 : index
    %c0_16 = arith.constant 0 : index
    %c0_17 = arith.constant 0 : index
    %11 = vector.load %arg5[%c0_15, %c0_16, %c0_17] : memref<9x4x128xbf16, #tpu.memory_space<vmem>>, vector<1x4x128xbf16>
    %12 = vector.shape_cast %11 : vector<1x4x128xbf16> to vector<4x128xbf16>
    %cst_18 = arith.constant dense<0.000000e+00> : vector<64x128xf32>
    %13 = tpu.matmul %10, %12, %cst_18 {dimension_numbers = #tpu.dot_dimension_numbers<[1], [0], [0], [1], [0, 0, 1, 1], [], []>} : vector<64x4xbf16>, vector<4x128xbf16>, vector<64x128xf32> -> vector<64x128xf32>
    %14 = arith.addf %8, %13 : vector<64x128xf32>
    %15 = vector.extract_strided_slice %3 {offsets = [0, 0, 0], sizes = [8, 8, 4], strides = [1, 1, 1]} : vector<9x9x4xbf16> to vector<8x8x4xbf16>
    %16 = vector.shape_cast %15 : vector<8x8x4xbf16> to vector<64x4xbf16>
    %c1 = arith.constant 1 : index
    %c0_19 = arith.constant 0 : index
    %c0_20 = arith.constant 0 : index
    %17 = vector.load %arg5[%c1, %c0_19, %c0_20] : memref<9x4x128xbf16, #tpu.memory_space<vmem>>, vector<1x4x128xbf16>
    %18 = vector.shape_cast %17 : vector<1x4x128xbf16> to vector<4x128xbf16>
    %cst_21 = arith.constant dense<0.000000e+00> : vector<64x128xf32>
    %19 = tpu.matmul %16, %18, %cst_21 {dimension_numbers = #tpu.dot_dimension_numbers<[1], [0], [0], [1], [0, 0, 1, 1], [], []>} : vector<64x4xbf16>, vector<4x128xbf16>, vector<64x128xf32> -> vector<64x128xf32>
    %20 = arith.addf %14, %19 : vector<64x128xf32>
    %21 = vector.extract_strided_slice %1 {offsets = [0, 1, 0], sizes = [8, 8, 4], strides = [1, 1, 1]} : vector<9x9x4xbf16> to vector<8x8x4xbf16>
    %22 = vector.shape_cast %21 : vector<8x8x4xbf16> to vector<64x4xbf16>
    %c2 = arith.constant 2 : index
    %c0_22 = arith.constant 0 : index
    %c0_23 = arith.constant 0 : index
    %23 = vector.load %arg5[%c2, %c0_22, %c0_23] : memref<9x4x128xbf16, #tpu.memory_space<vmem>>, vector<1x4x128xbf16>
    %24 = vector.shape_cast %23 : vector<1x4x128xbf16> to vector<4x128xbf16>
    %cst_24 = arith.constant dense<0.000000e+00> : vector<64x128xf32>
    %25 = tpu.matmul %22, %24, %cst_24 {dimension_numbers = #tpu.dot_dimension_numbers<[1], [0], [0], [1], [0, 0, 1, 1], [], []>} : vector<64x4xbf16>, vector<4x128xbf16>, vector<64x128xf32> -> vector<64x128xf32>
    %26 = arith.addf %20, %25 : vector<64x128xf32>
    %27 = vector.extract_strided_slice %5 {offsets = [0, 0, 0], sizes = [8, 8, 4], strides = [1, 1, 1]} : vector<9x9x4xbf16> to vector<8x8x4xbf16>
    %28 = vector.shape_cast %27 : vector<8x8x4xbf16> to vector<64x4xbf16>
    %c3 = arith.constant 3 : index
    %c0_25 = arith.constant 0 : index
    %c0_26 = arith.constant 0 : index
    %29 = vector.load %arg5[%c3, %c0_25, %c0_26] : memref<9x4x128xbf16, #tpu.memory_space<vmem>>, vector<1x4x128xbf16>
    %30 = vector.shape_cast %29 : vector<1x4x128xbf16> to vector<4x128xbf16>
    %cst_27 = arith.constant dense<0.000000e+00> : vector<64x128xf32>
    %31 = tpu.matmul %28, %30, %cst_27 {dimension_numbers = #tpu.dot_dimension_numbers<[1], [0], [0], [1], [0, 0, 1, 1], [], []>} : vector<64x4xbf16>, vector<4x128xbf16>, vector<64x128xf32> -> vector<64x128xf32>
    %32 = arith.addf %26, %31 : vector<64x128xf32>
    %33 = vector.extract_strided_slice %7 {offsets = [0, 0, 0], sizes = [8, 8, 4], strides = [1, 1, 1]} : vector<9x9x4xbf16> to vector<8x8x4xbf16>
    %34 = vector.shape_cast %33 : vector<8x8x4xbf16> to vector<64x4xbf16>
    %c4 = arith.constant 4 : index
    %c0_28 = arith.constant 0 : index
    %c0_29 = arith.constant 0 : index
    %35 = vector.load %arg5[%c4, %c0_28, %c0_29] : memref<9x4x128xbf16, #tpu.memory_space<vmem>>, vector<1x4x128xbf16>
    %36 = vector.shape_cast %35 : vector<1x4x128xbf16> to vector<4x128xbf16>
    %cst_30 = arith.constant dense<0.000000e+00> : vector<64x128xf32>
    %37 = tpu.matmul %34, %36, %cst_30 {dimension_numbers = #tpu.dot_dimension_numbers<[1], [0], [0], [1], [0, 0, 1, 1], [], []>} : vector<64x4xbf16>, vector<4x128xbf16>, vector<64x128xf32> -> vector<64x128xf32>
    %38 = arith.addf %32, %37 : vector<64x128xf32>
    %39 = vector.extract_strided_slice %5 {offsets = [0, 1, 0], sizes = [8, 8, 4], strides = [1, 1, 1]} : vector<9x9x4xbf16> to vector<8x8x4xbf16>
    %40 = vector.shape_cast %39 : vector<8x8x4xbf16> to vector<64x4xbf16>
    %c5 = arith.constant 5 : index
    %c0_31 = arith.constant 0 : index
    %c0_32 = arith.constant 0 : index
    %41 = vector.load %arg5[%c5, %c0_31, %c0_32] : memref<9x4x128xbf16, #tpu.memory_space<vmem>>, vector<1x4x128xbf16>
    %42 = vector.shape_cast %41 : vector<1x4x128xbf16> to vector<4x128xbf16>
    %cst_33 = arith.constant dense<0.000000e+00> : vector<64x128xf32>
    %43 = tpu.matmul %40, %42, %cst_33 {dimension_numbers = #tpu.dot_dimension_numbers<[1], [0], [0], [1], [0, 0, 1, 1], [], []>} : vector<64x4xbf16>, vector<4x128xbf16>, vector<64x128xf32> -> vector<64x128xf32>
    %44 = arith.addf %38, %43 : vector<64x128xf32>
    %45 = vector.extract_strided_slice %1 {offsets = [1, 0, 0], sizes = [8, 8, 4], strides = [1, 1, 1]} : vector<9x9x4xbf16> to vector<8x8x4xbf16>
    %46 = vector.shape_cast %45 : vector<8x8x4xbf16> to vector<64x4xbf16>
    %c6 = arith.constant 6 : index
    %c0_34 = arith.constant 0 : index
    %c0_35 = arith.constant 0 : index
    %47 = vector.load %arg5[%c6, %c0_34, %c0_35] : memref<9x4x128xbf16, #tpu.memory_space<vmem>>, vector<1x4x128xbf16>
    %48 = vector.shape_cast %47 : vector<1x4x128xbf16> to vector<4x128xbf16>
    %cst_36 = arith.constant dense<0.000000e+00> : vector<64x128xf32>
    %49 = tpu.matmul %46, %48, %cst_36 {dimension_numbers = #tpu.dot_dimension_numbers<[1], [0], [0], [1], [0, 0, 1, 1], [], []>} : vector<64x4xbf16>, vector<4x128xbf16>, vector<64x128xf32> -> vector<64x128xf32>
    %50 = arith.addf %44, %49 : vector<64x128xf32>
    %51 = vector.extract_strided_slice %3 {offsets = [1, 0, 0], sizes = [8, 8, 4], strides = [1, 1, 1]} : vector<9x9x4xbf16> to vector<8x8x4xbf16>
    %52 = vector.shape_cast %51 : vector<8x8x4xbf16> to vector<64x4xbf16>
    %c7 = arith.constant 7 : index
    %c0_37 = arith.constant 0 : index
    %c0_38 = arith.constant 0 : index
    %53 = vector.load %arg5[%c7, %c0_37, %c0_38] : memref<9x4x128xbf16, #tpu.memory_space<vmem>>, vector<1x4x128xbf16>
    %54 = vector.shape_cast %53 : vector<1x4x128xbf16> to vector<4x128xbf16>
    %cst_39 = arith.constant dense<0.000000e+00> : vector<64x128xf32>
    %55 = tpu.matmul %52, %54, %cst_39 {dimension_numbers = #tpu.dot_dimension_numbers<[1], [0], [0], [1], [0, 0, 1, 1], [], []>} : vector<64x4xbf16>, vector<4x128xbf16>, vector<64x128xf32> -> vector<64x128xf32>
    %56 = arith.addf %50, %55 : vector<64x128xf32>
    %57 = vector.extract_strided_slice %1 {offsets = [1, 1, 0], sizes = [8, 8, 4], strides = [1, 1, 1]} : vector<9x9x4xbf16> to vector<8x8x4xbf16>
    %58 = vector.shape_cast %57 : vector<8x8x4xbf16> to vector<64x4xbf16>
    %c8 = arith.constant 8 : index
    %c0_40 = arith.constant 0 : index
    %c0_41 = arith.constant 0 : index
    %59 = vector.load %arg5[%c8, %c0_40, %c0_41] : memref<9x4x128xbf16, #tpu.memory_space<vmem>>, vector<1x4x128xbf16>
    %60 = vector.shape_cast %59 : vector<1x4x128xbf16> to vector<4x128xbf16>
    %cst_42 = arith.constant dense<0.000000e+00> : vector<64x128xf32>
    %61 = tpu.matmul %58, %60, %cst_42 {dimension_numbers = #tpu.dot_dimension_numbers<[1], [0], [0], [1], [0, 0, 1, 1], [], []>} : vector<64x4xbf16>, vector<4x128xbf16>, vector<64x128xf32> -> vector<64x128xf32>
    %62 = arith.addf %56, %61 : vector<64x128xf32>
    %63 = vector.shape_cast %62 : vector<64x128xf32> to vector<8x8x128xf32>
    %64 = arith.truncf %63 : vector<8x8x128xf32> to vector<8x8x128xbf16>
    %c0_43 = arith.constant 0 : index
    %c0_44 = arith.constant 0 : index
    %c0_45 = arith.constant 0 : index
    %c0_46 = arith.constant 0 : index
    %65 = vector.load %arg7[%c0_43, %c0_44, %c0_45, %c0_46] : memref<1x8x8x128xbf16, #tpu.memory_space<vmem>>, vector<1x8x8x128xbf16>
    %66 = vector.shape_cast %65 : vector<1x8x8x128xbf16> to vector<8x8x128xbf16>
    %67 = vector.shape_cast %64 : vector<8x8x128xbf16> to vector<1x8x8x128xbf16>
    tpu.vector_store %arg7[%c0_43, %c0_44, %c0_45, %c0_46], %67 {strides = array<i32>} : memref<1x8x8x128xbf16, #tpu.memory_space<vmem>>, vector<1x8x8x128xbf16>,
    %cst_47 = arith.constant dense<0.000000e+00> : vector<128xf32>
    %68 = vector.multi_reduction <add>, %62, %cst_47 [0] : vector<64x128xf32> to vector<128xf32>
    %69 = vector.shape_cast %68 : vector<128xf32> to vector<1x128xf32>
    %70 = arith.mulf %62, %62 : vector<64x128xf32>
    %cst_48 = arith.constant dense<0.000000e+00> : vector<128xf32>
    %71 = vector.multi_reduction <add>, %70, %cst_48 [0] : vector<64x128xf32> to vector<128xf32>
    %72 = vector.shape_cast %71 : vector<128xf32> to vector<1x128xf32>
    %73 = vector.extract_strided_slice %7 {offsets = [0, 0, 0], sizes = [8, 8, 4], strides = [1, 1, 1]} : vector<9x9x4xbf16> to vector<8x8x4xbf16>
    %74 = vector.shape_cast %73 : vector<8x8x4xbf16> to vector<64x4xbf16>
    %c0_49 = arith.constant 0 : index
    %c0_50 = arith.constant 0 : index
    %75 = vector.load %arg6[%c0_49, %c0_50] : memref<4x128xbf16, #tpu.memory_space<vmem>>, vector<4x128xbf16>
    %cst_51 = arith.constant dense<0.000000e+00> : vector<64x128xf32>
    %76 = tpu.matmul %74, %75, %cst_51 {dimension_numbers = #tpu.dot_dimension_numbers<[1], [0], [0], [1], [0, 0, 1, 1], [], []>} : vector<64x4xbf16>, vector<4x128xbf16>, vector<64x128xf32> -> vector<64x128xf32>
    %77 = vector.shape_cast %76 : vector<64x128xf32> to vector<8x8x128xf32>
    %78 = arith.truncf %77 : vector<8x8x128xf32> to vector<8x8x128xbf16>
    %c0_52 = arith.constant 0 : index
    %c0_53 = arith.constant 0 : index
    %c0_54 = arith.constant 0 : index
    %c0_55 = arith.constant 0 : index
    %79 = vector.load %arg9[%c0_52, %c0_53, %c0_54, %c0_55] : memref<1x8x8x128xbf16, #tpu.memory_space<vmem>>, vector<1x8x8x128xbf16>
    %80 = vector.shape_cast %79 : vector<1x8x8x128xbf16> to vector<8x8x128xbf16>
    %81 = vector.shape_cast %78 : vector<8x8x128xbf16> to vector<1x8x8x128xbf16>
    tpu.vector_store %arg9[%c0_52, %c0_53, %c0_54, %c0_55], %81 {strides = array<i32>} : memref<1x8x8x128xbf16, #tpu.memory_space<vmem>>, vector<1x8x8x128xbf16>,
    %cst_56 = arith.constant dense<0.000000e+00> : vector<128xf32>
    %82 = vector.multi_reduction <add>, %76, %cst_56 [0] : vector<64x128xf32> to vector<128xf32>
    %83 = vector.shape_cast %82 : vector<128xf32> to vector<1x128xf32>
    %84 = arith.mulf %76, %76 : vector<64x128xf32>
    %cst_57 = arith.constant dense<0.000000e+00> : vector<128xf32>
    %85 = vector.multi_reduction <add>, %84, %cst_57 [0] : vector<64x128xf32> to vector<128xf32>
    %86 = vector.shape_cast %85 : vector<128xf32> to vector<1x128xf32>
    %87 = tpu.concatenate %69, %72, %83, %86 in 0 : vector<1x128xf32>, vector<1x128xf32>, vector<1x128xf32>, vector<1x128xf32> -> vector<4x128xf32>
    %c0_58 = arith.constant 0 : index
    %c0_59 = arith.constant 0 : index
    %c0_60 = arith.constant 0 : index
    %88 = vector.load %arg8[%c0_58, %c0_59, %c0_60] : memref<1x4x128xf32, #tpu.memory_space<vmem>>, vector<1x4x128xf32>
    %89 = vector.shape_cast %88 : vector<1x4x128xf32> to vector<4x128xf32>
    %90 = vector.shape_cast %87 : vector<4x128xf32> to vector<1x4x128xf32>
    tpu.vector_store %arg8[%c0_58, %c0_59, %c0_60], %90 {strides = array<i32>} : memref<1x4x128xf32, #tpu.memory_space<vmem>>, vector<1x4x128xf32>,
    return
  }
  func.func @transform_0(%arg0: i32) -> (i32, i32, i32, i32) {
    %c0_i32 = arith.constant 0 : i32
    %c0_i32_0 = arith.constant 0 : i32
    %c0_i32_1 = arith.constant 0 : i32
    %c0_i32_2 = arith.constant 0 : i32
    return %arg0, %c0_i32, %c0_i32_0, %c0_i32_1 : i32, i32, i32, i32
  }
  func.func @transform_1(%arg0: i32) -> (i32, i32, i32, i32) {
    %c0_i32 = arith.constant 0 : i32
    %c0_i32_0 = arith.constant 0 : i32
    %c0_i32_1 = arith.constant 0 : i32
    %c0_i32_2 = arith.constant 0 : i32
    return %arg0, %c0_i32, %c0_i32_0, %c0_i32_1 : i32, i32, i32, i32
  }
  func.func @transform_2(%arg0: i32) -> (i32, i32, i32, i32) {
    %c0_i32 = arith.constant 0 : i32
    %c0_i32_0 = arith.constant 0 : i32
    %c0_i32_1 = arith.constant 0 : i32
    %c0_i32_2 = arith.constant 0 : i32
    return %arg0, %c0_i32, %c0_i32_0, %c0_i32_1 : i32, i32, i32, i32
  }
  func.func @transform_3(%arg0: i32) -> (i32, i32, i32, i32) {
    %c0_i32 = arith.constant 0 : i32
    %c0_i32_0 = arith.constant 0 : i32
    %c0_i32_1 = arith.constant 0 : i32
    %c0_i32_2 = arith.constant 0 : i32
    return %arg0, %c0_i32, %c0_i32_0, %c0_i32_1 : i32, i32, i32, i32
  }
  func.func @transform_4(%arg0: i32) -> (i32, i32, i32) {
    %c0_i32 = arith.constant 0 : i32
    %c0_i32_0 = arith.constant 0 : i32
    %c0_i32_1 = arith.constant 0 : i32
    %c0_i32_2 = arith.constant 0 : i32
    return %c0_i32, %c0_i32_0, %c0_i32_1 : i32, i32, i32
  }
  func.func @transform_5(%arg0: i32) -> (i32, i32) {
    %c0_i32 = arith.constant 0 : i32
    %c0_i32_0 = arith.constant 0 : i32
    %c0_i32_1 = arith.constant 0 : i32
    return %c0_i32, %c0_i32_0 : i32, i32
  }
  func.func @transform_6(%arg0: i32) -> (i32, i32, i32, i32) {
    %c0_i32 = arith.constant 0 : i32
    %c0_i32_0 = arith.constant 0 : i32
    %c0_i32_1 = arith.constant 0 : i32
    %c0_i32_2 = arith.constant 0 : i32
    return %arg0, %c0_i32, %c0_i32_0, %c0_i32_1 : i32, i32, i32, i32
  }
  func.func @transform_7(%arg0: i32) -> (i32, i32, i32) {
    %c0_i32 = arith.constant 0 : i32
    %c0_i32_0 = arith.constant 0 : i32
    %c0_i32_1 = arith.constant 0 : i32
    return %arg0, %c0_i32, %c0_i32_0 : i32, i32, i32
  }
  func.func @transform_8(%arg0: i32) -> (i32, i32, i32, i32) {
    %c0_i32 = arith.constant 0 : i32
    %c0_i32_0 = arith.constant 0 : i32
    %c0_i32_1 = arith.constant 0 : i32
    %c0_i32_2 = arith.constant 0 : i32
    return %arg0, %c0_i32, %c0_i32_0, %c0_i32_1 : i32, i32, i32, i32
  }
}

module attributes {stable_mosaic.version = 11 : i64} {
  func.func @_conv2_kernel(%arg0: i32, %arg1: memref<1x8x8x128xbf16, #tpu.memory_space<vmem>>, %arg2: memref<1x128xf32, #tpu.memory_space<vmem>>, %arg3: memref<1x128xf32, #tpu.memory_space<vmem>>, %arg4: memref<3x384x128xbf16, #tpu.memory_space<vmem>>, %arg5: memref<1x8x8x128xbf16, #tpu.memory_space<vmem>>, %arg6: memref<1x2x128xf32, #tpu.memory_space<vmem>>) attributes {dimension_semantics = [#tpu.dimension_semantics<parallel>], iteration_bounds = array<i64: 2>, scalar_prefetch = 0 : i64, scratch_operands = 0 : i64, tpu.core_type = #tpu.core_type<tc>, window_params = [{transform_indices = @transform_0, window_bounds = array<i64: 1, 8, 8, 128>}, {pipeline_mode = #tpu.pipeline_mode<synchronous>, transform_indices = @transform_1, window_bounds = array<i64: 1, 128>}, {pipeline_mode = #tpu.pipeline_mode<synchronous>, transform_indices = @transform_2, window_bounds = array<i64: 1, 128>}, {pipeline_mode = #tpu.pipeline_mode<synchronous>, transform_indices = @transform_3, window_bounds = array<i64: 3, 384, 128>}, {transform_indices = @transform_4, window_bounds = array<i64: 1, 8, 8, 128>}, {transform_indices = @transform_5, window_bounds = array<i64: 1, 2, 128>}]} {
    %c0 = arith.constant 0 : index
    %c0_0 = arith.constant 0 : index
    %c0_1 = arith.constant 0 : index
    %c0_2 = arith.constant 0 : index
    %0 = vector.load %arg1[%c0, %c0_0, %c0_1, %c0_2] : memref<1x8x8x128xbf16, #tpu.memory_space<vmem>>, vector<1x8x8x128xbf16>
    %1 = vector.shape_cast %0 : vector<1x8x8x128xbf16> to vector<8x8x128xbf16>
    %2 = arith.extf %1 : vector<8x8x128xbf16> to vector<8x8x128xf32>
    %c0_3 = arith.constant 0 : index
    %c0_4 = arith.constant 0 : index
    %3 = vector.load %arg2[%c0_3, %c0_4] : memref<1x128xf32, #tpu.memory_space<vmem>>, vector<1x128xf32>
    %4 = vector.shape_cast %3 : vector<1x128xf32> to vector<1x1x128xf32>
    %5 = vector.broadcast %4 : vector<1x1x128xf32> to vector<8x8x128xf32>
    %6 = arith.mulf %2, %5 : vector<8x8x128xf32>
    %c0_5 = arith.constant 0 : index
    %c0_6 = arith.constant 0 : index
    %7 = vector.load %arg3[%c0_5, %c0_6] : memref<1x128xf32, #tpu.memory_space<vmem>>, vector<1x128xf32>
    %8 = vector.shape_cast %7 : vector<1x128xf32> to vector<1x1x128xf32>
    %9 = vector.broadcast %8 : vector<1x1x128xf32> to vector<8x8x128xf32>
    %10 = arith.addf %6, %9 : vector<8x8x128xf32>
    %cst = arith.constant 0.000000e+00 : f32
    %11 = vector.broadcast %cst : f32 to vector<8x8x128xf32>
    %12 = arith.maximumf %10, %11 : vector<8x8x128xf32>
    %13 = arith.truncf %12 : vector<8x8x128xf32> to vector<8x8x128xbf16>
    %cst_7 = arith.constant 0.000000e+00 : bf16
    %14 = vector.broadcast %cst_7 : bf16 to vector<1x8x128xbf16>
    %15 = tpu.concatenate %14, %13, %14 in 0 : vector<1x8x128xbf16>, vector<8x8x128xbf16>, vector<1x8x128xbf16> -> vector<10x8x128xbf16>
    %cst_8 = arith.constant 0.000000e+00 : bf16
    %16 = vector.broadcast %cst_8 : bf16 to vector<10x1x128xbf16>
    %17 = tpu.concatenate %16, %15, %16 in 1 : vector<10x1x128xbf16>, vector<10x8x128xbf16>, vector<10x1x128xbf16> -> vector<10x10x128xbf16>
    %cst_9 = arith.constant 0.000000e+00 : f32
    %18 = vector.broadcast %cst_9 : f32 to vector<64x128xf32>
    %19 = vector.extract_strided_slice %17 {offsets = [0, 0, 0], sizes = [8, 8, 128], strides = [1, 1, 1]} : vector<10x10x128xbf16> to vector<8x8x128xbf16>
    %20 = vector.extract_strided_slice %17 {offsets = [0, 1, 0], sizes = [8, 8, 128], strides = [1, 1, 1]} : vector<10x10x128xbf16> to vector<8x8x128xbf16>
    %21 = vector.extract_strided_slice %17 {offsets = [0, 2, 0], sizes = [8, 8, 128], strides = [1, 1, 1]} : vector<10x10x128xbf16> to vector<8x8x128xbf16>
    %22 = tpu.concatenate %19, %20, %21 in 2 : vector<8x8x128xbf16>, vector<8x8x128xbf16>, vector<8x8x128xbf16> -> vector<8x8x384xbf16>
    %23 = vector.shape_cast %22 : vector<8x8x384xbf16> to vector<64x384xbf16>
    %c0_10 = arith.constant 0 : index
    %c0_11 = arith.constant 0 : index
    %c0_12 = arith.constant 0 : index
    %24 = vector.load %arg4[%c0_10, %c0_11, %c0_12] : memref<3x384x128xbf16, #tpu.memory_space<vmem>>, vector<1x384x128xbf16>
    %25 = vector.shape_cast %24 : vector<1x384x128xbf16> to vector<384x128xbf16>
    %cst_13 = arith.constant dense<0.000000e+00> : vector<64x128xf32>
    %26 = tpu.matmul %23, %25, %cst_13 {dimension_numbers = #tpu.dot_dimension_numbers<[1], [0], [0], [1], [0, 0, 1, 1], [], []>} : vector<64x384xbf16>, vector<384x128xbf16>, vector<64x128xf32> -> vector<64x128xf32>
    %27 = arith.addf %18, %26 : vector<64x128xf32>
    %28 = vector.extract_strided_slice %17 {offsets = [1, 0, 0], sizes = [8, 8, 128], strides = [1, 1, 1]} : vector<10x10x128xbf16> to vector<8x8x128xbf16>
    %29 = vector.extract_strided_slice %17 {offsets = [1, 1, 0], sizes = [8, 8, 128], strides = [1, 1, 1]} : vector<10x10x128xbf16> to vector<8x8x128xbf16>
    %30 = vector.extract_strided_slice %17 {offsets = [1, 2, 0], sizes = [8, 8, 128], strides = [1, 1, 1]} : vector<10x10x128xbf16> to vector<8x8x128xbf16>
    %31 = tpu.concatenate %28, %29, %30 in 2 : vector<8x8x128xbf16>, vector<8x8x128xbf16>, vector<8x8x128xbf16> -> vector<8x8x384xbf16>
    %32 = vector.shape_cast %31 : vector<8x8x384xbf16> to vector<64x384xbf16>
    %c1 = arith.constant 1 : index
    %c0_14 = arith.constant 0 : index
    %c0_15 = arith.constant 0 : index
    %33 = vector.load %arg4[%c1, %c0_14, %c0_15] : memref<3x384x128xbf16, #tpu.memory_space<vmem>>, vector<1x384x128xbf16>
    %34 = vector.shape_cast %33 : vector<1x384x128xbf16> to vector<384x128xbf16>
    %cst_16 = arith.constant dense<0.000000e+00> : vector<64x128xf32>
    %35 = tpu.matmul %32, %34, %cst_16 {dimension_numbers = #tpu.dot_dimension_numbers<[1], [0], [0], [1], [0, 0, 1, 1], [], []>} : vector<64x384xbf16>, vector<384x128xbf16>, vector<64x128xf32> -> vector<64x128xf32>
    %36 = arith.addf %27, %35 : vector<64x128xf32>
    %37 = vector.extract_strided_slice %17 {offsets = [2, 0, 0], sizes = [8, 8, 128], strides = [1, 1, 1]} : vector<10x10x128xbf16> to vector<8x8x128xbf16>
    %38 = vector.extract_strided_slice %17 {offsets = [2, 1, 0], sizes = [8, 8, 128], strides = [1, 1, 1]} : vector<10x10x128xbf16> to vector<8x8x128xbf16>
    %39 = vector.extract_strided_slice %17 {offsets = [2, 2, 0], sizes = [8, 8, 128], strides = [1, 1, 1]} : vector<10x10x128xbf16> to vector<8x8x128xbf16>
    %40 = tpu.concatenate %37, %38, %39 in 2 : vector<8x8x128xbf16>, vector<8x8x128xbf16>, vector<8x8x128xbf16> -> vector<8x8x384xbf16>
    %41 = vector.shape_cast %40 : vector<8x8x384xbf16> to vector<64x384xbf16>
    %c2 = arith.constant 2 : index
    %c0_17 = arith.constant 0 : index
    %c0_18 = arith.constant 0 : index
    %42 = vector.load %arg4[%c2, %c0_17, %c0_18] : memref<3x384x128xbf16, #tpu.memory_space<vmem>>, vector<1x384x128xbf16>
    %43 = vector.shape_cast %42 : vector<1x384x128xbf16> to vector<384x128xbf16>
    %cst_19 = arith.constant dense<0.000000e+00> : vector<64x128xf32>
    %44 = tpu.matmul %41, %43, %cst_19 {dimension_numbers = #tpu.dot_dimension_numbers<[1], [0], [0], [1], [0, 0, 1, 1], [], []>} : vector<64x384xbf16>, vector<384x128xbf16>, vector<64x128xf32> -> vector<64x128xf32>
    %45 = arith.addf %36, %44 : vector<64x128xf32>
    %46 = vector.shape_cast %45 : vector<64x128xf32> to vector<8x8x128xf32>
    %47 = arith.truncf %46 : vector<8x8x128xf32> to vector<8x8x128xbf16>
    %c0_20 = arith.constant 0 : index
    %c0_21 = arith.constant 0 : index
    %c0_22 = arith.constant 0 : index
    %c0_23 = arith.constant 0 : index
    %48 = vector.load %arg5[%c0_20, %c0_21, %c0_22, %c0_23] : memref<1x8x8x128xbf16, #tpu.memory_space<vmem>>, vector<1x8x8x128xbf16>
    %49 = vector.shape_cast %48 : vector<1x8x8x128xbf16> to vector<8x8x128xbf16>
    %50 = vector.shape_cast %47 : vector<8x8x128xbf16> to vector<1x8x8x128xbf16>
    tpu.vector_store %arg5[%c0_20, %c0_21, %c0_22, %c0_23], %50 {strides = array<i32>} : memref<1x8x8x128xbf16, #tpu.memory_space<vmem>>, vector<1x8x8x128xbf16>,
    %cst_24 = arith.constant dense<0.000000e+00> : vector<128xf32>
    %51 = vector.multi_reduction <add>, %45, %cst_24 [0] : vector<64x128xf32> to vector<128xf32>
    %52 = vector.shape_cast %51 : vector<128xf32> to vector<1x128xf32>
    %53 = arith.mulf %45, %45 : vector<64x128xf32>
    %cst_25 = arith.constant dense<0.000000e+00> : vector<128xf32>
    %54 = vector.multi_reduction <add>, %53, %cst_25 [0] : vector<64x128xf32> to vector<128xf32>
    %55 = vector.shape_cast %54 : vector<128xf32> to vector<1x128xf32>
    %56 = tpu.concatenate %52, %55 in 0 : vector<1x128xf32>, vector<1x128xf32> -> vector<2x128xf32>
    %c0_26 = arith.constant 0 : index
    %c0_27 = arith.constant 0 : index
    %c0_28 = arith.constant 0 : index
    %57 = vector.load %arg6[%c0_26, %c0_27, %c0_28] : memref<1x2x128xf32, #tpu.memory_space<vmem>>, vector<1x2x128xf32>
    %58 = vector.shape_cast %57 : vector<1x2x128xf32> to vector<2x128xf32>
    %59 = vector.shape_cast %56 : vector<2x128xf32> to vector<1x2x128xf32>
    tpu.vector_store %arg6[%c0_26, %c0_27, %c0_28], %59 {strides = array<i32>} : memref<1x2x128xf32, #tpu.memory_space<vmem>>, vector<1x2x128xf32>,
    return
  }
  func.func @transform_0(%arg0: i32) -> (i32, i32, i32, i32) {
    %c0_i32 = arith.constant 0 : i32
    %c0_i32_0 = arith.constant 0 : i32
    %c0_i32_1 = arith.constant 0 : i32
    %c0_i32_2 = arith.constant 0 : i32
    return %arg0, %c0_i32, %c0_i32_0, %c0_i32_1 : i32, i32, i32, i32
  }
  func.func @transform_1(%arg0: i32) -> (i32, i32) {
    %c0_i32 = arith.constant 0 : i32
    %c0_i32_0 = arith.constant 0 : i32
    %c0_i32_1 = arith.constant 0 : i32
    return %c0_i32, %c0_i32_0 : i32, i32
  }
  func.func @transform_2(%arg0: i32) -> (i32, i32) {
    %c0_i32 = arith.constant 0 : i32
    %c0_i32_0 = arith.constant 0 : i32
    %c0_i32_1 = arith.constant 0 : i32
    return %c0_i32, %c0_i32_0 : i32, i32
  }
  func.func @transform_3(%arg0: i32) -> (i32, i32, i32) {
    %c0_i32 = arith.constant 0 : i32
    %c0_i32_0 = arith.constant 0 : i32
    %c0_i32_1 = arith.constant 0 : i32
    %c0_i32_2 = arith.constant 0 : i32
    return %c0_i32, %c0_i32_0, %c0_i32_1 : i32, i32, i32
  }
  func.func @transform_4(%arg0: i32) -> (i32, i32, i32, i32) {
    %c0_i32 = arith.constant 0 : i32
    %c0_i32_0 = arith.constant 0 : i32
    %c0_i32_1 = arith.constant 0 : i32
    %c0_i32_2 = arith.constant 0 : i32
    return %arg0, %c0_i32, %c0_i32_0, %c0_i32_1 : i32, i32, i32, i32
  }
  func.func @transform_5(%arg0: i32) -> (i32, i32, i32) {
    %c0_i32 = arith.constant 0 : i32
    %c0_i32_0 = arith.constant 0 : i32
    %c0_i32_1 = arith.constant 0 : i32
    return %arg0, %c0_i32, %c0_i32_0 : i32, i32, i32
  }
}

module attributes {stable_mosaic.version = 11 : i64} {
  func.func @_finalize_kernel(%arg0: i32, %arg1: memref<1x8x8x128xbf16, #tpu.memory_space<vmem>>, %arg2: memref<1x8x8x128xbf16, #tpu.memory_space<vmem>>, %arg3: memref<1x128xf32, #tpu.memory_space<vmem>>, %arg4: memref<1x128xf32, #tpu.memory_space<vmem>>, %arg5: memref<1x128xf32, #tpu.memory_space<vmem>>, %arg6: memref<1x128xf32, #tpu.memory_space<vmem>>, %arg7: memref<1x8x8x128xf32, #tpu.memory_space<vmem>>) attributes {dimension_semantics = [#tpu.dimension_semantics<parallel>], iteration_bounds = array<i64: 2>, scalar_prefetch = 0 : i64, scratch_operands = 0 : i64, tpu.core_type = #tpu.core_type<tc>, window_params = [{transform_indices = @transform_0, window_bounds = array<i64: 1, 8, 8, 128>}, {transform_indices = @transform_1, window_bounds = array<i64: 1, 8, 8, 128>}, {pipeline_mode = #tpu.pipeline_mode<synchronous>, transform_indices = @transform_2, window_bounds = array<i64: 1, 128>}, {pipeline_mode = #tpu.pipeline_mode<synchronous>, transform_indices = @transform_3, window_bounds = array<i64: 1, 128>}, {pipeline_mode = #tpu.pipeline_mode<synchronous>, transform_indices = @transform_4, window_bounds = array<i64: 1, 128>}, {pipeline_mode = #tpu.pipeline_mode<synchronous>, transform_indices = @transform_5, window_bounds = array<i64: 1, 128>}, {transform_indices = @transform_6, window_bounds = array<i64: 1, 8, 8, 128>}]} {
    %c0 = arith.constant 0 : index
    %c0_0 = arith.constant 0 : index
    %c0_1 = arith.constant 0 : index
    %c0_2 = arith.constant 0 : index
    %0 = vector.load %arg1[%c0, %c0_0, %c0_1, %c0_2] : memref<1x8x8x128xbf16, #tpu.memory_space<vmem>>, vector<1x8x8x128xbf16>
    %1 = vector.shape_cast %0 : vector<1x8x8x128xbf16> to vector<8x8x128xbf16>
    %2 = arith.extf %1 : vector<8x8x128xbf16> to vector<8x8x128xf32>
    %c0_3 = arith.constant 0 : index
    %c0_4 = arith.constant 0 : index
    %3 = vector.load %arg3[%c0_3, %c0_4] : memref<1x128xf32, #tpu.memory_space<vmem>>, vector<1x128xf32>
    %4 = vector.shape_cast %3 : vector<1x128xf32> to vector<1x1x128xf32>
    %5 = vector.broadcast %4 : vector<1x1x128xf32> to vector<8x8x128xf32>
    %6 = arith.mulf %2, %5 : vector<8x8x128xf32>
    %c0_5 = arith.constant 0 : index
    %c0_6 = arith.constant 0 : index
    %7 = vector.load %arg4[%c0_5, %c0_6] : memref<1x128xf32, #tpu.memory_space<vmem>>, vector<1x128xf32>
    %8 = vector.shape_cast %7 : vector<1x128xf32> to vector<1x1x128xf32>
    %9 = vector.broadcast %8 : vector<1x1x128xf32> to vector<8x8x128xf32>
    %10 = arith.addf %6, %9 : vector<8x8x128xf32>
    %c0_7 = arith.constant 0 : index
    %c0_8 = arith.constant 0 : index
    %c0_9 = arith.constant 0 : index
    %c0_10 = arith.constant 0 : index
    %11 = vector.load %arg2[%c0_7, %c0_8, %c0_9, %c0_10] : memref<1x8x8x128xbf16, #tpu.memory_space<vmem>>, vector<1x8x8x128xbf16>
    %12 = vector.shape_cast %11 : vector<1x8x8x128xbf16> to vector<8x8x128xbf16>
    %13 = arith.extf %12 : vector<8x8x128xbf16> to vector<8x8x128xf32>
    %c0_11 = arith.constant 0 : index
    %c0_12 = arith.constant 0 : index
    %14 = vector.load %arg5[%c0_11, %c0_12] : memref<1x128xf32, #tpu.memory_space<vmem>>, vector<1x128xf32>
    %15 = vector.shape_cast %14 : vector<1x128xf32> to vector<1x1x128xf32>
    %16 = vector.broadcast %15 : vector<1x1x128xf32> to vector<8x8x128xf32>
    %17 = arith.mulf %13, %16 : vector<8x8x128xf32>
    %c0_13 = arith.constant 0 : index
    %c0_14 = arith.constant 0 : index
    %18 = vector.load %arg6[%c0_13, %c0_14] : memref<1x128xf32, #tpu.memory_space<vmem>>, vector<1x128xf32>
    %19 = vector.shape_cast %18 : vector<1x128xf32> to vector<1x1x128xf32>
    %20 = vector.broadcast %19 : vector<1x1x128xf32> to vector<8x8x128xf32>
    %21 = arith.addf %17, %20 : vector<8x8x128xf32>
    %22 = arith.addf %10, %21 : vector<8x8x128xf32>
    %cst = arith.constant 0.000000e+00 : f32
    %23 = vector.broadcast %cst : f32 to vector<8x8x128xf32>
    %24 = arith.maximumf %22, %23 : vector<8x8x128xf32>
    %c0_15 = arith.constant 0 : index
    %c0_16 = arith.constant 0 : index
    %c0_17 = arith.constant 0 : index
    %c0_18 = arith.constant 0 : index
    %25 = vector.load %arg7[%c0_15, %c0_16, %c0_17, %c0_18] : memref<1x8x8x128xf32, #tpu.memory_space<vmem>>, vector<1x8x8x128xf32>
    %26 = vector.shape_cast %25 : vector<1x8x8x128xf32> to vector<8x8x128xf32>
    %27 = vector.shape_cast %24 : vector<8x8x128xf32> to vector<1x8x8x128xf32>
    tpu.vector_store %arg7[%c0_15, %c0_16, %c0_17, %c0_18], %27 {strides = array<i32>} : memref<1x8x8x128xf32, #tpu.memory_space<vmem>>, vector<1x8x8x128xf32>,
    return
  }
  func.func @transform_0(%arg0: i32) -> (i32, i32, i32, i32) {
    %c0_i32 = arith.constant 0 : i32
    %c0_i32_0 = arith.constant 0 : i32
    %c0_i32_1 = arith.constant 0 : i32
    %c0_i32_2 = arith.constant 0 : i32
    return %arg0, %c0_i32, %c0_i32_0, %c0_i32_1 : i32, i32, i32, i32
  }
  func.func @transform_1(%arg0: i32) -> (i32, i32, i32, i32) {
    %c0_i32 = arith.constant 0 : i32
    %c0_i32_0 = arith.constant 0 : i32
    %c0_i32_1 = arith.constant 0 : i32
    %c0_i32_2 = arith.constant 0 : i32
    return %arg0, %c0_i32, %c0_i32_0, %c0_i32_1 : i32, i32, i32, i32
  }
  func.func @transform_2(%arg0: i32) -> (i32, i32) {
    %c0_i32 = arith.constant 0 : i32
    %c0_i32_0 = arith.constant 0 : i32
    %c0_i32_1 = arith.constant 0 : i32
    return %c0_i32, %c0_i32_0 : i32, i32
  }
  func.func @transform_3(%arg0: i32) -> (i32, i32) {
    %c0_i32 = arith.constant 0 : i32
    %c0_i32_0 = arith.constant 0 : i32
    %c0_i32_1 = arith.constant 0 : i32
    return %c0_i32, %c0_i32_0 : i32, i32
  }
  func.func @transform_4(%arg0: i32) -> (i32, i32) {
    %c0_i32 = arith.constant 0 : i32
    %c0_i32_0 = arith.constant 0 : i32
    %c0_i32_1 = arith.constant 0 : i32
    return %c0_i32, %c0_i32_0 : i32, i32
  }
  func.func @transform_5(%arg0: i32) -> (i32, i32) {
    %c0_i32 = arith.constant 0 : i32
    %c0_i32_0 = arith.constant 0 : i32
    %c0_i32_1 = arith.constant 0 : i32
    return %c0_i32, %c0_i32_0 : i32, i32
  }
  func.func @transform_6(%arg0: i32) -> (i32, i32, i32, i32) {
    %c0_i32 = arith.constant 0 : i32
    %c0_i32_0 = arith.constant 0 : i32
    %c0_i32_1 = arith.constant 0 : i32
    %c0_i32_2 = arith.constant 0 : i32
    return %arg0, %c0_i32, %c0_i32_0, %c0_i32_1 : i32, i32, i32, i32
  }
}

</mosaic_0001>

<llo_original>
// kernel: slimmable_basic_block.5
$region0: #{slimmable_basic_block.5}
  #allocation0 [shape = 'u32[]', space=smem, size = 0x4, offset = 0x4, fixed_abs, tag = 'smem constant byte address 0x4 - core index']
  #allocation1 [shape = 'u32[144,128]{1,0:T(1,128)}', space=vmem, size = 0x12000, scoped, tag = 'internal scratch']
  %s0 = inlined_call_operand.vmem [shape: bf16[2,8,8,128], index: 0, kind: input, shape index: {}]
  %s1 = inlined_call_operand.vmem [shape: bf16[2,8,8,128], index: 1, kind: input, shape index: {}]
  %s2 = inlined_call_operand.vmem [shape: f32[1,128], index: 2, kind: input, shape index: {}]
  %s3 = inlined_call_operand.vmem [shape: f32[1,128], index: 3, kind: input, shape index: {}]
  %s4 = inlined_call_operand.vmem [shape: f32[1,128], index: 4, kind: input, shape index: {}]
  %s5 = inlined_call_operand.vmem [shape: f32[1,128], index: 5, kind: input, shape index: {}]
  %s6 = inlined_call_operand.hbm [shape: f32[2,8,8,128], index: 6, kind: output, shape index: {}]
  %s7 = sld [smem:[#allocation0]]
  $region57: #{slimmable_basic_block.5} parent=0
    _
  %s9 = ssub.s32 1, %s7
  %s10 = scalar_select 0, %s9, %s7
  $region1: #{slimmable_basic_block.5} parent=0
    #allocation2 [shape = 'u8[65536]{0}', space=vmem, size = 0x10000, scoped, tag = 'output window, operand 0']
    #allocation3 [shape = 's32[2]{0}', space=sflag, size = 0x8, scoped, tag = 'scoped memory for slimmable_basic_block.5']
    %11 = vsyncpa [#allocation3], 0
    %s12 = scalar_lea.sflag [#allocation3], 1
    %13 = vsyncpa %s12, 0
    loop: start=0, step=1, limit=4
    $region2: #{slimmable_basic_block.5} parent=1 // loop_pre_header
      _
    $region3: #{slimmable_basic_block.5} parent=1 // loop_header
      %s15 = sphi 0, %s19
      %p16 = scmp.ge.s32.totalorder %s15, 4
      %s25 = sphi 0, %s27
      %s28 = sphi 0, %s25
      %s29 = sphi 0, %s28
      %s45 = sphi 0, %s29
      %s51 = sphi 0, %s53
      %s54 = sphi 0, %s51
      %s55 = sphi 0, %s54
      %s71 = sphi 0, %s55
      %s75 = sphi 0, %s75
      %s77 = sphi 0, %s75
      %s78 = sphi 0, %s77
      %s92 = sphi 0, %s78
      %s96 = sphi 0, %s96
      %s98 = sphi 0, %s96
      %s99 = sphi 0, %s98
      %s113 = sphi 0, %s99
      %s117 = sphi 0, %s117
      %s119 = sphi 0, %s117
      %s120 = sphi 0, %s119
      %s134 = sphi 0, %s120
      %s138 = sphi 0, %s138
      %s140 = sphi 0, %s138
      %s141 = sphi 0, %s140
      %s155 = sphi 0, %s141
      %s161 = sphi 0, %s163
      %s164 = sphi 0, %s161
      %s165 = sphi 0, %s164
      %s181 = sphi 0, %s165
    $region4: #{slimmable_basic_block.5} parent=1 // loop_header_branch
      %18 = sbr.rel (%p16) target = $region8
    $region5: #{slimmable_basic_block.5} parent=1 // loop_body
      %s20 = ssub.s32 %s15, 1
      %s21 = ssub.s32 %s15, 2
      %s22 = sadd.s32 %s15, 1
      %s23 = ssub.s32 %s15, %s22
      %p24 = scmp.eq.s32.totalorder %s23, 0
      %s26 = sadd.s32 %s25, 1
      %s27 = scalar_select %p24, %s25, %s26
      %p30 = pneg %p24
      %p31 = scmp.eq.s32.totalorder %s15, 1
      %p32 = por %p30, %p31
      %p33 = scmp.ne.s32.totalorder %s25, %s28
      %p34 = scmp.eq.s32.totalorder %s15, 0
      %p35 = por %p33, %p34
      %p36 = scmp.ne.s32.totalorder %s25, %s28
      %p37 = scmp.eq.s32.totalorder %s20, 1
      %p38 = por %p36, %p37
      %p39 = scmp.ne.s32.totalorder %s28, %s29
      %p40 = scmp.eq.s32.totalorder %s20, 0
      %p41 = por %p39, %p40
      %p42 = scmp.ne.s32.totalorder %s28, %s29
      %p43 = scmp.eq.s32.totalorder %s21, 1
      %p44 = por %p42, %p43
      %p46 = scmp.ne.s32.totalorder %s29, %s45
      %p47 = scmp.eq.s32.totalorder %s21, 0
      %p48 = por %p46, %p47
      %s49 = ssub.s32 %s15, %s22
      %p50 = scmp.eq.s32.totalorder %s49, 0
      %s52 = sadd.s32 %s51, 1
      %s53 = scalar_select %p50, %s51, %s52
      %p56 = pneg %p50
      %p57 = scmp.eq.s32.totalorder %s15, 1
      %p58 = por %p56, %p57
      %p59 = scmp.ne.s32.totalorder %s51, %s54
      %p60 = scmp.eq.s32.totalorder %s15, 0
      %p61 = por %p59, %p60
      %p62 = scmp.ne.s32.totalorder %s51, %s54
      %p63 = scmp.eq.s32.totalorder %s20, 1
      %p64 = por %p62, %p63
      %p65 = scmp.ne.s32.totalorder %s54, %s55
      %p66 = scmp.eq.s32.totalorder %s20, 0
      %p67 = por %p65, %p66
      %p68 = scmp.ne.s32.totalorder %s54, %s55
      %p69 = scmp.eq.s32.totalorder %s21, 1
      %p70 = por %p68, %p69
      %p72 = scmp.ne.s32.totalorder %s55, %s71
      %p73 = scmp.eq.s32.totalorder %s21, 0
      %p74 = por %p72, %p73
      %s76 = sadd.s32 %s75, 1
      %p79 = scmp.eq.s32.totalorder %s15, 1
      %p80 = scmp.ne.s32.totalorder %s75, %s77
      %p81 = scmp.eq.s32.totalorder %s15, 0
      %p82 = por %p80, %p81
      %p83 = scmp.ne.s32.totalorder %s75, %s77
      %p84 = scmp.eq.s32.totalorder %s20, 1
      %p85 = por %p83, %p84
      %p86 = scmp.ne.s32.totalorder %s77, %s78
      %p87 = scmp.eq.s32.totalorder %s20, 0
      %p88 = por %p86, %p87
      %p89 = scmp.ne.s32.totalorder %s77, %s78
      %p90 = scmp.eq.s32.totalorder %s21, 1
      %p91 = por %p89, %p90
      %p93 = scmp.ne.s32.totalorder %s78, %s92
      %p94 = scmp.eq.s32.totalorder %s21, 0
      %p95 = por %p93, %p94
      %s97 = sadd.s32 %s96, 1
      %p100 = scmp.eq.s32.totalorder %s15, 1
      %p101 = scmp.ne.s32.totalorder %s96, %s98
      %p102 = scmp.eq.s32.totalorder %s15, 0
      %p103 = por %p101, %p102
      %p104 = scmp.ne.s32.totalorder %s96, %s98
      %p105 = scmp.eq.s32.totalorder %s20, 1
      %p106 = por %p104, %p105
      %p107 = scmp.ne.s32.totalorder %s98, %s99
      %p108 = scmp.eq.s32.totalorder %s20, 0
      %p109 = por %p107, %p108
      %p110 = scmp.ne.s32.totalorder %s98, %s99
      %p111 = scmp.eq.s32.totalorder %s21, 1
      %p112 = por %p110, %p111
      %p114 = scmp.ne.s32.totalorder %s99, %s113
      %p115 = scmp.eq.s32.totalorder %s21, 0
      %p116 = por %p114, %p115
      %s118 = sadd.s32 %s117, 1
      %p121 = scmp.eq.s32.totalorder %s15, 1
      %p122 = scmp.ne.s32.totalorder %s117, %s119
      %p123 = scmp.eq.s32.totalorder %s15, 0
      %p124 = por %p122, %p123
      %p125 = scmp.ne.s32.totalorder %s117, %s119
      %p126 = scmp.eq.s32.totalorder %s20, 1
      %p127 = por %p125, %p126
      %p128 = scmp.ne.s32.totalorder %s119, %s120
      %p129 = scmp.eq.s32.totalorder %s20, 0
      %p130 = por %p128, %p129
      %p131 = scmp.ne.s32.totalorder %s119, %s120
      %p132 = scmp.eq.s32.totalorder %s21, 1
      %p133 = por %p131, %p132
      %p135 = scmp.ne.s32.totalorder %s120, %s134
      %p136 = scmp.eq.s32.totalorder %s21, 0
      %p137 = por %p135, %p136
      %s139 = sadd.s32 %s138, 1
      %p142 = scmp.eq.s32.totalorder %s15, 1
      %p143 = scmp.ne.s32.totalorder %s138, %s140
      %p144 = scmp.eq.s32.totalorder %s15, 0
      %p145 = por %p143, %p144
      %p146 = scmp.ne.s32.totalorder %s138, %s140
      %p147 = scmp.eq.s32.totalorder %s20, 1
      %p148 = por %p146, %p147
      %p149 = scmp.ne.s32.totalorder %s140, %s141
      %p150 = scmp.eq.s32.totalorder %s20, 0
      %p151 = por %p149, %p150
      %p152 = scmp.ne.s32.totalorder %s140, %s141
      %p153 = scmp.eq.s32.totalorder %s21, 1
      %p154 = por %p152, %p153
      %p156 = scmp.ne.s32.totalorder %s141, %s155
      %p157 = scmp.eq.s32.totalorder %s21, 0
      %p158 = por %p156, %p157
      %s159 = ssub.s32 %s15, %s22
      %p160 = scmp.eq.s32.totalorder %s159, 0
      %s162 = sadd.s32 %s161, 1
      %s163 = scalar_select %p160, %s161, %s162
      %p166 = pneg %p160
      %p167 = scmp.eq.s32.totalorder %s15, 1
      %p168 = por %p166, %p167
      %p169 = scmp.ne.s32.totalorder %s161, %s164
      %p170 = scmp.eq.s32.totalorder %s15, 0
      %p171 = por %p169, %p170
      %p172 = scmp.ne.s32.totalorder %s161, %s164
      %p173 = scmp.eq.s32.totalorder %s20, 1
      %p174 = por %p172, %p173
      %p175 = scmp.ne.s32.totalorder %s164, %s165
      %p176 = scmp.eq.s32.totalorder %s20, 0
      %p177 = por %p175, %p176
      %p178 = scmp.ne.s32.totalorder %s164, %s165
      %p179 = scmp.eq.s32.totalorder %s21, 1
      %p180 = por %p178, %p179
      %p182 = scmp.ne.s32.totalorder %s165, %s181
      %p183 = scmp.eq.s32.totalorder %s21, 0
      %p184 = por %p182, %p183
      %p185 = scmp.le.s32.totalorder 1, %s15
      %p186 = scmp.lt.s32.totalorder %s15, 3
      %p187 = pnand %p185, %p186
      %p188 = pneg %p187
      // Predicated region
      $region9: #{slimmable_basic_block.5} parent=5 // pred_check
        _
      $region10: #{slimmable_basic_block.5} parent=5 // pred_check_branch
        %190 = sbr.rel (%p187) target = $region12
      $region11: #{slimmable_basic_block.5} parent=5 // pred_region
        %s191 = ssub.s32 %s15, 1
        // Predicated region
        $region13: #{slimmable_basic_block.5} parent=11 // pred_check
          %p192 = pneg %p88
        $region14: #{slimmable_basic_block.5} parent=11 // pred_check_branch
          %194 = sbr.rel (%p192) target = $region16
        $region15: #{slimmable_basic_block.5} parent=11 // pred_region
          _
        $region16: #{slimmable_basic_block.5} parent=11 // pred_fallthru
          _
        // Predicated region
        $region17: #{slimmable_basic_block.5} parent=11 // pred_check
          %p195 = pneg %p109
        $region18: #{slimmable_basic_block.5} parent=11 // pred_check_branch
          %197 = sbr.rel (%p195) target = $region20
        $region19: #{slimmable_basic_block.5} parent=11 // pred_region
          _
        $region20: #{slimmable_basic_block.5} parent=11 // pred_fallthru
          _
        // Predicated region
        $region21: #{slimmable_basic_block.5} parent=11 // pred_check
          %p198 = pneg %p130
        $region22: #{slimmable_basic_block.5} parent=11 // pred_check_branch
          %200 = sbr.rel (%p198) target = $region24
        $region23: #{slimmable_basic_block.5} parent=11 // pred_region
          _
        $region24: #{slimmable_basic_block.5} parent=11 // pred_fallthru
          _
        // Predicated region
        $region25: #{slimmable_basic_block.5} parent=11 // pred_check
          %p201 = pneg %p151
        $region26: #{slimmable_basic_block.5} parent=11 // pred_check_branch
          %203 = sbr.rel (%p201) target = $region28
        $region27: #{slimmable_basic_block.5} parent=11 // pred_region
          _
        $region28: #{slimmable_basic_block.5} parent=11 // pred_fallthru
          _
      $region12: #{slimmable_basic_block.5} parent=5 // pred_fallthru
        _
      %p204 = scmp.lt.s32.totalorder %s15, 2
      // Predicated region
      $region29: #{slimmable_basic_block.5} parent=5 // pred_check
        %p205 = pneg %p204
      $region30: #{slimmable_basic_block.5} parent=5 // pred_check_branch
        %207 = sbr.rel (%p205) target = $region32
      $region31: #{slimmable_basic_block.5} parent=5 // pred_region
        // Predicated region
        $region33: #{slimmable_basic_block.5} parent=31 // pred_check
          %p208 = pneg %p35
        $region34: #{slimmable_basic_block.5} parent=31 // pred_check_branch
          %210 = sbr.rel (%p208) target = $region36
        $region35: #{slimmable_basic_block.5} parent=31 // pred_region
          %p211 = scmp.lt.s32.totalorder %s15, 1
          %s212 = scalar_select %p211, %s15, 1
          %s213 = smul.addr %s212, 8
          %s214 = smul.addr %s213, 4
          %s215 = scalar_lea.vmem %s0, %s214
        $region36: #{slimmable_basic_block.5} parent=31 // pred_fallthru
          _
        // Predicated region
        $region37: #{slimmable_basic_block.5} parent=31 // pred_check
          %p216 = pneg %p61
        $region38: #{slimmable_basic_block.5} parent=31 // pred_check_branch
          %218 = sbr.rel (%p216) target = $region40
        $region39: #{slimmable_basic_block.5} parent=31 // pred_region
          %p219 = scmp.lt.s32.totalorder %s15, 1
          %s220 = scalar_select %p219, %s15, 1
          %s221 = smul.addr %s220, 8
          %s222 = smul.addr %s221, 4
          %s223 = scalar_lea.vmem %s1, %s222
        $region40: #{slimmable_basic_block.5} parent=31 // pred_fallthru
          _
      $region32: #{slimmable_basic_block.5} parent=5 // pred_fallthru
        _
      %p224 = scmp.le.s32.totalorder 1, %s15
      %p225 = scmp.lt.s32.totalorder %s15, 3
      %p226 = pnand %p224, %p225
      %p227 = pneg %p226
      // Predicated region
      $region41: #{slimmable_basic_block.5} parent=5 // pred_check
        _
      $region42: #{slimmable_basic_block.5} parent=5 // pred_check_branch
        %229 = sbr.rel (%p226) target = $region44
      $region43: #{slimmable_basic_block.5} parent=5 // pred_region
        %s230 = ssub.s32 %s15, 1
        %p231 = scmp.lt.s32.totalorder %s20, 1
        %s232 = scalar_select %p231, %s20, 1
        %s233 = smul.addr %s232, 8
        %s234 = smul.addr %s233, 4
        %s235 = scalar_lea.vmem %s0, %s234
        %p236 = pneg %p41
        %p237 = pneg %p38
        %p238 = scmp.lt.s32.totalorder %s20, 1
        %s239 = scalar_select %p238, %s20, 1
        %s240 = smul.addr %s239, 8
        %s241 = smul.addr %s240, 4
        %s242 = scalar_lea.vmem %s1, %s241
        %p243 = pneg %p67
        %p244 = pneg %p64
        %p245 = pneg %p88
        %p246 = pneg %p85
        %p247 = pneg %p109
        %p248 = pneg %p106
        %p249 = pneg %p130
        %p250 = pneg %p127
        %p251 = pneg %p151
        %p252 = pneg %p148
        %p253 = pneg %p177
        %p254 = pneg %p174
        %s255 = sand.u32 %s164, 1
        %s256 = scalar_lea.sflag [#allocation3], %s255
        %s257 = sand.u32 %s164, 1
        %s258 = smul.addr %s257, 64
        %s259 = scalar_lea.vmem [#allocation2], %s258
        %p260 = scmp.lt.s32.totalorder %s20, 1
        %s261 = scalar_select %p260, %s20, 1
        %s262 = smul.addr %s261, 8
        %s263 = smul.addr %s262, 4
        %s264 = scalar_lea.vmem %s0, %s263
        %p265 = scmp.lt.s32.totalorder %s20, 1
        %s266 = scalar_select %p265, %s20, 1
        %s267 = smul.addr %s266, 8
        %s268 = smul.addr %s267, 4
        %s269 = scalar_lea.vmem %s1, %s268
        %v270 = vld [vmem:[%s264] sm:$0xf]
        %v271 = vld [vmem:[%s264 + $0x4] sm:$0xf]
        %v272 = vld [vmem:[%s264 + $0x8] sm:$0xf]
        %v273 = vld [vmem:[%s264 + $0xc] sm:$0xf]
        %v274 = vld [vmem:[%s264 + $0x10] sm:$0xf]
        %v275 = vld [vmem:[%s264 + $0x14] sm:$0xf]
        %v276 = vld [vmem:[%s264 + $0x18] sm:$0xf]
        %v277 = vld [vmem:[%s264 + $0x1c] sm:$0xf]
        %v278 = vunpack.c.l.bf16 %v270
        %v279 = vunpack.c.l.bf16 %v271
        %v280 = vunpack.c.l.bf16 %v272
        %v281 = vunpack.c.l.bf16 %v273
        %v282 = vunpack.c.l.bf16 %v274
        %v283 = vunpack.c.l.bf16 %v275
        %v284 = vunpack.c.l.bf16 %v276
        %v285 = vunpack.c.l.bf16 %v277
        %v286 = vld [vmem:[%s2] sm:$0x1]
        %v288 = vlaneseq
        %v289 = vshrl.u32 %v288, 7
        %v290 = vsub.s32 0, %v289
        %v291 = vrot.slane %v286, %v290
        %v293 = vmul.f32 %v278, %v291
        %v294 = vmul.f32 %v279, %v291
        %v295 = vmul.f32 %v280, %v291
        %v296 = vmul.f32 %v281, %v291
        %v297 = vmul.f32 %v282, %v291
        %v298 = vmul.f32 %v283, %v291
        %v299 = vmul.f32 %v284, %v291
        %v300 = vmul.f32 %v285, %v291
        %v301 = vld [vmem:[%s3] sm:$0x1]
        %v303 = vlaneseq
        %v304 = vshrl.u32 %v303, 7
        %v305 = vsub.s32 0, %v304
        %v306 = vrot.slane %v301, %v305
        %v308 = vadd.f32 %v293, %v306
        %v309 = vadd.f32 %v294, %v306
        %v310 = vadd.f32 %v295, %v306
        %v311 = vadd.f32 %v296, %v306
        %v312 = vadd.f32 %v297, %v306
        %v313 = vadd.f32 %v298, %v306
        %v314 = vadd.f32 %v299, %v306
        %v315 = vadd.f32 %v300, %v306
        %v316 = vld [vmem:[%s269] sm:$0xf]
        %v317 = vld [vmem:[%s269 + $0x4] sm:$0xf]
        %v318 = vld [vmem:[%s269 + $0x8] sm:$0xf]
        %v319 = vld [vmem:[%s269 + $0xc] sm:$0xf]
        %v320 = vld [vmem:[%s269 + $0x10] sm:$0xf]
        %v321 = vld [vmem:[%s269 + $0x14] sm:$0xf]
        %v322 = vld [vmem:[%s269 + $0x18] sm:$0xf]
        %v323 = vld [vmem:[%s269 + $0x1c] sm:$0xf]
        %v324 = vunpack.c.l.bf16 %v316
        %v325 = vunpack.c.l.bf16 %v317
        %v326 = vunpack.c.l.bf16 %v318
        %v327 = vunpack.c.l.bf16 %v319
        %v328 = vunpack.c.l.bf16 %v320
        %v329 = vunpack.c.l.bf16 %v321
        %v330 = vunpack.c.l.bf16 %v322
        %v331 = vunpack.c.l.bf16 %v323
        %v332 = vld [vmem:[%s4] sm:$0x1]
        %v334 = vlaneseq
        %v335 = vshrl.u32 %v334, 7
        %v336 = vsub.s32 0, %v335
        %v337 = vrot.slane %v332, %v336
        %v339 = vmul.f32 %v324, %v337
        %v340 = vmul.f32 %v325, %v337
        %v341 = vmul.f32 %v326, %v337
        %v342 = vmul.f32 %v327, %v337
        %v343 = vmul.f32 %v328, %v337
        %v344 = vmul.f32 %v329, %v337
        %v345 = vmul.f32 %v330, %v337
        %v346 = vmul.f32 %v331, %v337
        %v347 = vld [vmem:[%s5] sm:$0x1]
        %v349 = vlaneseq
        %v350 = vshrl.u32 %v349, 7
        %v351 = vsub.s32 0, %v350
        %v352 = vrot.slane %v347, %v351
        %v354 = vadd.f32 %v339, %v352
        %v355 = vadd.f32 %v340, %v352
        %v356 = vadd.f32 %v341, %v352
        %v357 = vadd.f32 %v342, %v352
        %v358 = vadd.f32 %v343, %v352
        %v359 = vadd.f32 %v344, %v352
        %v360 = vadd.f32 %v345, %v352
        %v361 = vadd.f32 %v346, %v352
        %v362 = vadd.f32 %v308, %v354
        %v363 = vadd.f32 %v309, %v355
        %v364 = vadd.f32 %v310, %v356
        %v365 = vadd.f32 %v311, %v357
        %v366 = vadd.f32 %v312, %v358
        %v367 = vadd.f32 %v313, %v359
        %v368 = vadd.f32 %v314, %v360
        %v369 = vadd.f32 %v315, %v361
        %v370 = vmax.f32 %v362, 0.0
        %v371 = vmax.f32 %v363, 0.0
        %v372 = vmax.f32 %v364, 0.0
        %v373 = vmax.f32 %v365, 0.0
        %v374 = vmax.f32 %v366, 0.0
        %v375 = vmax.f32 %v367, 0.0
        %v376 = vmax.f32 %v368, 0.0
        %v377 = vmax.f32 %v369, 0.0
        %378 = vst [vmem:[%s259] sm:$0xff] %v370
        %379 = vst [vmem:[%s259 + $0x8] sm:$0xff] %v371
        %380 = vst [vmem:[%s259 + $0x10] sm:$0xff] %v372
        %381 = vst [vmem:[%s259 + $0x18] sm:$0xff] %v373
        %382 = vst [vmem:[%s259 + $0x20] sm:$0xff] %v374
        %383 = vst [vmem:[%s259 + $0x28] sm:$0xff] %v375
        %384 = vst [vmem:[%s259 + $0x30] sm:$0xff] %v376
        %385 = vst [vmem:[%s259 + $0x38] sm:$0xff] %v377
        %s386 = sand.u32 %s164, 1
        %s387 = scalar_lea.sflag [#allocation3], %s386
        %s388 = sand.u32 %s164, 1
        %s389 = smul.addr %s388, 64
        %s390 = scalar_lea.vmem [#allocation2], %s389
        // Predicated region
        $region45: #{slimmable_basic_block.5} parent=43 // pred_check
          %p391 = pneg %p174
        $region46: #{slimmable_basic_block.5} parent=43 // pred_check_branch
          %393 = sbr.rel (%p391) target = $region48
        $region47: #{slimmable_basic_block.5} parent=43 // pred_region
          %s395 = ssub.s32 1024, 1024
          %396 = vsyncadd %s387, %s395
          %s397 = smul.addr %s20, 8
          %s398 = smul.addr %s397, 128
          %s399 = scalar_lea.hbm %s6, %s398
          %s400 = sshll.u32 %s390, 4
          %s401 = int_to_ptr.vmem [resolvable:$true] %s400
          %406 = dma.vmem_to_hbm [thread:$0]  %s401, 1024, %s399, %s387, 128, 128, 8
        $region48: #{slimmable_basic_block.5} parent=43 // pred_fallthru
          _
      $region44: #{slimmable_basic_block.5} parent=5 // pred_fallthru
        _
      %p407 = scmp.le.s32.totalorder 2, %s15
      // Predicated region
      $region49: #{slimmable_basic_block.5} parent=5 // pred_check
        %p408 = pneg %p407
      $region50: #{slimmable_basic_block.5} parent=5 // pred_check_branch
        %410 = sbr.rel (%p408) target = $region52
      $region51: #{slimmable_basic_block.5} parent=5 // pred_region
        %s411 = ssub.s32 %s15, 2
        // Predicated region
        $region53: #{slimmable_basic_block.5} parent=51 // pred_check
          %p412 = pneg %p180
        $region54: #{slimmable_basic_block.5} parent=51 // pred_check_branch
          %414 = sbr.rel (%p412) target = $region56
        $region55: #{slimmable_basic_block.5} parent=51 // pred_region
          %s415 = sand.u32 %s165, 1
          %s416 = scalar_lea.sflag [#allocation3], %s415
          %s417 = sand.u32 %s165, 1
          %s418 = smul.addr %s417, 64
          %s419 = scalar_lea.vmem [#allocation2], %s418
          %420 = dma.done %s416, 1024
        $region56: #{slimmable_basic_block.5} parent=51 // pred_fallthru
          _
      $region52: #{slimmable_basic_block.5} parent=5 // pred_fallthru
        _
    $region6: #{slimmable_basic_block.5} parent=1 // loop_footer
      %s19 = sadd.s32 1, %s15
    $region7: #{slimmable_basic_block.5} parent=1 // loop_footer_branch
      %14 = sbr.rel target = $region3
    $region8: #{slimmable_basic_block.5} parent=1 // loop_exit
      _
    %421 = vsyncpa [#allocation3], 1
    %s422 = scalar_lea.sflag [#allocation3], 1
    %423 = vsyncpa %s422, 1

// kernel: slimmable_basic_block.3
$region0: #{slimmable_basic_block.3}
  #allocation0 [shape = 'u32[]', space=smem, size = 0x4, offset = 0x4, fixed_abs, tag = 'smem constant byte address 0x4 - core index']
  #allocation1 [shape = 'u32[144,128]{1,0:T(1,128)}', space=vmem, size = 0x12000, scoped, tag = 'internal scratch']
  %s0 = inlined_call_operand.vmem [shape: bf16[2,9,9,4], index: 0, kind: input, shape index: {}]
  %s1 = inlined_call_operand.vmem [shape: bf16[2,9,9,4], index: 1, kind: input, shape index: {}]
  %s2 = inlined_call_operand.vmem [shape: bf16[2,9,9,4], index: 2, kind: input, shape index: {}]
  %s3 = inlined_call_operand.vmem [shape: bf16[2,9,9,4], index: 3, kind: input, shape index: {}]
  %s4 = inlined_call_operand.vmem [shape: bf16[9,4,128], index: 4, kind: input, shape index: {}]
  %s5 = inlined_call_operand.vmem [shape: bf16[4,128], index: 5, kind: input, shape index: {}]
  %s6 = inlined_call_operand.vmem [shape: bf16[2,8,8,128], index: 6, kind: output, shape index: {0}]
  %s7 = inlined_call_operand.vmem [shape: f32[2,4,128], index: 7, kind: output, shape index: {1}]
  %s8 = inlined_call_operand.vmem [shape: bf16[2,8,8,128], index: 8, kind: output, shape index: {2}]
  %9 = xla_tuple %s6, %s7, %s8
  %s10 = sld [smem:[#allocation0]]
  $region73: #{slimmable_basic_block.3} parent=0
    _
  %s12 = ssub.s32 1, %s10
  %s13 = scalar_select 0, %s12, %s10
  loop: start=0, step=1, limit=4
  $region2: #{slimmable_basic_block.3} parent=0 // loop_pre_header
    _
  $region3: #{slimmable_basic_block.3} parent=0 // loop_header
    %s15 = sphi 0, %s19
    %p16 = scmp.ge.s32.totalorder %s15, 4
    %s25 = sphi 0, %s27
    %s28 = sphi 0, %s25
    %s29 = sphi 0, %s28
    %s45 = sphi 0, %s29
    %s51 = sphi 0, %s53
    %s54 = sphi 0, %s51
    %s55 = sphi 0, %s54
    %s71 = sphi 0, %s55
    %s77 = sphi 0, %s79
    %s80 = sphi 0, %s77
    %s81 = sphi 0, %s80
    %s97 = sphi 0, %s81
    %s103 = sphi 0, %s105
    %s106 = sphi 0, %s103
    %s107 = sphi 0, %s106
    %s123 = sphi 0, %s107
    %s127 = sphi 0, %s127
    %s129 = sphi 0, %s127
    %s130 = sphi 0, %s129
    %s144 = sphi 0, %s130
    %s148 = sphi 0, %s148
    %s150 = sphi 0, %s148
    %s151 = sphi 0, %s150
    %s165 = sphi 0, %s151
    %s171 = sphi 0, %s173
    %s174 = sphi 0, %s171
    %s175 = sphi 0, %s174
    %s191 = sphi 0, %s175
    %s197 = sphi 0, %s199
    %s200 = sphi 0, %s197
    %s201 = sphi 0, %s200
    %s217 = sphi 0, %s201
    %s223 = sphi 0, %s225
    %s226 = sphi 0, %s223
    %s227 = sphi 0, %s226
    %s243 = sphi 0, %s227
  $region4: #{slimmable_basic_block.3} parent=0 // loop_header_branch
    %18 = sbr.rel (%p16) target = $region8
  $region5: #{slimmable_basic_block.3} parent=0 // loop_body
    %s20 = ssub.s32 %s15, 1
    %s21 = ssub.s32 %s15, 2
    %s22 = sadd.s32 %s15, 1
    %s23 = ssub.s32 %s15, %s22
    %p24 = scmp.eq.s32.totalorder %s23, 0
    %s26 = sadd.s32 %s25, 1
    %s27 = scalar_select %p24, %s25, %s26
    %p30 = pneg %p24
    %p31 = scmp.eq.s32.totalorder %s15, 1
    %p32 = por %p30, %p31
    %p33 = scmp.ne.s32.totalorder %s25, %s28
    %p34 = scmp.eq.s32.totalorder %s15, 0
    %p35 = por %p33, %p34
    %p36 = scmp.ne.s32.totalorder %s25, %s28
    %p37 = scmp.eq.s32.totalorder %s20, 1
    %p38 = por %p36, %p37
    %p39 = scmp.ne.s32.totalorder %s28, %s29
    %p40 = scmp.eq.s32.totalorder %s20, 0
    %p41 = por %p39, %p40
    %p42 = scmp.ne.s32.totalorder %s28, %s29
    %p43 = scmp.eq.s32.totalorder %s21, 1
    %p44 = por %p42, %p43
    %p46 = scmp.ne.s32.totalorder %s29, %s45
    %p47 = scmp.eq.s32.totalorder %s21, 0
    %p48 = por %p46, %p47
    %s49 = ssub.s32 %s15, %s22
    %p50 = scmp.eq.s32.totalorder %s49, 0
    %s52 = sadd.s32 %s51, 1
    %s53 = scalar_select %p50, %s51, %s52
    %p56 = pneg %p50
    %p57 = scmp.eq.s32.totalorder %s15, 1
    %p58 = por %p56, %p57
    %p59 = scmp.ne.s32.totalorder %s51, %s54
    %p60 = scmp.eq.s32.totalorder %s15, 0
    %p61 = por %p59, %p60
    %p62 = scmp.ne.s32.totalorder %s51, %s54
    %p63 = scmp.eq.s32.totalorder %s20, 1
    %p64 = por %p62, %p63
    %p65 = scmp.ne.s32.totalorder %s54, %s55
    %p66 = scmp.eq.s32.totalorder %s20, 0
    %p67 = por %p65, %p66
    %p68 = scmp.ne.s32.totalorder %s54, %s55
    %p69 = scmp.eq.s32.totalorder %s21, 1
    %p70 = por %p68, %p69
    %p72 = scmp.ne.s32.totalorder %s55, %s71
    %p73 = scmp.eq.s32.totalorder %s21, 0
    %p74 = por %p72, %p73
    %s75 = ssub.s32 %s15, %s22
    %p76 = scmp.eq.s32.totalorder %s75, 0
    %s78 = sadd.s32 %s77, 1
    %s79 = scalar_select %p76, %s77, %s78
    %p82 = pneg %p76
    %p83 = scmp.eq.s32.totalorder %s15, 1
    %p84 = por %p82, %p83
    %p85 = scmp.ne.s32.totalorder %s77, %s80
    %p86 = scmp.eq.s32.totalorder %s15, 0
    %p87 = por %p85, %p86
    %p88 = scmp.ne.s32.totalorder %s77, %s80
    %p89 = scmp.eq.s32.totalorder %s20, 1
    %p90 = por %p88, %p89
    %p91 = scmp.ne.s32.totalorder %s80, %s81
    %p92 = scmp.eq.s32.totalorder %s20, 0
    %p93 = por %p91, %p92
    %p94 = scmp.ne.s32.totalorder %s80, %s81
    %p95 = scmp.eq.s32.totalorder %s21, 1
    %p96 = por %p94, %p95
    %p98 = scmp.ne.s32.totalorder %s81, %s97
    %p99 = scmp.eq.s32.totalorder %s21, 0
    %p100 = por %p98, %p99
    %s101 = ssub.s32 %s15, %s22
    %p102 = scmp.eq.s32.totalorder %s101, 0
    %s104 = sadd.s32 %s103, 1
    %s105 = scalar_select %p102, %s103, %s104
    %p108 = pneg %p102
    %p109 = scmp.eq.s32.totalorder %s15, 1
    %p110 = por %p108, %p109
    %p111 = scmp.ne.s32.totalorder %s103, %s106
    %p112 = scmp.eq.s32.totalorder %s15, 0
    %p113 = por %p111, %p112
    %p114 = scmp.ne.s32.totalorder %s103, %s106
    %p115 = scmp.eq.s32.totalorder %s20, 1
    %p116 = por %p114, %p115
    %p117 = scmp.ne.s32.totalorder %s106, %s107
    %p118 = scmp.eq.s32.totalorder %s20, 0
    %p119 = por %p117, %p118
    %p120 = scmp.ne.s32.totalorder %s106, %s107
    %p121 = scmp.eq.s32.totalorder %s21, 1
    %p122 = por %p120, %p121
    %p124 = scmp.ne.s32.totalorder %s107, %s123
    %p125 = scmp.eq.s32.totalorder %s21, 0
    %p126 = por %p124, %p125
    %s128 = sadd.s32 %s127, 1
    %p131 = scmp.eq.s32.totalorder %s15, 1
    %p132 = scmp.ne.s32.totalorder %s127, %s129
    %p133 = scmp.eq.s32.totalorder %s15, 0
    %p134 = por %p132, %p133
    %p135 = scmp.ne.s32.totalorder %s127, %s129
    %p136 = scmp.eq.s32.totalorder %s20, 1
    %p137 = por %p135, %p136
    %p138 = scmp.ne.s32.totalorder %s129, %s130
    %p139 = scmp.eq.s32.totalorder %s20, 0
    %p140 = por %p138, %p139
    %p141 = scmp.ne.s32.totalorder %s129, %s130
    %p142 = scmp.eq.s32.totalorder %s21, 1
    %p143 = por %p141, %p142
    %p145 = scmp.ne.s32.totalorder %s130, %s144
    %p146 = scmp.eq.s32.totalorder %s21, 0
    %p147 = por %p145, %p146
    %s149 = sadd.s32 %s148, 1
    %p152 = scmp.eq.s32.totalorder %s15, 1
    %p153 = scmp.ne.s32.totalorder %s148, %s150
    %p154 = scmp.eq.s32.totalorder %s15, 0
    %p155 = por %p153, %p154
    %p156 = scmp.ne.s32.totalorder %s148, %s150
    %p157 = scmp.eq.s32.totalorder %s20, 1
    %p158 = por %p156, %p157
    %p159 = scmp.ne.s32.totalorder %s150, %s151
    %p160 = scmp.eq.s32.totalorder %s20, 0
    %p161 = por %p159, %p160
    %p162 = scmp.ne.s32.totalorder %s150, %s151
    %p163 = scmp.eq.s32.totalorder %s21, 1
    %p164 = por %p162, %p163
    %p166 = scmp.ne.s32.totalorder %s151, %s165
    %p167 = scmp.eq.s32.totalorder %s21, 0
    %p168 = por %p166, %p167
    %s169 = ssub.s32 %s15, %s22
    %p170 = scmp.eq.s32.totalorder %s169, 0
    %s172 = sadd.s32 %s171, 1
    %s173 = scalar_select %p170, %s171, %s172
    %p176 = pneg %p170
    %p177 = scmp.eq.s32.totalorder %s15, 1
    %p178 = por %p176, %p177
    %p179 = scmp.ne.s32.totalorder %s171, %s174
    %p180 = scmp.eq.s32.totalorder %s15, 0
    %p181 = por %p179, %p180
    %p182 = scmp.ne.s32.totalorder %s171, %s174
    %p183 = scmp.eq.s32.totalorder %s20, 1
    %p184 = por %p182, %p183
    %p185 = scmp.ne.s32.totalorder %s174, %s175
    %p186 = scmp.eq.s32.totalorder %s20, 0
    %p187 = por %p185, %p186
    %p188 = scmp.ne.s32.totalorder %s174, %s175
    %p189 = scmp.eq.s32.totalorder %s21, 1
    %p190 = por %p188, %p189
    %p192 = scmp.ne.s32.totalorder %s175, %s191
    %p193 = scmp.eq.s32.totalorder %s21, 0
    %p194 = por %p192, %p193
    %s195 = ssub.s32 %s15, %s22
    %p196 = scmp.eq.s32.totalorder %s195, 0
    %s198 = sadd.s32 %s197, 1
    %s199 = scalar_select %p196, %s197, %s198
    %p202 = pneg %p196
    %p203 = scmp.eq.s32.totalorder %s15, 1
    %p204 = por %p202, %p203
    %p205 = scmp.ne.s32.totalorder %s197, %s200
    %p206 = scmp.eq.s32.totalorder %s15, 0
    %p207 = por %p205, %p206
    %p208 = scmp.ne.s32.totalorder %s197, %s200
    %p209 = scmp.eq.s32.totalorder %s20, 1
    %p210 = por %p208, %p209
    %p211 = scmp.ne.s32.totalorder %s200, %s201
    %p212 = scmp.eq.s32.totalorder %s20, 0
    %p213 = por %p211, %p212
    %p214 = scmp.ne.s32.totalorder %s200, %s201
    %p215 = scmp.eq.s32.totalorder %s21, 1
    %p216 = por %p214, %p215
    %p218 = scmp.ne.s32.totalorder %s201, %s217
    %p219 = scmp.eq.s32.totalorder %s21, 0
    %p220 = por %p218, %p219
    %s221 = ssub.s32 %s15, %s22
    %p222 = scmp.eq.s32.totalorder %s221, 0
    %s224 = sadd.s32 %s223, 1
    %s225 = scalar_select %p222, %s223, %s224
    %p228 = pneg %p222
    %p229 = scmp.eq.s32.totalorder %s15, 1
    %p230 = por %p228, %p229
    %p231 = scmp.ne.s32.totalorder %s223, %s226
    %p232 = scmp.eq.s32.totalorder %s15, 0
    %p233 = por %p231, %p232
    %p234 = scmp.ne.s32.totalorder %s223, %s226
    %p235 = scmp.eq.s32.totalorder %s20, 1
    %p236 = por %p234, %p235
    %p237 = scmp.ne.s32.totalorder %s226, %s227
    %p238 = scmp.eq.s32.totalorder %s20, 0
    %p239 = por %p237, %p238
    %p240 = scmp.ne.s32.totalorder %s226, %s227
    %p241 = scmp.eq.s32.totalorder %s21, 1
    %p242 = por %p240, %p241
    %p244 = scmp.ne.s32.totalorder %s227, %s243
    %p245 = scmp.eq.s32.totalorder %s21, 0
    %p246 = por %p244, %p245
    %p247 = scmp.le.s32.totalorder 1, %s15
    %p248 = scmp.lt.s32.totalorder %s15, 3
    %p249 = pnand %p247, %p248
    %p250 = pneg %p249
    // Predicated region
    $region9: #{slimmable_basic_block.3} parent=5 // pred_check
      _
    $region10: #{slimmable_basic_block.3} parent=5 // pred_check_branch
      %252 = sbr.rel (%p249) target = $region12
    $region11: #{slimmable_basic_block.3} parent=5 // pred_region
      %s253 = ssub.s32 %s15, 1
      // Predicated region
      $region13: #{slimmable_basic_block.3} parent=11 // pred_check
        %p254 = pneg %p140
      $region14: #{slimmable_basic_block.3} parent=11 // pred_check_branch
        %256 = sbr.rel (%p254) target = $region16
      $region15: #{slimmable_basic_block.3} parent=11 // pred_region
        _
      $region16: #{slimmable_basic_block.3} parent=11 // pred_fallthru
        _
      // Predicated region
      $region17: #{slimmable_basic_block.3} parent=11 // pred_check
        %p257 = pneg %p161
      $region18: #{slimmable_basic_block.3} parent=11 // pred_check_branch
        %259 = sbr.rel (%p257) target = $region20
      $region19: #{slimmable_basic_block.3} parent=11 // pred_region
        _
      $region20: #{slimmable_basic_block.3} parent=11 // pred_fallthru
        _
    $region12: #{slimmable_basic_block.3} parent=5 // pred_fallthru
      _
    %p260 = scmp.lt.s32.totalorder %s15, 2
    // Predicated region
    $region21: #{slimmable_basic_block.3} parent=5 // pred_check
      %p261 = pneg %p260
    $region22: #{slimmable_basic_block.3} parent=5 // pred_check_branch
      %263 = sbr.rel (%p261) target = $region24
    $region23: #{slimmable_basic_block.3} parent=5 // pred_region
      // Predicated region
      $region25: #{slimmable_basic_block.3} parent=23 // pred_check
        %p264 = pneg %p35
      $region26: #{slimmable_basic_block.3} parent=23 // pred_check_branch
        %266 = sbr.rel (%p264) target = $region28
      $region27: #{slimmable_basic_block.3} parent=23 // pred_region
        %p267 = scmp.lt.s32.totalorder %s15, 1
        %s268 = scalar_select %p267, %s15, 1
        %s269 = smul.addr %s268, 18
        %s270 = smul.addr %s269, 4
        %s271 = scalar_lea.vmem %s0, %s270
      $region28: #{slimmable_basic_block.3} parent=23 // pred_fallthru
        _
      // Predicated region
      $region29: #{slimmable_basic_block.3} parent=23 // pred_check
        %p272 = pneg %p61
      $region30: #{slimmable_basic_block.3} parent=23 // pred_check_branch
        %274 = sbr.rel (%p272) target = $region32
      $region31: #{slimmable_basic_block.3} parent=23 // pred_region
        %p275 = scmp.lt.s32.totalorder %s15, 1
        %s276 = scalar_select %p275, %s15, 1
        %s277 = smul.addr %s276, 18
        %s278 = smul.addr %s277, 4
        %s279 = scalar_lea.vmem %s1, %s278
      $region32: #{slimmable_basic_block.3} parent=23 // pred_fallthru
        _
      // Predicated region
      $region33: #{slimmable_basic_block.3} parent=23 // pred_check
        %p280 = pneg %p87
      $region34: #{slimmable_basic_block.3} parent=23 // pred_check_branch
        %282 = sbr.rel (%p280) target = $region36
      $region35: #{slimmable_basic_block.3} parent=23 // pred_region
        %p283 = scmp.lt.s32.totalorder %s15, 1
        %s284 = scalar_select %p283, %s15, 1
        %s285 = smul.addr %s284, 18
        %s286 = smul.addr %s285, 4
        %s287 = scalar_lea.vmem %s2, %s286
      $region36: #{slimmable_basic_block.3} parent=23 // pred_fallthru
        _
      // Predicated region
      $region37: #{slimmable_basic_block.3} parent=23 // pred_check
        %p288 = pneg %p113
      $region38: #{slimmable_basic_block.3} parent=23 // pred_check_branch
        %290 = sbr.rel (%p288) target = $region40
      $region39: #{slimmable_basic_block.3} parent=23 // pred_region
        %p291 = scmp.lt.s32.totalorder %s15, 1
        %s292 = scalar_select %p291, %s15, 1
        %s293 = smul.addr %s292, 18
        %s294 = smul.addr %s293, 4
        %s295 = scalar_lea.vmem %s3, %s294
      $region40: #{slimmable_basic_block.3} parent=23 // pred_fallthru
        _
    $region24: #{slimmable_basic_block.3} parent=5 // pred_fallthru
      _
    %p296 = scmp.le.s32.totalorder 1, %s15
    %p297 = scmp.lt.s32.totalorder %s15, 3
    %p298 = pnand %p296, %p297
    %p299 = pneg %p298
    // Predicated region
    $region41: #{slimmable_basic_block.3} parent=5 // pred_check
      _
    $region42: #{slimmable_basic_block.3} parent=5 // pred_check_branch
      %301 = sbr.rel (%p298) target = $region44
    $region43: #{slimmable_basic_block.3} parent=5 // pred_region
      %s302 = ssub.s32 %s15, 1
      %p303 = scmp.lt.s32.totalorder %s20, 1
      %s304 = scalar_select %p303, %s20, 1
      %s305 = smul.addr %s304, 18
      %s306 = smul.addr %s305, 4
      %s307 = scalar_lea.vmem %s0, %s306
      %p308 = pneg %p41
      %p309 = pneg %p38
      %p310 = scmp.lt.s32.totalorder %s20, 1
      %s311 = scalar_select %p310, %s20, 1
      %s312 = smul.addr %s311, 18
      %s313 = smul.addr %s312, 4
      %s314 = scalar_lea.vmem %s1, %s313
      %p315 = pneg %p67
      %p316 = pneg %p64
      %p317 = scmp.lt.s32.totalorder %s20, 1
      %s318 = scalar_select %p317, %s20, 1
      %s319 = smul.addr %s318, 18
      %s320 = smul.addr %s319, 4
      %s321 = scalar_lea.vmem %s2, %s320
      %p322 = pneg %p93
      %p323 = pneg %p90
      %p324 = scmp.lt.s32.totalorder %s20, 1
      %s325 = scalar_select %p324, %s20, 1
      %s326 = smul.addr %s325, 18
      %s327 = smul.addr %s326, 4
      %s328 = scalar_lea.vmem %s3, %s327
      %p329 = pneg %p119
      %p330 = pneg %p116
      %p331 = pneg %p140
      %p332 = pneg %p137
      %p333 = pneg %p161
      %p334 = pneg %p158
      %p335 = pneg %p187
      %p336 = pneg %p184
      %p337 = scmp.lt.s32.totalorder %s20, 1
      %s338 = scalar_select %p337, %s20, 1
      %s339 = smul.addr %s338, 8
      %s340 = smul.addr %s339, 4
      %s341 = scalar_lea.vmem %s6, %s340
      %p342 = pneg %p213
      %p343 = pneg %p210
      %p344 = scmp.lt.s32.totalorder %s20, 1
      %s345 = scalar_select %p344, %s20, 1
      %s346 = smul.addr %s345, 4
      %s347 = scalar_lea.vmem %s7, %s346
      %p348 = pneg %p239
      %p349 = pneg %p236
      %p350 = scmp.lt.s32.totalorder %s20, 1
      %s351 = scalar_select %p350, %s20, 1
      %s352 = smul.addr %s351, 8
      %s353 = smul.addr %s352, 4
      %s354 = scalar_lea.vmem %s8, %s353
      %p355 = scmp.lt.s32.totalorder %s20, 1
      %s356 = scalar_select %p355, %s20, 1
      %s357 = smul.addr %s356, 18
      %s358 = smul.addr %s357, 4
      %s359 = scalar_lea.vmem %s0, %s358
      %p360 = scmp.lt.s32.totalorder %s20, 1
      %s361 = scalar_select %p360, %s20, 1
      %s362 = smul.addr %s361, 18
      %s363 = smul.addr %s362, 4
      %s364 = scalar_lea.vmem %s1, %s363
      %p365 = scmp.lt.s32.totalorder %s20, 1
      %s366 = scalar_select %p365, %s20, 1
      %s367 = smul.addr %s366, 18
      %s368 = smul.addr %s367, 4
      %s369 = scalar_lea.vmem %s2, %s368
      %p370 = scmp.lt.s32.totalorder %s20, 1
      %s371 = scalar_select %p370, %s20, 1
      %s372 = smul.addr %s371, 18
      %s373 = smul.addr %s372, 4
      %s374 = scalar_lea.vmem %s3, %s373
      %p375 = scmp.lt.s32.totalorder %s20, 1
      %s376 = scalar_select %p375, %s20, 1
      %s377 = smul.addr %s376, 8
      %s378 = smul.addr %s377, 4
      %s379 = scalar_lea.vmem %s6, %s378
      %p380 = scmp.lt.s32.totalorder %s20, 1
      %s381 = scalar_select %p380, %s20, 1
      %s382 = smul.addr %s381, 4
      %s383 = scalar_lea.vmem %s7, %s382
      %p384 = scmp.lt.s32.totalorder %s20, 1
      %s385 = scalar_select %p384, %s20, 1
      %s386 = smul.addr %s385, 8
      %s387 = smul.addr %s386, 4
      %s388 = scalar_lea.vmem %s8, %s387
      %v390 = vld [vmem:[%s359] sm:$0xf]
      %v391 = vld [vmem:[%s359 + $0x4] sm:$0x1]
      %v392 = vld [vmem:[%s359 + $0x8] sm:$0xf]
      %v393 = vld [vmem:[%s359 + $0xc] sm:$0x1]
      %v394 = vld [vmem:[%s359 + $0x10] sm:$0xf]
      %v395 = vld [vmem:[%s359 + $0x14] sm:$0x1]
      %v396 = vld [vmem:[%s359 + $0x18] sm:$0xf]
      %v397 = vld [vmem:[%s359 + $0x1c] sm:$0x1]
      %v398 = vld [vmem:[%s359 + $0x20] sm:$0xf]
      %v399 = vld [vmem:[%s359 + $0x24] sm:$0x1]
      %v400 = vld [vmem:[%s359 + $0x28] sm:$0xf]
      %v401 = vld [vmem:[%s359 + $0x2c] sm:$0x1]
      %v402 = vld [vmem:[%s359 + $0x30] sm:$0xf]
      %v403 = vld [vmem:[%s359 + $0x34] sm:$0x1]
      %v404 = vld [vmem:[%s359 + $0x38] sm:$0xf]
      %v405 = vld [vmem:[%s359 + $0x3c] sm:$0x1]
      %v406 = vld [vmem:[%s359 + $0x40] sm:$0xf]
      %v407 = vld [vmem:[%s359 + $0x44] sm:$0x1]
      %v408 = vld [vmem:[%s364] sm:$0xf]
      %v409 = vld [vmem:[%s364 + $0x8] sm:$0xf]
      %v410 = vld [vmem:[%s364 + $0x10] sm:$0xf]
      %v411 = vld [vmem:[%s364 + $0x18] sm:$0xf]
      %v412 = vld [vmem:[%s364 + $0x20] sm:$0xf]
      %v413 = vld [vmem:[%s364 + $0x28] sm:$0xf]
      %v414 = vld [vmem:[%s364 + $0x30] sm:$0xf]
      %v415 = vld [vmem:[%s364 + $0x38] sm:$0xf]
      %v416 = vld [vmem:[%s364 + $0x40] sm:$0xf]
      %v417 = vld [vmem:[%s369] sm:$0xf]
      %v418 = vld [vmem:[%s369 + $0x4] sm:$0x1]
      %v419 = vld [vmem:[%s369 + $0x8] sm:$0xf]
      %v420 = vld [vmem:[%s369 + $0xc] sm:$0x1]
      %v421 = vld [vmem:[%s369 + $0x10] sm:$0xf]
      %v422 = vld [vmem:[%s369 + $0x14] sm:$0x1]
      %v423 = vld [vmem:[%s369 + $0x18] sm:$0xf]
      %v424 = vld [vmem:[%s369 + $0x1c] sm:$0x1]
      %v425 = vld [vmem:[%s369 + $0x20] sm:$0xf]
      %v426 = vld [vmem:[%s369 + $0x24] sm:$0x1]
      %v427 = vld [vmem:[%s369 + $0x28] sm:$0xf]
      %v428 = vld [vmem:[%s369 + $0x2c] sm:$0x1]
      %v429 = vld [vmem:[%s369 + $0x30] sm:$0xf]
      %v430 = vld [vmem:[%s369 + $0x34] sm:$0x1]
      %v431 = vld [vmem:[%s369 + $0x38] sm:$0xf]
      %v432 = vld [vmem:[%s369 + $0x3c] sm:$0x1]
      %v433 = vld [vmem:[%s374] sm:$0xf]
      %v434 = vld [vmem:[%s374 + $0x8] sm:$0xf]
      %v435 = vld [vmem:[%s374 + $0x10] sm:$0xf]
      %v436 = vld [vmem:[%s374 + $0x18] sm:$0xf]
      %v437 = vld [vmem:[%s374 + $0x20] sm:$0xf]
      %v438 = vld [vmem:[%s374 + $0x28] sm:$0xf]
      %v439 = vld [vmem:[%s374 + $0x30] sm:$0xf]
      %v440 = vld [vmem:[%s374 + $0x38] sm:$0xf]
      %v441 = vld [vmem:[%s4] sm:$0x3]
      %s442 = scalar_lea.vmem %s4, 2
      %v443 = vld [vmem:[%s442] sm:$0x3]
      %v452 = vunpack.c.l.b16 %v408
      %v453 = vunpack.c.l.b16 %v409
      %v454 = vunpack.c.l.b16 %v410
      %v455 = vunpack.c.l.b16 %v411
      %v456 = vunpack.c.l.b16 %v412
      %v457 = vunpack.c.l.b16 %v413
      %v458 = vunpack.c.l.b16 %v414
      %v459 = vunpack.c.l.b16 %v415
      %v460 = vpack.c.b16 %v453, %v452
      %v461 = vpack.c.b16 %v455, %v454
      %v462 = vpack.c.b16 %v457, %v456
      %v463 = vpack.c.b16 %v459, %v458
      %vm464 = vcmask 31744
      %v466 = vsel %vm464, %v460, 0
      %v469 = vsel %vm464, %v461, 0
      %v472 = vsel %vm464, %v462, 0
      %v475 = vsel %vm464, %v463, 0
      %vm477 = vcmask 1041408
      %v479 = vsel %vm477, %v443, 0
      %481 = vmatprep.subr.bf16.mxu0 0
      %482 = vmatpush1.bf16.msra.mxu0 0
      %483 = vmatprep.subr.bf16.mxu0 0
      %484 = vmatpush1.bf16.msra.mxu0 0
      %485 = vmatprep.subr.bf16.mxu0 0
      %486 = vmatpush1.bf16.msra.mxu0 0
      %487 = vmatprep.subr.bf16.mxu0 0
      %488 = vmatpush1.bf16.msra.mxu0 0
      %489 = vmatprep.subr.bf16.mxu0 0
      %490 = vmatpush1.bf16.msra.mxu0 0
      %491 = vmatprep.subr.bf16.mxu0 0
      %492 = vmatpush1.bf16.msra.mxu0 0
      %493 = vmatprep.subr.bf16.mxu0 0
      %494 = vmatpush1.bf16.msra.mxu0 0
      %495 = vmatprep.subr.bf16.mxu0 0
      %496 = vmatpush1.bf16.msra.mxu0 %v479
      %497 = vmatprep.subr.bf16.mxu0 0
      %498 = vmatpush2.bf16.msra.mxu0 0
      %499 = vmatprep.subr.bf16.mxu0 0
      %500 = vmatpush2.bf16.msra.mxu0 0
      %501 = vmatprep.subr.bf16.mxu0 0
      %502 = vmatpush2.bf16.msra.mxu0 0
      %503 = vmatprep.subr.bf16.mxu0 0
      %504 = vmatpush2.bf16.msra.mxu0 0
      %505 = vmatprep.subr.bf16.mxu0 0
      %506 = vmatpush2.bf16.msra.mxu0 0
      %507 = vmatprep.subr.bf16.mxu0 0
      %508 = vmatpush2.bf16.msra.mxu0 0
      %509 = vmatprep.subr.bf16.mxu0 0
      %510 = vmatpush2.bf16.msra.mxu0 0
      %511 = vmatprep.subr.bf16.mxu0 0
      %512 = vmatpush2.bf16.msra.mxu0 0
      %513 = vmatprep.mubr.bf16.mxu0 0
      %514 = vmatmul.mubr.bf16.gmra.mxu0 %v466
      %v515 = vpop.f32.mrf.mxu0
      %v516 = vadd.f32 0.0, %v515
      %v517 = vpop.f32.mrf.mxu0
      %v518 = vpop.f32.mrf.mxu0
      %v519 = vadd.f32 0.0, %v518
      %v520 = vpop.f32.mrf.mxu0
      %521 = vmatprep.mubr.bf16.mxu0 0
      %522 = vmatmul.mubr.bf16.gmra.mxu0 %v469
      %v523 = vpop.f32.mrf.mxu0
      %v524 = vadd.f32 0.0, %v523
      %v525 = vpop.f32.mrf.mxu0
      %v526 = vpop.f32.mrf.mxu0
      %v527 = vadd.f32 0.0, %v526
      %v528 = vpop.f32.mrf.mxu0
      %529 = vmatprep.mubr.bf16.mxu0 0
      %530 = vmatmul.mubr.bf16.gmra.mxu0 %v472
      %v531 = vpop.f32.mrf.mxu0
      %v532 = vadd.f32 0.0, %v531
      %v533 = vpop.f32.mrf.mxu0
      %v534 = vpop.f32.mrf.mxu0
      %v535 = vadd.f32 0.0, %v534
      %v536 = vpop.f32.mrf.mxu0
      %537 = vmatprep.mubr.bf16.mxu0 0
      %538 = vmatmul.mubr.bf16.gmra.mxu0 %v475
      %v539 = vpop.f32.mrf.mxu0
      %v540 = vadd.f32 0.0, %v539
      %v541 = vpop.f32.mrf.mxu0
      %v542 = vpop.f32.mrf.mxu0
      %v543 = vadd.f32 0.0, %v542
      %v544 = vpop.f32.mrf.mxu0
      %545 = vdwg.mxu0
      %v554 = vunpack.c.l.b16 %v390
      %v555 = vunpack.c.l.b16 %v392
      %v556 = vunpack.c.l.b16 %v394
      %v557 = vunpack.c.l.b16 %v396
      %v558 = vunpack.c.l.b16 %v398
      %v559 = vunpack.c.l.b16 %v400
      %v560 = vunpack.c.l.b16 %v402
      %v561 = vunpack.c.l.b16 %v404
      %v562 = vpack.c.b16 %v555, %v554
      %v563 = vpack.c.b16 %v557, %v556
      %v564 = vpack.c.b16 %v559, %v558
      %v565 = vpack.c.b16 %v561, %v560
      %v567 = vsel %vm464, %v562, 0
      %v570 = vsel %vm464, %v563, 0
      %v573 = vsel %vm464, %v564, 0
      %v576 = vsel %vm464, %v565, 0
      %v579 = vsel %vm477, %v441, 0
      %581 = vmatprep.subr.bf16.mxu0 0
      %582 = vmatpush1.bf16.msra.mxu0 0
      %583 = vmatprep.subr.bf16.mxu0 0
      %584 = vmatpush1.bf16.msra.mxu0 0
      %585 = vmatprep.subr.bf16.mxu0 0
      %586 = vmatpush1.bf16.msra.mxu0 0
      %587 = vmatprep.subr.bf16.mxu0 0
      %588 = vmatpush1.bf16.msra.mxu0 0
      %589 = vmatprep.subr.bf16.mxu0 0
      %590 = vmatpush1.bf16.msra.mxu0 0
      %591 = vmatprep.subr.bf16.mxu0 0
      %592 = vmatpush1.bf16.msra.mxu0 0
      %593 = vmatprep.subr.bf16.mxu0 0
      %594 = vmatpush1.bf16.msra.mxu0 0
      %595 = vmatprep.subr.bf16.mxu0 0
      %596 = vmatpush1.bf16.msra.mxu0 %v579
      %597 = vmatprep.subr.bf16.mxu0 0
      %598 = vmatpush2.bf16.msra.mxu0 0
      %599 = vmatprep.subr.bf16.mxu0 0
      %600 = vmatpush2.bf16.msra.mxu0 0
      %601 = vmatprep.subr.bf16.mxu0 0
      %602 = vmatpush2.bf16.msra.mxu0 0
      %603 = vmatprep.subr.bf16.mxu0 0
      %604 = vmatpush2.bf16.msra.mxu0 0
      %605 = vmatprep.subr.bf16.mxu0 0
      %606 = vmatpush2.bf16.msra.mxu0 0
      %607 = vmatprep.subr.bf16.mxu0 0
      %608 = vmatpush2.bf16.msra.mxu0 0
      %609 = vmatprep.subr.bf16.mxu0 0
      %610 = vmatpush2.bf16.msra.mxu0 0
      %611 = vmatprep.subr.bf16.mxu0 0
      %612 = vmatpush2.bf16.msra.mxu0 0
      %613 = vmatprep.mubr.bf16.mxu0 0
      %614 = vmatmul.mubr.bf16.gmra.mxu0 %v567
      %v615 = vpop.f32.mrf.mxu0
      %v616 = vadd.f32 %v516, %v615
      %v617 = vpop.f32.mrf.mxu0
      %v618 = vpop.f32.mrf.mxu0
      %v619 = vadd.f32 %v519, %v618
      %v620 = vpop.f32.mrf.mxu0
      %621 = vmatprep.mubr.bf16.mxu0 0
      %622 = vmatmul.mubr.bf16.gmra.mxu0 %v570
      %v623 = vpop.f32.mrf.mxu0
      %v624 = vadd.f32 %v524, %v623
      %v625 = vpop.f32.mrf.mxu0
      %v626 = vpop.f32.mrf.mxu0
      %v627 = vadd.f32 %v527, %v626
      %v628 = vpop.f32.mrf.mxu0
      %629 = vmatprep.mubr.bf16.mxu0 0
      %630 = vmatmul.mubr.bf16.gmra.mxu0 %v573
      %v631 = vpop.f32.mrf.mxu0
      %v632 = vadd.f32 %v532, %v631
      %v633 = vpop.f32.mrf.mxu0
      %v634 = vpop.f32.mrf.mxu0
      %v635 = vadd.f32 %v535, %v634
      %v636 = vpop.f32.mrf.mxu0
      %637 = vmatprep.mubr.bf16.mxu0 0
      %638 = vmatmul.mubr.bf16.gmra.mxu0 %v576
      %v639 = vpop.f32.mrf.mxu0
      %v640 = vadd.f32 %v540, %v639
      %v641 = vpop.f32.mrf.mxu0
      %v642 = vpop.f32.mrf.mxu0
      %v643 = vadd.f32 %v543, %v642
      %v644 = vpop.f32.mrf.mxu0
      %645 = vdwg.mxu0
      %vm646 = vsmask.f32 3328
      %vm647 = vsmask.f32 7440
      %vm648 = vmor %vm646, %vm647
      %v650 = vshrl.u32 %v390, 16
      %v652 = vrot.slane %v650, 4
      %v653 = vshll.u32 %v390, 16
      %v655 = vrot.slane %v653, 5
      %v656 = vor.u32 %v652, %v655
      %v657 = vrot.slane %v656, 4
      %v659 = vshll.u32 %v391, 16
      %v661 = vrot.slane %v659, 5
      %v662 = vsel %vm648, %v657, %v661
      %v664 = vshrl.u32 %v392, 16
      %v666 = vrot.slane %v664, 4
      %v667 = vshll.u32 %v392, 16
      %v669 = vrot.slane %v667, 5
      %v670 = vor.u32 %v666, %v669
      %v671 = vrot.slane %v670, 4
      %v673 = vshll.u32 %v393, 16
      %v675 = vrot.slane %v673, 5
      %v676 = vsel %vm648, %v671, %v675
      %v678 = vshrl.u32 %v394, 16
      %v680 = vrot.slane %v678, 4
      %v681 = vshll.u32 %v394, 16
      %v683 = vrot.slane %v681, 5
      %v684 = vor.u32 %v680, %v683
      %v685 = vrot.slane %v684, 4
      %v687 = vshll.u32 %v395, 16
      %v689 = vrot.slane %v687, 5
      %v690 = vsel %vm648, %v685, %v689
      %v692 = vshrl.u32 %v396, 16
      %v694 = vrot.slane %v692, 4
      %v695 = vshll.u32 %v396, 16
      %v697 = vrot.slane %v695, 5
      %v698 = vor.u32 %v694, %v697
      %v699 = vrot.slane %v698, 4
      %v701 = vshll.u32 %v397, 16
      %v703 = vrot.slane %v701, 5
      %v704 = vsel %vm648, %v699, %v703
      %v706 = vshrl.u32 %v398, 16
      %v708 = vrot.slane %v706, 4
      %v709 = vshll.u32 %v398, 16
      %v711 = vrot.slane %v709, 5
      %v712 = vor.u32 %v708, %v711
      %v713 = vrot.slane %v712, 4
      %v715 = vshll.u32 %v399, 16
      %v717 = vrot.slane %v715, 5
      %v718 = vsel %vm648, %v713, %v717
      %v720 = vshrl.u32 %v400, 16
      %v722 = vrot.slane %v720, 4
      %v723 = vshll.u32 %v400, 16
      %v725 = vrot.slane %v723, 5
      %v726 = vor.u32 %v722, %v725
      %v727 = vrot.slane %v726, 4
      %v729 = vshll.u32 %v401, 16
      %v731 = vrot.slane %v729, 5
      %v732 = vsel %vm648, %v727, %v731
      %v734 = vshrl.u32 %v402, 16
      %v736 = vrot.slane %v734, 4
      %v737 = vshll.u32 %v402, 16
      %v739 = vrot.slane %v737, 5
      %v740 = vor.u32 %v736, %v739
      %v741 = vrot.slane %v740, 4
      %v743 = vshll.u32 %v403, 16
      %v745 = vrot.slane %v743, 5
      %v746 = vsel %vm648, %v741, %v745
      %v748 = vshrl.u32 %v404, 16
      %v750 = vrot.slane %v748, 4
      %v751 = vshll.u32 %v404, 16
      %v753 = vrot.slane %v751, 5
      %v754 = vor.u32 %v750, %v753
      %v755 = vrot.slane %v754, 4
      %v757 = vshll.u32 %v405, 16
      %v759 = vrot.slane %v757, 5
      %v760 = vsel %vm648, %v755, %v759
      %s761 = scalar_lea.vmem %s4, 4
      %v762 = vld [vmem:[%s761] sm:$0x3]
      %v763 = vunpack.c.l.b16 %v662
      %v764 = vunpack.c.l.b16 %v676
      %v765 = vunpack.c.l.b16 %v690
      %v766 = vunpack.c.l.b16 %v704
      %v767 = vunpack.c.l.b16 %v718
      %v768 = vunpack.c.l.b16 %v732
      %v769 = vunpack.c.l.b16 %v746
      %v770 = vunpack.c.l.b16 %v760
      %v771 = vpack.c.b16 %v764, %v763
      %v772 = vpack.c.b16 %v766, %v765
      %v773 = vpack.c.b16 %v768, %v767
      %v774 = vpack.c.b16 %v770, %v769
      %v776 = vsel %vm464, %v771, 0
      %v779 = vsel %vm464, %v772, 0
      %v782 = vsel %vm464, %v773, 0
      %v785 = vsel %vm464, %v774, 0
      %v788 = vsel %vm477, %v762, 0
      %790 = vmatprep.subr.bf16.mxu0 0
      %791 = vmatpush1.bf16.msra.mxu0 0
      %792 = vmatprep.subr.bf16.mxu0 0
      %793 = vmatpush1.bf16.msra.mxu0 0
      %794 = vmatprep.subr.bf16.mxu0 0
      %795 = vmatpush1.bf16.msra.mxu0 0
      %796 = vmatprep.subr.bf16.mxu0 0
      %797 = vmatpush1.bf16.msra.mxu0 0
      %798 = vmatprep.subr.bf16.mxu0 0
      %799 = vmatpush1.bf16.msra.mxu0 0
      %800 = vmatprep.subr.bf16.mxu0 0
      %801 = vmatpush1.bf16.msra.mxu0 0
      %802 = vmatprep.subr.bf16.mxu0 0
      %803 = vmatpush1.bf16.msra.mxu0 0
      %804 = vmatprep.subr.bf16.mxu0 0
      %805 = vmatpush1.bf16.msra.mxu0 %v788
      %806 = vmatprep.subr.bf16.mxu0 0
      %807 = vmatpush2.bf16.msra.mxu0 0
      %808 = vmatprep.subr.bf16.mxu0 0
      %809 = vmatpush2.bf16.msra.mxu0 0
      %810 = vmatprep.subr.bf16.mxu0 0
      %811 = vmatpush2.bf16.msra.mxu0 0
      %812 = vmatprep.subr.bf16.mxu0 0
      %813 = vmatpush2.bf16.msra.mxu0 0
      %814 = vmatprep.subr.bf16.mxu0 0
      %815 = vmatpush2.bf16.msra.mxu0 0
      %816 = vmatprep.subr.bf16.mxu0 0
      %817 = vmatpush2.bf16.msra.mxu0 0
      %818 = vmatprep.subr.bf16.mxu0 0
      %819 = vmatpush2.bf16.msra.mxu0 0
      %820 = vmatprep.subr.bf16.mxu0 0
      %821 = vmatpush2.bf16.msra.mxu0 0
      %822 = vmatprep.mubr.bf16.mxu0 0
      %823 = vmatmul.mubr.bf16.gmra.mxu0 %v776
      %v824 = vpop.f32.mrf.mxu0
      %v825 = vadd.f32 0.0, %v824
      %v826 = vpop.f32.mrf.mxu0
      %v827 = vpop.f32.mrf.mxu0
      %v828 = vadd.f32 0.0, %v827
      %v829 = vpop.f32.mrf.mxu0
      %830 = vmatprep.mubr.bf16.mxu0 0
      %831 = vmatmul.mubr.bf16.gmra.mxu0 %v779
      %v832 = vpop.f32.mrf.mxu0
      %v833 = vadd.f32 0.0, %v832
      %v834 = vpop.f32.mrf.mxu0
      %v835 = vpop.f32.mrf.mxu0
      %v836 = vadd.f32 0.0, %v835
      %v837 = vpop.f32.mrf.mxu0
      %838 = vmatprep.mubr.bf16.mxu0 0
      %839 = vmatmul.mubr.bf16.gmra.mxu0 %v782
      %v840 = vpop.f32.mrf.mxu0
      %v841 = vadd.f32 0.0, %v840
      %v842 = vpop.f32.mrf.mxu0
      %v843 = vpop.f32.mrf.mxu0
      %v844 = vadd.f32 0.0, %v843
      %v845 = vpop.f32.mrf.mxu0
      %846 = vmatprep.mubr.bf16.mxu0 0
      %847 = vmatmul.mubr.bf16.gmra.mxu0 %v785
      %v848 = vpop.f32.mrf.mxu0
      %v849 = vadd.f32 0.0, %v848
      %v850 = vpop.f32.mrf.mxu0
      %v851 = vpop.f32.mrf.mxu0
      %v852 = vadd.f32 0.0, %v851
      %v853 = vpop.f32.mrf.mxu0
      %854 = vdwg.mxu0
      %v855 = vadd.f32 %v616, %v825
      %v856 = vadd.f32 %v619, %v828
      %v857 = vadd.f32 %v624, %v833
      %v858 = vadd.f32 %v627, %v836
      %v859 = vadd.f32 %v632, %v841
      %v860 = vadd.f32 %v635, %v844
      %v861 = vadd.f32 %v640, %v849
      %v862 = vadd.f32 %v643, %v852
      %s863 = scalar_lea.vmem %s4, 6
      %v864 = vld [vmem:[%s863] sm:$0x3]
      %v873 = vunpack.c.l.b16 %v417
      %v874 = vunpack.c.l.b16 %v419
      %v875 = vunpack.c.l.b16 %v421
      %v876 = vunpack.c.l.b16 %v423
      %v877 = vunpack.c.l.b16 %v425
      %v878 = vunpack.c.l.b16 %v427
      %v879 = vunpack.c.l.b16 %v429
      %v880 = vunpack.c.l.b16 %v431
      %v881 = vpack.c.b16 %v874, %v873
      %v882 = vpack.c.b16 %v876, %v875
      %v883 = vpack.c.b16 %v878, %v877
      %v884 = vpack.c.b16 %v880, %v879
      %v886 = vsel %vm464, %v881, 0
      %v889 = vsel %vm464, %v882, 0
      %v892 = vsel %vm464, %v883, 0
      %v895 = vsel %vm464, %v884, 0
      %v898 = vsel %vm477, %v864, 0
      %900 = vmatprep.subr.bf16.mxu0 0
      %901 = vmatpush1.bf16.msra.mxu0 0
      %902 = vmatprep.subr.bf16.mxu0 0
      %903 = vmatpush1.bf16.msra.mxu0 0
      %904 = vmatprep.subr.bf16.mxu0 0
      %905 = vmatpush1.bf16.msra.mxu0 0
      %906 = vmatprep.subr.bf16.mxu0 0
      %907 = vmatpush1.bf16.msra.mxu0 0
      %908 = vmatprep.subr.bf16.mxu0 0
      %909 = vmatpush1.bf16.msra.mxu0 0
      %910 = vmatprep.subr.bf16.mxu0 0
      %911 = vmatpush1.bf16.msra.mxu0 0
      %912 = vmatprep.subr.bf16.mxu0 0
      %913 = vmatpush1.bf16.msra.mxu0 0
      %914 = vmatprep.subr.bf16.mxu0 0
      %915 = vmatpush1.bf16.msra.mxu0 %v898
      %916 = vmatprep.subr.bf16.mxu0 0
      %917 = vmatpush2.bf16.msra.mxu0 0
      %918 = vmatprep.subr.bf16.mxu0 0
      %919 = vmatpush2.bf16.msra.mxu0 0
      %920 = vmatprep.subr.bf16.mxu0 0
      %921 = vmatpush2.bf16.msra.mxu0 0
      %922 = vmatprep.subr.bf16.mxu0 0
      %923 = vmatpush2.bf16.msra.mxu0 0
      %924 = vmatprep.subr.bf16.mxu0 0
      %925 = vmatpush2.bf16.msra.mxu0 0
      %926 = vmatprep.subr.bf16.mxu0 0
      %927 = vmatpush2.bf16.msra.mxu0 0
      %928 = vmatprep.subr.bf16.mxu0 0
      %929 = vmatpush2.bf16.msra.mxu0 0
      %930 = vmatprep.subr.bf16.mxu0 0
      %931 = vmatpush2.bf16.msra.mxu0 0
      %932 = vmatprep.mubr.bf16.mxu0 0
      %933 = vmatmul.mubr.bf16.gmra.mxu0 %v886
      %v934 = vpop.f32.mrf.mxu0
      %v935 = vadd.f32 0.0, %v934
      %v936 = vpop.f32.mrf.mxu0
      %v937 = vpop.f32.mrf.mxu0
      %v938 = vadd.f32 0.0, %v937
      %v939 = vpop.f32.mrf.mxu0
      %940 = vmatprep.mubr.bf16.mxu0 0
      %941 = vmatmul.mubr.bf16.gmra.mxu0 %v889
      %v942 = vpop.f32.mrf.mxu0
      %v943 = vadd.f32 0.0, %v942
      %v944 = vpop.f32.mrf.mxu0
      %v945 = vpop.f32.mrf.mxu0
      %v946 = vadd.f32 0.0, %v945
      %v947 = vpop.f32.mrf.mxu0
      %948 = vmatprep.mubr.bf16.mxu0 0
      %949 = vmatmul.mubr.bf16.gmra.mxu0 %v892
      %v950 = vpop.f32.mrf.mxu0
      %v951 = vadd.f32 0.0, %v950
      %v952 = vpop.f32.mrf.mxu0
      %v953 = vpop.f32.mrf.mxu0
      %v954 = vadd.f32 0.0, %v953
      %v955 = vpop.f32.mrf.mxu0
      %956 = vmatprep.mubr.bf16.mxu0 0
      %957 = vmatmul.mubr.bf16.gmra.mxu0 %v895
      %v958 = vpop.f32.mrf.mxu0
      %v959 = vadd.f32 0.0, %v958
      %v960 = vpop.f32.mrf.mxu0
      %v961 = vpop.f32.mrf.mxu0
      %v962 = vadd.f32 0.0, %v961
      %v963 = vpop.f32.mrf.mxu0
      %964 = vdwg.mxu0
      %v965 = vadd.f32 %v855, %v935
      %v966 = vadd.f32 %v856, %v938
      %v967 = vadd.f32 %v857, %v943
      %v968 = vadd.f32 %v858, %v946
      %v969 = vadd.f32 %v859, %v951
      %v970 = vadd.f32 %v860, %v954
      %v971 = vadd.f32 %v861, %v959
      %v972 = vadd.f32 %v862, %v962
      %s973 = scalar_lea.vmem %s4, 8
      %v974 = vld [vmem:[%s973] sm:$0x3]
      %v983 = vunpack.c.l.b16 %v433
      %v984 = vunpack.c.l.b16 %v434
      %v985 = vunpack.c.l.b16 %v435
      %v986 = vunpack.c.l.b16 %v436
      %v987 = vunpack.c.l.b16 %v437
      %v988 = vunpack.c.l.b16 %v438
      %v989 = vunpack.c.l.b16 %v439
      %v990 = vunpack.c.l.b16 %v440
      %v991 = vpack.c.b16 %v984, %v983
      %v992 = vpack.c.b16 %v986, %v985
      %v993 = vpack.c.b16 %v988, %v987
      %v994 = vpack.c.b16 %v990, %v989
      %v996 = vsel %vm464, %v991, 0
      %v999 = vsel %vm464, %v992, 0
      %v1002 = vsel %vm464, %v993, 0
      %v1005 = vsel %vm464, %v994, 0
      %v1008 = vsel %vm477, %v974, 0
      %1010 = vmatprep.subr.bf16.mxu0 0
      %1011 = vmatpush1.bf16.msra.mxu0 0
      %1012 = vmatprep.subr.bf16.mxu0 0
      %1013 = vmatpush1.bf16.msra.mxu0 0
      %1014 = vmatprep.subr.bf16.mxu0 0
      %1015 = vmatpush1.bf16.msra.mxu0 0
      %1016 = vmatprep.subr.bf16.mxu0 0
      %1017 = vmatpush1.bf16.msra.mxu0 0
      %1018 = vmatprep.subr.bf16.mxu0 0
      %1019 = vmatpush1.bf16.msra.mxu0 0
      %1020 = vmatprep.subr.bf16.mxu0 0
      %1021 = vmatpush1.bf16.msra.mxu0 0
      %1022 = vmatprep.subr.bf16.mxu0 0
      %1023 = vmatpush1.bf16.msra.mxu0 0
      %1024 = vmatprep.subr.bf16.mxu0 0
      %1025 = vmatpush1.bf16.msra.mxu0 %v1008
      %1026 = vmatprep.subr.bf16.mxu0 0
      %1027 = vmatpush2.bf16.msra.mxu0 0
      %1028 = vmatprep.subr.bf16.mxu0 0
      %1029 = vmatpush2.bf16.msra.mxu0 0
      %1030 = vmatprep.subr.bf16.mxu0 0
      %1031 = vmatpush2.bf16.msra.mxu0 0
      %1032 = vmatprep.subr.bf16.mxu0 0
      %1033 = vmatpush2.bf16.msra.mxu0 0
      %1034 = vmatprep.subr.bf16.mxu0 0
      %1035 = vmatpush2.bf16.msra.mxu0 0
      %1036 = vmatprep.subr.bf16.mxu0 0
      %1037 = vmatpush2.bf16.msra.mxu0 0
      %1038 = vmatprep.subr.bf16.mxu0 0
      %1039 = vmatpush2.bf16.msra.mxu0 0
      %1040 = vmatprep.subr.bf16.mxu0 0
      %1041 = vmatpush2.bf16.msra.mxu0 0
      %1042 = vmatprep.mubr.bf16.mxu0 0
      %1043 = vmatmul.mubr.bf16.gmra.mxu0 %v996
      %v1044 = vpop.f32.mrf.mxu0
      %v1045 = vadd.f32 0.0, %v1044
      %v1046 = vpop.f32.mrf.mxu0
      %v1047 = vpop.f32.mrf.mxu0
      %v1048 = vadd.f32 0.0, %v1047
      %v1049 = vpop.f32.mrf.mxu0
      %1050 = vmatprep.mubr.bf16.mxu0 0
      %1051 = vmatmul.mubr.bf16.gmra.mxu0 %v999
      %v1052 = vpop.f32.mrf.mxu0
      %v1053 = vadd.f32 0.0, %v1052
      %v1054 = vpop.f32.mrf.mxu0
      %v1055 = vpop.f32.mrf.mxu0
      %v1056 = vadd.f32 0.0, %v1055
      %v1057 = vpop.f32.mrf.mxu0
      %1058 = vmatprep.mubr.bf16.mxu0 0
      %1059 = vmatmul.mubr.bf16.gmra.mxu0 %v1002
      %v1060 = vpop.f32.mrf.mxu0
      %v1061 = vadd.f32 0.0, %v1060
      %v1062 = vpop.f32.mrf.mxu0
      %v1063 = vpop.f32.mrf.mxu0
      %v1064 = vadd.f32 0.0, %v1063
      %v1065 = vpop.f32.mrf.mxu0
      %1066 = vmatprep.mubr.bf16.mxu0 0
      %1067 = vmatmul.mubr.bf16.gmra.mxu0 %v1005
      %v1068 = vpop.f32.mrf.mxu0
      %v1069 = vadd.f32 0.0, %v1068
      %v1070 = vpop.f32.mrf.mxu0
      %v1071 = vpop.f32.mrf.mxu0
      %v1072 = vadd.f32 0.0, %v1071
      %v1073 = vpop.f32.mrf.mxu0
      %1074 = vdwg.mxu0
      %v1075 = vadd.f32 %v965, %v1045
      %v1076 = vadd.f32 %v966, %v1048
      %v1077 = vadd.f32 %v967, %v1053
      %v1078 = vadd.f32 %v968, %v1056
      %v1079 = vadd.f32 %v969, %v1061
      %v1080 = vadd.f32 %v970, %v1064
      %v1081 = vadd.f32 %v971, %v1069
      %v1082 = vadd.f32 %v972, %v1072
      %v1084 = vshrl.u32 %v417, 16
      %v1086 = vrot.slane %v1084, 4
      %v1087 = vshll.u32 %v417, 16
      %v1089 = vrot.slane %v1087, 5
      %v1090 = vor.u32 %v1086, %v1089
      %v1091 = vrot.slane %v1090, 4
      %v1093 = vshll.u32 %v418, 16
      %v1095 = vrot.slane %v1093, 5
      %v1096 = vsel %vm648, %v1091, %v1095
      %v1098 = vshrl.u32 %v419, 16
      %v1100 = vrot.slane %v1098, 4
      %v1101 = vshll.u32 %v419, 16
      %v1103 = vrot.slane %v1101, 5
      %v1104 = vor.u32 %v1100, %v1103
      %v1105 = vrot.slane %v1104, 4
      %v1107 = vshll.u32 %v420, 16
      %v1109 = vrot.slane %v1107, 5
      %v1110 = vsel %vm648, %v1105, %v1109
      %v1112 = vshrl.u32 %v421, 16
      %v1114 = vrot.slane %v1112, 4
      %v1115 = vshll.u32 %v421, 16
      %v1117 = vrot.slane %v1115, 5
      %v1118 = vor.u32 %v1114, %v1117
      %v1119 = vrot.slane %v1118, 4
      %v1121 = vshll.u32 %v422, 16
      %v1123 = vrot.slane %v1121, 5
      %v1124 = vsel %vm648, %v1119, %v1123
      %v1126 = vshrl.u32 %v423, 16
      %v1128 = vrot.slane %v1126, 4
      %v1129 = vshll.u32 %v423, 16
      %v1131 = vrot.slane %v1129, 5
      %v1132 = vor.u32 %v1128, %v1131
      %v1133 = vrot.slane %v1132, 4
      %v1135 = vshll.u32 %v424, 16
      %v1137 = vrot.slane %v1135, 5
      %v1138 = vsel %vm648, %v1133, %v1137
      %v1140 = vshrl.u32 %v425, 16
      %v1142 = vrot.slane %v1140, 4
      %v1143 = vshll.u32 %v425, 16
      %v1145 = vrot.slane %v1143, 5
      %v1146 = vor.u32 %v1142, %v1145
      %v1147 = vrot.slane %v1146, 4
      %v1149 = vshll.u32 %v426, 16
      %v1151 = vrot.slane %v1149, 5
      %v1152 = vsel %vm648, %v1147, %v1151
      %v1154 = vshrl.u32 %v427, 16
      %v1156 = vrot.slane %v1154, 4
      %v1157 = vshll.u32 %v427, 16
      %v1159 = vrot.slane %v1157, 5
      %v1160 = vor.u32 %v1156, %v1159
      %v1161 = vrot.slane %v1160, 4
      %v1163 = vshll.u32 %v428, 16
      %v1165 = vrot.slane %v1163, 5
      %v1166 = vsel %vm648, %v1161, %v1165
      %v1168 = vshrl.u32 %v429, 16
      %v1170 = vrot.slane %v1168, 4
      %v1171 = vshll.u32 %v429, 16
      %v1173 = vrot.slane %v1171, 5
      %v1174 = vor.u32 %v1170, %v1173
      %v1175 = vrot.slane %v1174, 4
      %v1177 = vshll.u32 %v430, 16
      %v1179 = vrot.slane %v1177, 5
      %v1180 = vsel %vm648, %v1175, %v1179
      %v1182 = vshrl.u32 %v431, 16
      %v1184 = vrot.slane %v1182, 4
      %v1185 = vshll.u32 %v431, 16
      %v1187 = vrot.slane %v1185, 5
      %v1188 = vor.u32 %v1184, %v1187
      %v1189 = vrot.slane %v1188, 4
      %v1191 = vshll.u32 %v432, 16
      %v1193 = vrot.slane %v1191, 5
      %v1194 = vsel %vm648, %v1189, %v1193
      %s1195 = scalar_lea.vmem %s4, 10
      %v1196 = vld [vmem:[%s1195] sm:$0x3]
      %v1197 = vunpack.c.l.b16 %v1096
      %v1198 = vunpack.c.l.b16 %v1110
      %v1199 = vunpack.c.l.b16 %v1124
      %v1200 = vunpack.c.l.b16 %v1138
      %v1201 = vunpack.c.l.b16 %v1152
      %v1202 = vunpack.c.l.b16 %v1166
      %v1203 = vunpack.c.l.b16 %v1180
      %v1204 = vunpack.c.l.b16 %v1194
      %v1205 = vpack.c.b16 %v1198, %v1197
      %v1206 = vpack.c.b16 %v1200, %v1199
      %v1207 = vpack.c.b16 %v1202, %v1201
      %v1208 = vpack.c.b16 %v1204, %v1203
      %v1210 = vsel %vm464, %v1205, 0
      %v1213 = vsel %vm464, %v1206, 0
      %v1216 = vsel %vm464, %v1207, 0
      %v1219 = vsel %vm464, %v1208, 0
      %v1222 = vsel %vm477, %v1196, 0
      %1224 = vmatprep.subr.bf16.mxu0 0
      %1225 = vmatpush1.bf16.msra.mxu0 0
      %1226 = vmatprep.subr.bf16.mxu0 0
      %1227 = vmatpush1.bf16.msra.mxu0 0
      %1228 = vmatprep.subr.bf16.mxu0 0
      %1229 = vmatpush1.bf16.msra.mxu0 0
      %1230 = vmatprep.subr.bf16.mxu0 0
      %1231 = vmatpush1.bf16.msra.mxu0 0
      %1232 = vmatprep.subr.bf16.mxu0 0
      %1233 = vmatpush1.bf16.msra.mxu0 0
      %1234 = vmatprep.subr.bf16.mxu0 0
      %1235 = vmatpush1.bf16.msra.mxu0 0
      %1236 = vmatprep.subr.bf16.mxu0 0
      %1237 = vmatpush1.bf16.msra.mxu0 0
      %1238 = vmatprep.subr.bf16.mxu0 0
      %1239 = vmatpush1.bf16.msra.mxu0 %v1222
      %1240 = vmatprep.subr.bf16.mxu0 0
      %1241 = vmatpush2.bf16.msra.mxu0 0
      %1242 = vmatprep.subr.bf16.mxu0 0
      %1243 = vmatpush2.bf16.msra.mxu0 0
      %1244 = vmatprep.subr.bf16.mxu0 0
      %1245 = vmatpush2.bf16.msra.mxu0 0
      %1246 = vmatprep.subr.bf16.mxu0 0
      %1247 = vmatpush2.bf16.msra.mxu0 0
      %1248 = vmatprep.subr.bf16.mxu0 0
      %1249 = vmatpush2.bf16.msra.mxu0 0
      %1250 = vmatprep.subr.bf16.mxu0 0
      %1251 = vmatpush2.bf16.msra.mxu0 0
      %1252 = vmatprep.subr.bf16.mxu0 0
      %1253 = vmatpush2.bf16.msra.mxu0 0
      %1254 = vmatprep.subr.bf16.mxu0 0
      %1255 = vmatpush2.bf16.msra.mxu0 0
      %1256 = vmatprep.mubr.bf16.mxu0 0
      %1257 = vmatmul.mubr.bf16.gmra.mxu0 %v1210
      %v1258 = vpop.f32.mrf.mxu0
      %v1259 = vadd.f32 0.0, %v1258
      %v1260 = vpop.f32.mrf.mxu0
      %v1261 = vpop.f32.mrf.mxu0
      %v1262 = vadd.f32 0.0, %v1261
      %v1263 = vpop.f32.mrf.mxu0
      %1264 = vmatprep.mubr.bf16.mxu0 0
      %1265 = vmatmul.mubr.bf16.gmra.mxu0 %v1213
      %v1266 = vpop.f32.mrf.mxu0
      %v1267 = vadd.f32 0.0, %v1266
      %v1268 = vpop.f32.mrf.mxu0
      %v1269 = vpop.f32.mrf.mxu0
      %v1270 = vadd.f32 0.0, %v1269
      %v1271 = vpop.f32.mrf.mxu0
      %1272 = vmatprep.mubr.bf16.mxu0 0
      %1273 = vmatmul.mubr.bf16.gmra.mxu0 %v1216
      %v1274 = vpop.f32.mrf.mxu0
      %v1275 = vadd.f32 0.0, %v1274
      %v1276 = vpop.f32.mrf.mxu0
      %v1277 = vpop.f32.mrf.mxu0
      %v1278 = vadd.f32 0.0, %v1277
      %v1279 = vpop.f32.mrf.mxu0
      %1280 = vmatprep.mubr.bf16.mxu0 0
      %1281 = vmatmul.mubr.bf16.gmra.mxu0 %v1219
      %v1282 = vpop.f32.mrf.mxu0
      %v1283 = vadd.f32 0.0, %v1282
      %v1284 = vpop.f32.mrf.mxu0
      %v1285 = vpop.f32.mrf.mxu0
      %v1286 = vadd.f32 0.0, %v1285
      %v1287 = vpop.f32.mrf.mxu0
      %1288 = vdwg.mxu0
      %v1289 = vadd.f32 %v1075, %v1259
      %v1290 = vadd.f32 %v1076, %v1262
      %v1291 = vadd.f32 %v1077, %v1267
      %v1292 = vadd.f32 %v1078, %v1270
      %v1293 = vadd.f32 %v1079, %v1275
      %v1294 = vadd.f32 %v1080, %v1278
      %v1295 = vadd.f32 %v1081, %v1283
      %v1296 = vadd.f32 %v1082, %v1286
      %s1297 = scalar_lea.vmem %s4, 12
      %v1298 = vld [vmem:[%s1297] sm:$0x3]
      %v1300 = vunpack.c.l.b16 %v406
      %v1301 = vpack.c.b16 %v556, %v555
      %v1302 = vpack.c.b16 %v558, %v557
      %v1303 = vpack.c.b16 %v560, %v559
      %v1304 = vpack.c.b16 %v1300, %v561
      %v1306 = vsel %vm464, %v1301, 0
      %v1309 = vsel %vm464, %v1302, 0
      %v1312 = vsel %vm464, %v1303, 0
      %v1315 = vsel %vm464, %v1304, 0
      %v1318 = vsel %vm477, %v1298, 0
      %1320 = vmatprep.subr.bf16.mxu0 0
      %1321 = vmatpush1.bf16.msra.mxu0 0
      %1322 = vmatprep.subr.bf16.mxu0 0
      %1323 = vmatpush1.bf16.msra.mxu0 0
      %1324 = vmatprep.subr.bf16.mxu0 0
      %1325 = vmatpush1.bf16.msra.mxu0 0
      %1326 = vmatprep.subr.bf16.mxu0 0
      %1327 = vmatpush1.bf16.msra.mxu0 0
      %1328 = vmatprep.subr.bf16.mxu0 0
      %1329 = vmatpush1.bf16.msra.mxu0 0
      %1330 = vmatprep.subr.bf16.mxu0 0
      %1331 = vmatpush1.bf16.msra.mxu0 0
      %1332 = vmatprep.subr.bf16.mxu0 0
      %1333 = vmatpush1.bf16.msra.mxu0 0
      %1334 = vmatprep.subr.bf16.mxu0 0
      %1335 = vmatpush1.bf16.msra.mxu0 %v1318
      %1336 = vmatprep.subr.bf16.mxu0 0
      %1337 = vmatpush2.bf16.msra.mxu0 0
      %1338 = vmatprep.subr.bf16.mxu0 0
      %1339 = vmatpush2.bf16.msra.mxu0 0
      %1340 = vmatprep.subr.bf16.mxu0 0
      %1341 = vmatpush2.bf16.msra.mxu0 0
      %1342 = vmatprep.subr.bf16.mxu0 0
      %1343 = vmatpush2.bf16.msra.mxu0 0
      %1344 = vmatprep.subr.bf16.mxu0 0
      %1345 = vmatpush2.bf16.msra.mxu0 0
      %1346 = vmatprep.subr.bf16.mxu0 0
      %1347 = vmatpush2.bf16.msra.mxu0 0
      %1348 = vmatprep.subr.bf16.mxu0 0
      %1349 = vmatpush2.bf16.msra.mxu0 0
      %1350 = vmatprep.subr.bf16.mxu0 0
      %1351 = vmatpush2.bf16.msra.mxu0 0
      %1352 = vmatprep.mubr.bf16.mxu0 0
      %1353 = vmatmul.mubr.bf16.gmra.mxu0 %v1306
      %v1354 = vpop.f32.mrf.mxu0
      %v1355 = vadd.f32 0.0, %v1354
      %v1356 = vpop.f32.mrf.mxu0
      %v1357 = vpop.f32.mrf.mxu0
      %v1358 = vadd.f32 0.0, %v1357
      %v1359 = vpop.f32.mrf.mxu0
      %1360 = vmatprep.mubr.bf16.mxu0 0
      %1361 = vmatmul.mubr.bf16.gmra.mxu0 %v1309
      %v1362 = vpop.f32.mrf.mxu0
      %v1363 = vadd.f32 0.0, %v1362
      %v1364 = vpop.f32.mrf.mxu0
      %v1365 = vpop.f32.mrf.mxu0
      %v1366 = vadd.f32 0.0, %v1365
      %v1367 = vpop.f32.mrf.mxu0
      %1368 = vmatprep.mubr.bf16.mxu0 0
      %1369 = vmatmul.mubr.bf16.gmra.mxu0 %v1312
      %v1370 = vpop.f32.mrf.mxu0
      %v1371 = vadd.f32 0.0, %v1370
      %v1372 = vpop.f32.mrf.mxu0
      %v1373 = vpop.f32.mrf.mxu0
      %v1374 = vadd.f32 0.0, %v1373
      %v1375 = vpop.f32.mrf.mxu0
      %1376 = vmatprep.mubr.bf16.mxu0 0
      %1377 = vmatmul.mubr.bf16.gmra.mxu0 %v1315
      %v1378 = vpop.f32.mrf.mxu0
      %v1379 = vadd.f32 0.0, %v1378
      %v1380 = vpop.f32.mrf.mxu0
      %v1381 = vpop.f32.mrf.mxu0
      %v1382 = vadd.f32 0.0, %v1381
      %v1383 = vpop.f32.mrf.mxu0
      %1384 = vdwg.mxu0
      %v1385 = vadd.f32 %v1289, %v1355
      %v1386 = vadd.f32 %v1290, %v1358
      %v1387 = vadd.f32 %v1291, %v1363
      %v1388 = vadd.f32 %v1292, %v1366
      %v1389 = vadd.f32 %v1293, %v1371
      %v1390 = vadd.f32 %v1294, %v1374
      %v1391 = vadd.f32 %v1295, %v1379
      %v1392 = vadd.f32 %v1296, %v1382
      %s1393 = scalar_lea.vmem %s4, 14
      %v1394 = vld [vmem:[%s1393] sm:$0x3]
      %v1396 = vunpack.c.l.b16 %v416
      %v1397 = vpack.c.b16 %v454, %v453
      %v1398 = vpack.c.b16 %v456, %v455
      %v1399 = vpack.c.b16 %v458, %v457
      %v1400 = vpack.c.b16 %v1396, %v459
      %v1402 = vsel %vm464, %v1397, 0
      %v1405 = vsel %vm464, %v1398, 0
      %v1408 = vsel %vm464, %v1399, 0
      %v1411 = vsel %vm464, %v1400, 0
      %v1414 = vsel %vm477, %v1394, 0
      %1416 = vmatprep.subr.bf16.mxu0 0
      %1417 = vmatpush1.bf16.msra.mxu0 0
      %1418 = vmatprep.subr.bf16.mxu0 0
      %1419 = vmatpush1.bf16.msra.mxu0 0
      %1420 = vmatprep.subr.bf16.mxu0 0
      %1421 = vmatpush1.bf16.msra.mxu0 0
      %1422 = vmatprep.subr.bf16.mxu0 0
      %1423 = vmatpush1.bf16.msra.mxu0 0
      %1424 = vmatprep.subr.bf16.mxu0 0
      %1425 = vmatpush1.bf16.msra.mxu0 0
      %1426 = vmatprep.subr.bf16.mxu0 0
      %1427 = vmatpush1.bf16.msra.mxu0 0
      %1428 = vmatprep.subr.bf16.mxu0 0
      %1429 = vmatpush1.bf16.msra.mxu0 0
      %1430 = vmatprep.subr.bf16.mxu0 0
      %1431 = vmatpush1.bf16.msra.mxu0 %v1414
      %1432 = vmatprep.subr.bf16.mxu0 0
      %1433 = vmatpush2.bf16.msra.mxu0 0
      %1434 = vmatprep.subr.bf16.mxu0 0
      %1435 = vmatpush2.bf16.msra.mxu0 0
      %1436 = vmatprep.subr.bf16.mxu0 0
      %1437 = vmatpush2.bf16.msra.mxu0 0
      %1438 = vmatprep.subr.bf16.mxu0 0
      %1439 = vmatpush2.bf16.msra.mxu0 0
      %1440 = vmatprep.subr.bf16.mxu0 0
      %1441 = vmatpush2.bf16.msra.mxu0 0
      %1442 = vmatprep.subr.bf16.mxu0 0
      %1443 = vmatpush2.bf16.msra.mxu0 0
      %1444 = vmatprep.subr.bf16.mxu0 0
      %1445 = vmatpush2.bf16.msra.mxu0 0
      %1446 = vmatprep.subr.bf16.mxu0 0
      %1447 = vmatpush2.bf16.msra.mxu0 0
      %1448 = vmatprep.mubr.bf16.mxu0 0
      %1449 = vmatmul.mubr.bf16.gmra.mxu0 %v1402
      %v1450 = vpop.f32.mrf.mxu0
      %v1451 = vadd.f32 0.0, %v1450
      %v1452 = vpop.f32.mrf.mxu0
      %v1453 = vpop.f32.mrf.mxu0
      %v1454 = vadd.f32 0.0, %v1453
      %v1455 = vpop.f32.mrf.mxu0
      %1456 = vmatprep.mubr.bf16.mxu0 0
      %1457 = vmatmul.mubr.bf16.gmra.mxu0 %v1405
      %v1458 = vpop.f32.mrf.mxu0
      %v1459 = vadd.f32 0.0, %v1458
      %v1460 = vpop.f32.mrf.mxu0
      %v1461 = vpop.f32.mrf.mxu0
      %v1462 = vadd.f32 0.0, %v1461
      %v1463 = vpop.f32.mrf.mxu0
      %1464 = vmatprep.mubr.bf16.mxu0 0
      %1465 = vmatmul.mubr.bf16.gmra.mxu0 %v1408
      %v1466 = vpop.f32.mrf.mxu0
      %v1467 = vadd.f32 0.0, %v1466
      %v1468 = vpop.f32.mrf.mxu0
      %v1469 = vpop.f32.mrf.mxu0
      %v1470 = vadd.f32 0.0, %v1469
      %v1471 = vpop.f32.mrf.mxu0
      %1472 = vmatprep.mubr.bf16.mxu0 0
      %1473 = vmatmul.mubr.bf16.gmra.mxu0 %v1411
      %v1474 = vpop.f32.mrf.mxu0
      %v1475 = vadd.f32 0.0, %v1474
      %v1476 = vpop.f32.mrf.mxu0
      %v1477 = vpop.f32.mrf.mxu0
      %v1478 = vadd.f32 0.0, %v1477
      %v1479 = vpop.f32.mrf.mxu0
      %1480 = vdwg.mxu0
      %v1481 = vadd.f32 %v1385, %v1451
      %v1482 = vadd.f32 %v1386, %v1454
      %v1483 = vadd.f32 %v1387, %v1459
      %v1484 = vadd.f32 %v1388, %v1462
      %v1485 = vadd.f32 %v1389, %v1467
      %v1486 = vadd.f32 %v1390, %v1470
      %v1487 = vadd.f32 %v1391, %v1475
      %v1488 = vadd.f32 %v1392, %v1478
      %v1490 = vshrl.u32 %v406, 16
      %v1492 = vrot.slane %v1490, 4
      %v1493 = vshll.u32 %v406, 16
      %v1495 = vrot.slane %v1493, 5
      %v1496 = vor.u32 %v1492, %v1495
      %v1497 = vrot.slane %v1496, 4
      %v1499 = vshll.u32 %v407, 16
      %v1501 = vrot.slane %v1499, 5
      %v1502 = vsel %vm648, %v1497, %v1501
      %s1503 = scalar_lea.vmem %s4, 16
      %v1504 = vld [vmem:[%s1503] sm:$0x3]
      %v1505 = vunpack.c.l.b16 %v1502
      %v1506 = vpack.c.b16 %v765, %v764
      %v1507 = vpack.c.b16 %v767, %v766
      %v1508 = vpack.c.b16 %v769, %v768
      %v1509 = vpack.c.b16 %v1505, %v770
      %v1511 = vsel %vm464, %v1506, 0
      %v1514 = vsel %vm464, %v1507, 0
      %v1517 = vsel %vm464, %v1508, 0
      %v1520 = vsel %vm464, %v1509, 0
      %v1523 = vsel %vm477, %v1504, 0
      %1525 = vmatprep.subr.bf16.mxu0 0
      %1526 = vmatpush1.bf16.msra.mxu0 0
      %1527 = vmatprep.subr.bf16.mxu0 0
      %1528 = vmatpush1.bf16.msra.mxu0 0
      %1529 = vmatprep.subr.bf16.mxu0 0
      %1530 = vmatpush1.bf16.msra.mxu0 0
      %1531 = vmatprep.subr.bf16.mxu0 0
      %1532 = vmatpush1.bf16.msra.mxu0 0
      %1533 = vmatprep.subr.bf16.mxu0 0
      %1534 = vmatpush1.bf16.msra.mxu0 0
      %1535 = vmatprep.subr.bf16.mxu0 0
      %1536 = vmatpush1.bf16.msra.mxu0 0
      %1537 = vmatprep.subr.bf16.mxu0 0
      %1538 = vmatpush1.bf16.msra.mxu0 0
      %1539 = vmatprep.subr.bf16.mxu0 0
      %1540 = vmatpush1.bf16.msra.mxu0 %v1523
      %1541 = vmatprep.subr.bf16.mxu0 0
      %1542 = vmatpush2.bf16.msra.mxu0 0
      %1543 = vmatprep.subr.bf16.mxu0 0
      %1544 = vmatpush2.bf16.msra.mxu0 0
      %1545 = vmatprep.subr.bf16.mxu0 0
      %1546 = vmatpush2.bf16.msra.mxu0 0
      %1547 = vmatprep.subr.bf16.mxu0 0
      %1548 = vmatpush2.bf16.msra.mxu0 0
      %1549 = vmatprep.subr.bf16.mxu0 0
      %1550 = vmatpush2.bf16.msra.mxu0 0
      %1551 = vmatprep.subr.bf16.mxu0 0
      %1552 = vmatpush2.bf16.msra.mxu0 0
      %1553 = vmatprep.subr.bf16.mxu0 0
      %1554 = vmatpush2.bf16.msra.mxu0 0
      %1555 = vmatprep.subr.bf16.mxu0 0
      %1556 = vmatpush2.bf16.msra.mxu0 0
      %1557 = vmatprep.mubr.bf16.mxu0 0
      %1558 = vmatmul.mubr.bf16.gmra.mxu0 %v1511
      %v1559 = vpop.f32.mrf.mxu0
      %v1560 = vadd.f32 0.0, %v1559
      %v1561 = vpop.f32.mrf.mxu0
      %v1562 = vpop.f32.mrf.mxu0
      %v1563 = vadd.f32 0.0, %v1562
      %v1564 = vpop.f32.mrf.mxu0
      %1565 = vmatprep.mubr.bf16.mxu0 0
      %1566 = vmatmul.mubr.bf16.gmra.mxu0 %v1514
      %v1567 = vpop.f32.mrf.mxu0
      %v1568 = vadd.f32 0.0, %v1567
      %v1569 = vpop.f32.mrf.mxu0
      %v1570 = vpop.f32.mrf.mxu0
      %v1571 = vadd.f32 0.0, %v1570
      %v1572 = vpop.f32.mrf.mxu0
      %1573 = vmatprep.mubr.bf16.mxu0 0
      %1574 = vmatmul.mubr.bf16.gmra.mxu0 %v1517
      %v1575 = vpop.f32.mrf.mxu0
      %v1576 = vadd.f32 0.0, %v1575
      %v1577 = vpop.f32.mrf.mxu0
      %v1578 = vpop.f32.mrf.mxu0
      %v1579 = vadd.f32 0.0, %v1578
      %v1580 = vpop.f32.mrf.mxu0
      %1581 = vmatprep.mubr.bf16.mxu0 0
      %1582 = vmatmul.mubr.bf16.gmra.mxu0 %v1520
      %v1583 = vpop.f32.mrf.mxu0
      %v1584 = vadd.f32 0.0, %v1583
      %v1585 = vpop.f32.mrf.mxu0
      %v1586 = vpop.f32.mrf.mxu0
      %v1587 = vadd.f32 0.0, %v1586
      %v1588 = vpop.f32.mrf.mxu0
      %1589 = vdwg.mxu0
      %v1590 = vadd.f32 %v1481, %v1560
      %v1591 = vadd.f32 %v1482, %v1563
      %v1592 = vadd.f32 %v1483, %v1568
      %v1593 = vadd.f32 %v1484, %v1571
      %v1594 = vadd.f32 %v1485, %v1576
      %v1595 = vadd.f32 %v1486, %v1579
      %v1596 = vadd.f32 %v1487, %v1584
      %v1597 = vadd.f32 %v1488, %v1587
      %v1598 = vpack.c.bf16 %v1590, %v1590
      %v1599 = vpack.c.bf16 %v1591, %v1591
      %v1600 = vpack.c.bf16 %v1592, %v1592
      %v1601 = vpack.c.bf16 %v1593, %v1593
      %v1602 = vpack.c.bf16 %v1594, %v1594
      %v1603 = vpack.c.bf16 %v1595, %v1595
      %v1604 = vpack.c.bf16 %v1596, %v1596
      %v1605 = vpack.c.bf16 %v1597, %v1597
      %1606 = vst [vmem:[%s379] sm:$0xf] %v1598
      %1607 = vst [vmem:[%s379 + $0x4] sm:$0xf] %v1599
      %1608 = vst [vmem:[%s379 + $0x8] sm:$0xf] %v1600
      %1609 = vst [vmem:[%s379 + $0xc] sm:$0xf] %v1601
      %1610 = vst [vmem:[%s379 + $0x10] sm:$0xf] %v1602
      %1611 = vst [vmem:[%s379 + $0x14] sm:$0xf] %v1603
      %1612 = vst [vmem:[%s379 + $0x18] sm:$0xf] %v1604
      %1613 = vst [vmem:[%s379 + $0x1c] sm:$0xf] %v1605
      %v1614 = vadd.f32 %v1590, %v1591
      %v1615 = vadd.f32 %v1614, %v1592
      %v1616 = vadd.f32 %v1615, %v1593
      %v1617 = vadd.f32 %v1616, %v1594
      %v1618 = vadd.f32 %v1617, %v1595
      %v1619 = vadd.f32 %v1618, %v1596
      %v1620 = vadd.f32 %v1619, %v1597
      %v1621 = vrot.slane %v1620, 4
      %v1622 = vadd.f32 %v1620, %v1621
      %v1623 = vrot.slane %v1622, 2
      %v1624 = vadd.f32 %v1622, %v1623
      %v1625 = vrot.slane %v1624, 1
      %v1626 = vadd.f32 %v1624, %v1625
      %v1627 = vmul.f32 %v1590, %v1590
      %v1628 = vmul.f32 %v1591, %v1591
      %v1629 = vmul.f32 %v1592, %v1592
      %v1630 = vmul.f32 %v1593, %v1593
      %v1631 = vmul.f32 %v1594, %v1594
      %v1632 = vmul.f32 %v1595, %v1595
      %v1633 = vmul.f32 %v1596, %v1596
      %v1634 = vmul.f32 %v1597, %v1597
      %v1635 = vadd.f32 %v1627, %v1628
      %v1636 = vadd.f32 %v1635, %v1629
      %v1637 = vadd.f32 %v1636, %v1630
      %v1638 = vadd.f32 %v1637, %v1631
      %v1639 = vadd.f32 %v1638, %v1632
      %v1640 = vadd.f32 %v1639, %v1633
      %v1641 = vadd.f32 %v1640, %v1634
      %v1642 = vrot.slane %v1641, 4
      %v1643 = vadd.f32 %v1641, %v1642
      %v1644 = vrot.slane %v1643, 2
      %v1645 = vadd.f32 %v1643, %v1644
      %v1646 = vrot.slane %v1645, 1
      %v1647 = vadd.f32 %v1645, %v1646
      %v1648 = vld [vmem:[%s5] sm:$0x3]
      %v1650 = vsel %vm477, %v1648, 0
      %1652 = vmatprep.subr.bf16.mxu0 0
      %1653 = vmatpush1.bf16.msra.mxu0 0
      %1654 = vmatprep.subr.bf16.mxu0 0
      %1655 = vmatpush1.bf16.msra.mxu0 0
      %1656 = vmatprep.subr.bf16.mxu0 0
      %1657 = vmatpush1.bf16.msra.mxu0 0
      %1658 = vmatprep.subr.bf16.mxu0 0
      %1659 = vmatpush1.bf16.msra.mxu0 0
      %1660 = vmatprep.subr.bf16.mxu0 0
      %1661 = vmatpush1.bf16.msra.mxu0 0
      %1662 = vmatprep.subr.bf16.mxu0 0
      %1663 = vmatpush1.bf16.msra.mxu0 0
      %1664 = vmatprep.subr.bf16.mxu0 0
      %1665 = vmatpush1.bf16.msra.mxu0 0
      %1666 = vmatprep.subr.bf16.mxu0 0
      %1667 = vmatpush1.bf16.msra.mxu0 %v1650
      %1668 = vmatprep.subr.bf16.mxu0 0
      %1669 = vmatpush2.bf16.msra.mxu0 0
      %1670 = vmatprep.subr.bf16.mxu0 0
      %1671 = vmatpush2.bf16.msra.mxu0 0
      %1672 = vmatprep.subr.bf16.mxu0 0
      %1673 = vmatpush2.bf16.msra.mxu0 0
      %1674 = vmatprep.subr.bf16.mxu0 0
      %1675 = vmatpush2.bf16.msra.mxu0 0
      %1676 = vmatprep.subr.bf16.mxu0 0
      %1677 = vmatpush2.bf16.msra.mxu0 0
      %1678 = vmatprep.subr.bf16.mxu0 0
      %1679 = vmatpush2.bf16.msra.mxu0 0
      %1680 = vmatprep.subr.bf16.mxu0 0
      %1681 = vmatpush2.bf16.msra.mxu0 0
      %1682 = vmatprep.subr.bf16.mxu0 0
      %1683 = vmatpush2.bf16.msra.mxu0 0
      %1684 = vmatprep.mubr.bf16.mxu0 0
      %1685 = vmatmul.mubr.bf16.gmra.mxu0 %v996
      %v1686 = vpop.f32.mrf.mxu0
      %v1687 = vadd.f32 0.0, %v1686
      %v1688 = vpop.f32.mrf.mxu0
      %v1689 = vpop.f32.mrf.mxu0
      %v1690 = vadd.f32 0.0, %v1689
      %v1691 = vpop.f32.mrf.mxu0
      %1692 = vmatprep.mubr.bf16.mxu0 0
      %1693 = vmatmul.mubr.bf16.gmra.mxu0 %v999
      %v1694 = vpop.f32.mrf.mxu0
      %v1695 = vadd.f32 0.0, %v1694
      %v1696 = vpop.f32.mrf.mxu0
      %v1697 = vpop.f32.mrf.mxu0
      %v1698 = vadd.f32 0.0, %v1697
      %v1699 = vpop.f32.mrf.mxu0
      %1700 = vmatprep.mubr.bf16.mxu0 0
      %1701 = vmatmul.mubr.bf16.gmra.mxu0 %v1002
      %v1702 = vpop.f32.mrf.mxu0
      %v1703 = vadd.f32 0.0, %v1702
      %v1704 = vpop.f32.mrf.mxu0
      %v1705 = vpop.f32.mrf.mxu0
      %v1706 = vadd.f32 0.0, %v1705
      %v1707 = vpop.f32.mrf.mxu0
      %1708 = vmatprep.mubr.bf16.mxu0 0
      %1709 = vmatmul.mubr.bf16.gmra.mxu0 %v1005
      %v1710 = vpop.f32.mrf.mxu0
      %v1711 = vadd.f32 0.0, %v1710
      %v1712 = vpop.f32.mrf.mxu0
      %v1713 = vpop.f32.mrf.mxu0
      %v1714 = vadd.f32 0.0, %v1713
      %v1715 = vpop.f32.mrf.mxu0
      %1716 = vdwg.mxu0
      %v1717 = vpack.c.bf16 %v1687, %v1687
      %v1718 = vpack.c.bf16 %v1690, %v1690
      %v1719 = vpack.c.bf16 %v1695, %v1695
      %v1720 = vpack.c.bf16 %v1698, %v1698
      %v1721 = vpack.c.bf16 %v1703, %v1703
      %v1722 = vpack.c.bf16 %v1706, %v1706
      %v1723 = vpack.c.bf16 %v1711, %v1711
      %v1724 = vpack.c.bf16 %v1714, %v1714
      %1725 = vst [vmem:[%s388] sm:$0xf] %v1717
      %1726 = vst [vmem:[%s388 + $0x4] sm:$0xf] %v1718
      %1727 = vst [vmem:[%s388 + $0x8] sm:$0xf] %v1719
      %1728 = vst [vmem:[%s388 + $0xc] sm:$0xf] %v1720
      %1729 = vst [vmem:[%s388 + $0x10] sm:$0xf] %v1721
      %1730 = vst [vmem:[%s388 + $0x14] sm:$0xf] %v1722
      %1731 = vst [vmem:[%s388 + $0x18] sm:$0xf] %v1723
      %1732 = vst [vmem:[%s388 + $0x1c] sm:$0xf] %v1724
      %v1733 = vadd.f32 %v1687, %v1690
      %v1734 = vadd.f32 %v1733, %v1695
      %v1735 = vadd.f32 %v1734, %v1698
      %v1736 = vadd.f32 %v1735, %v1703
      %v1737 = vadd.f32 %v1736, %v1706
      %v1738 = vadd.f32 %v1737, %v1711
      %v1739 = vadd.f32 %v1738, %v1714
      %v1740 = vrot.slane %v1739, 4
      %v1741 = vadd.f32 %v1739, %v1740
      %v1742 = vrot.slane %v1741, 2
      %v1743 = vadd.f32 %v1741, %v1742
      %v1744 = vrot.slane %v1743, 1
      %v1745 = vadd.f32 %v1743, %v1744
      %v1746 = vmul.f32 %v1687, %v1687
      %v1747 = vmul.f32 %v1690, %v1690
      %v1748 = vmul.f32 %v1695, %v1695
      %v1749 = vmul.f32 %v1698, %v1698
      %v1750 = vmul.f32 %v1703, %v1703
      %v1751 = vmul.f32 %v1706, %v1706
      %v1752 = vmul.f32 %v1711, %v1711
      %v1753 = vmul.f32 %v1714, %v1714
      %v1754 = vadd.f32 %v1746, %v1747
      %v1755 = vadd.f32 %v1754, %v1748
      %v1756 = vadd.f32 %v1755, %v1749
      %v1757 = vadd.f32 %v1756, %v1750
      %v1758 = vadd.f32 %v1757, %v1751
      %v1759 = vadd.f32 %v1758, %v1752
      %v1760 = vadd.f32 %v1759, %v1753
      %v1761 = vrot.slane %v1760, 4
      %v1762 = vadd.f32 %v1760, %v1761
      %v1763 = vrot.slane %v1762, 2
      %v1764 = vadd.f32 %v1762, %v1763
      %v1765 = vrot.slane %v1764, 1
      %v1766 = vadd.f32 %v1764, %v1765
      %vm1767 = vcmask 1040384
      %v1768 = vsel %vm1767, %v1626, %v1647
      %v1769 = vsel %vm477, %v1768, %v1745
      %vm1770 = vcmask 1042432
      %v1771 = vsel %vm1770, %v1769, %v1766
      %1772 = vst [vmem:[%s383] sm:$0xf] %v1771
      %p1773 = scmp.lt.s32.totalorder %s20, 1
      %s1774 = scalar_select %p1773, %s20, 1
      %s1775 = smul.addr %s1774, 8
      %s1776 = smul.addr %s1775, 4
      %s1777 = scalar_lea.vmem %s6, %s1776
      %p1778 = scmp.lt.s32.totalorder %s20, 1
      %s1779 = scalar_select %p1778, %s20, 1
      %s1780 = smul.addr %s1779, 4
      %s1781 = scalar_lea.vmem %s7, %s1780
      %p1782 = scmp.lt.s32.totalorder %s20, 1
      %s1783 = scalar_select %p1782, %s20, 1
      %s1784 = smul.addr %s1783, 8
      %s1785 = smul.addr %s1784, 4
      %s1786 = scalar_lea.vmem %s8, %s1785
      // Predicated region
      $region45: #{slimmable_basic_block.3} parent=43 // pred_check
        %p1787 = pneg %p184
      $region46: #{slimmable_basic_block.3} parent=43 // pred_check_branch
        %1789 = sbr.rel (%p1787) target = $region48
      $region47: #{slimmable_basic_block.3} parent=43 // pred_region
        _
      $region48: #{slimmable_basic_block.3} parent=43 // pred_fallthru
        _
      // Predicated region
      $region49: #{slimmable_basic_block.3} parent=43 // pred_check
        %p1790 = pneg %p210
      $region50: #{slimmable_basic_block.3} parent=43 // pred_check_branch
        %1792 = sbr.rel (%p1790) target = $region52
      $region51: #{slimmable_basic_block.3} parent=43 // pred_region
        _
      $region52: #{slimmable_basic_block.3} parent=43 // pred_fallthru
        _
      // Predicated region
      $region53: #{slimmable_basic_block.3} parent=43 // pred_check
        %p1793 = pneg %p236
      $region54: #{slimmable_basic_block.3} parent=43 // pred_check_branch
        %1795 = sbr.rel (%p1793) target = $region56
      $region55: #{slimmable_basic_block.3} parent=43 // pred_region
        _
      $region56: #{slimmable_basic_block.3} parent=43 // pred_fallthru
        _
    $region44: #{slimmable_basic_block.3} parent=5 // pred_fallthru
      _
    %p1796 = scmp.le.s32.totalorder 2, %s15
    // Predicated region
    $region57: #{slimmable_basic_block.3} parent=5 // pred_check
      %p1797 = pneg %p1796
    $region58: #{slimmable_basic_block.3} parent=5 // pred_check_branch
      %1799 = sbr.rel (%p1797) target = $region60
    $region59: #{slimmable_basic_block.3} parent=5 // pred_region
      %s1800 = ssub.s32 %s15, 2
      // Predicated region
      $region61: #{slimmable_basic_block.3} parent=59 // pred_check
        %p1801 = pneg %p190
      $region62: #{slimmable_basic_block.3} parent=59 // pred_check_branch
        %1803 = sbr.rel (%p1801) target = $region64
      $region63: #{slimmable_basic_block.3} parent=59 // pred_region
        %p1804 = scmp.lt.s32.totalorder %s21, 1
        %s1805 = scalar_select %p1804, %s21, 1
        %s1806 = smul.addr %s1805, 8
        %s1807 = smul.addr %s1806, 4
        %s1808 = scalar_lea.vmem %s6, %s1807
      $region64: #{slimmable_basic_block.3} parent=59 // pred_fallthru
        _
      // Predicated region
      $region65: #{slimmable_basic_block.3} parent=59 // pred_check
        %p1809 = pneg %p216
      $region66: #{slimmable_basic_block.3} parent=59 // pred_check_branch
        %1811 = sbr.rel (%p1809) target = $region68
      $region67: #{slimmable_basic_block.3} parent=59 // pred_region
        %p1812 = scmp.lt.s32.totalorder %s21, 1
        %s1813 = scalar_select %p1812, %s21, 1
        %s1814 = smul.addr %s1813, 4
        %s1815 = scalar_lea.vmem %s7, %s1814
      $region68: #{slimmable_basic_block.3} parent=59 // pred_fallthru
        _
      // Predicated region
      $region69: #{slimmable_basic_block.3} parent=59 // pred_check
        %p1816 = pneg %p242
      $region70: #{slimmable_basic_block.3} parent=59 // pred_check_branch
        %1818 = sbr.rel (%p1816) target = $region72
      $region71: #{slimmable_basic_block.3} parent=59 // pred_region
        %p1819 = scmp.lt.s32.totalorder %s21, 1
        %s1820 = scalar_select %p1819, %s21, 1
        %s1821 = smul.addr %s1820, 8
        %s1822 = smul.addr %s1821, 4
        %s1823 = scalar_lea.vmem %s8, %s1822
      $region72: #{slimmable_basic_block.3} parent=59 // pred_fallthru
        _
    $region60: #{slimmable_basic_block.3} parent=5 // pred_fallthru
      _
  $region6: #{slimmable_basic_block.3} parent=0 // loop_footer
    %s19 = sadd.s32 1, %s15
  $region7: #{slimmable_basic_block.3} parent=0 // loop_footer_branch
    %14 = sbr.rel target = $region3
  $region8: #{slimmable_basic_block.3} parent=0 // loop_exit
    _

// kernel: slimmable_basic_block.4
$region0: #{slimmable_basic_block.4}
  #allocation0 [shape = 'u32[]', space=smem, size = 0x4, offset = 0x4, fixed_abs, tag = 'smem constant byte address 0x4 - core index']
  #allocation1 [shape = 'u32[144,128]{1,0:T(1,128)}', space=vmem, size = 0x12000, scoped, tag = 'internal scratch']
  %s0 = inlined_call_operand.vmem [shape: bf16[2,8,8,128], index: 0, kind: input, shape index: {}]
  %s1 = inlined_call_operand.vmem [shape: f32[1,128], index: 1, kind: input, shape index: {}]
  %s2 = inlined_call_operand.vmem [shape: f32[1,128], index: 2, kind: input, shape index: {}]
  %s3 = inlined_call_operand.vmem [shape: bf16[3,384,128], index: 3, kind: input, shape index: {}]
  %s4 = inlined_call_operand.vmem [shape: bf16[2,8,8,128], index: 4, kind: output, shape index: {0}]
  %s5 = inlined_call_operand.vmem [shape: f32[2,2,128], index: 5, kind: output, shape index: {1}]
  %6 = xla_tuple %s4, %s5
  %s7 = sld [smem:[#allocation0]]
  $region57: #{slimmable_basic_block.4} parent=0
    _
  %s9 = ssub.s32 1, %s7
  %s10 = scalar_select 0, %s9, %s7
  loop: start=0, step=1, limit=4
  $region2: #{slimmable_basic_block.4} parent=0 // loop_pre_header
    _
  $region3: #{slimmable_basic_block.4} parent=0 // loop_header
    %s12 = sphi 0, %s16
    %p13 = scmp.ge.s32.totalorder %s12, 4
    %s22 = sphi 0, %s24
    %s25 = sphi 0, %s22
    %s26 = sphi 0, %s25
    %s42 = sphi 0, %s26
    %s46 = sphi 0, %s46
    %s48 = sphi 0, %s46
    %s49 = sphi 0, %s48
    %s63 = sphi 0, %s49
    %s67 = sphi 0, %s67
    %s69 = sphi 0, %s67
    %s70 = sphi 0, %s69
    %s84 = sphi 0, %s70
    %s88 = sphi 0, %s88
    %s90 = sphi 0, %s88
    %s91 = sphi 0, %s90
    %s105 = sphi 0, %s91
    %s111 = sphi 0, %s113
    %s114 = sphi 0, %s111
    %s115 = sphi 0, %s114
    %s131 = sphi 0, %s115
    %s137 = sphi 0, %s139
    %s140 = sphi 0, %s137
    %s141 = sphi 0, %s140
    %s157 = sphi 0, %s141
  $region4: #{slimmable_basic_block.4} parent=0 // loop_header_branch
    %15 = sbr.rel (%p13) target = $region8
  $region5: #{slimmable_basic_block.4} parent=0 // loop_body
    %s17 = ssub.s32 %s12, 1
    %s18 = ssub.s32 %s12, 2
    %s19 = sadd.s32 %s12, 1
    %s20 = ssub.s32 %s12, %s19
    %p21 = scmp.eq.s32.totalorder %s20, 0
    %s23 = sadd.s32 %s22, 1
    %s24 = scalar_select %p21, %s22, %s23
    %p27 = pneg %p21
    %p28 = scmp.eq.s32.totalorder %s12, 1
    %p29 = por %p27, %p28
    %p30 = scmp.ne.s32.totalorder %s22, %s25
    %p31 = scmp.eq.s32.totalorder %s12, 0
    %p32 = por %p30, %p31
    %p33 = scmp.ne.s32.totalorder %s22, %s25
    %p34 = scmp.eq.s32.totalorder %s17, 1
    %p35 = por %p33, %p34
    %p36 = scmp.ne.s32.totalorder %s25, %s26
    %p37 = scmp.eq.s32.totalorder %s17, 0
    %p38 = por %p36, %p37
    %p39 = scmp.ne.s32.totalorder %s25, %s26
    %p40 = scmp.eq.s32.totalorder %s18, 1
    %p41 = por %p39, %p40
    %p43 = scmp.ne.s32.totalorder %s26, %s42
    %p44 = scmp.eq.s32.totalorder %s18, 0
    %p45 = por %p43, %p44
    %s47 = sadd.s32 %s46, 1
    %p50 = scmp.eq.s32.totalorder %s12, 1
    %p51 = scmp.ne.s32.totalorder %s46, %s48
    %p52 = scmp.eq.s32.totalorder %s12, 0
    %p53 = por %p51, %p52
    %p54 = scmp.ne.s32.totalorder %s46, %s48
    %p55 = scmp.eq.s32.totalorder %s17, 1
    %p56 = por %p54, %p55
    %p57 = scmp.ne.s32.totalorder %s48, %s49
    %p58 = scmp.eq.s32.totalorder %s17, 0
    %p59 = por %p57, %p58
    %p60 = scmp.ne.s32.totalorder %s48, %s49
    %p61 = scmp.eq.s32.totalorder %s18, 1
    %p62 = por %p60, %p61
    %p64 = scmp.ne.s32.totalorder %s49, %s63
    %p65 = scmp.eq.s32.totalorder %s18, 0
    %p66 = por %p64, %p65
    %s68 = sadd.s32 %s67, 1
    %p71 = scmp.eq.s32.totalorder %s12, 1
    %p72 = scmp.ne.s32.totalorder %s67, %s69
    %p73 = scmp.eq.s32.totalorder %s12, 0
    %p74 = por %p72, %p73
    %p75 = scmp.ne.s32.totalorder %s67, %s69
    %p76 = scmp.eq.s32.totalorder %s17, 1
    %p77 = por %p75, %p76
    %p78 = scmp.ne.s32.totalorder %s69, %s70
    %p79 = scmp.eq.s32.totalorder %s17, 0
    %p80 = por %p78, %p79
    %p81 = scmp.ne.s32.totalorder %s69, %s70
    %p82 = scmp.eq.s32.totalorder %s18, 1
    %p83 = por %p81, %p82
    %p85 = scmp.ne.s32.totalorder %s70, %s84
    %p86 = scmp.eq.s32.totalorder %s18, 0
    %p87 = por %p85, %p86
    %s89 = sadd.s32 %s88, 1
    %p92 = scmp.eq.s32.totalorder %s12, 1
    %p93 = scmp.ne.s32.totalorder %s88, %s90
    %p94 = scmp.eq.s32.totalorder %s12, 0
    %p95 = por %p93, %p94
    %p96 = scmp.ne.s32.totalorder %s88, %s90
    %p97 = scmp.eq.s32.totalorder %s17, 1
    %p98 = por %p96, %p97
    %p99 = scmp.ne.s32.totalorder %s90, %s91
    %p100 = scmp.eq.s32.totalorder %s17, 0
    %p101 = por %p99, %p100
    %p102 = scmp.ne.s32.totalorder %s90, %s91
    %p103 = scmp.eq.s32.totalorder %s18, 1
    %p104 = por %p102, %p103
    %p106 = scmp.ne.s32.totalorder %s91, %s105
    %p107 = scmp.eq.s32.totalorder %s18, 0
    %p108 = por %p106, %p107
    %s109 = ssub.s32 %s12, %s19
    %p110 = scmp.eq.s32.totalorder %s109, 0
    %s112 = sadd.s32 %s111, 1
    %s113 = scalar_select %p110, %s111, %s112
    %p116 = pneg %p110
    %p117 = scmp.eq.s32.totalorder %s12, 1
    %p118 = por %p116, %p117
    %p119 = scmp.ne.s32.totalorder %s111, %s114
    %p120 = scmp.eq.s32.totalorder %s12, 0
    %p121 = por %p119, %p120
    %p122 = scmp.ne.s32.totalorder %s111, %s114
    %p123 = scmp.eq.s32.totalorder %s17, 1
    %p124 = por %p122, %p123
    %p125 = scmp.ne.s32.totalorder %s114, %s115
    %p126 = scmp.eq.s32.totalorder %s17, 0
    %p127 = por %p125, %p126
    %p128 = scmp.ne.s32.totalorder %s114, %s115
    %p129 = scmp.eq.s32.totalorder %s18, 1
    %p130 = por %p128, %p129
    %p132 = scmp.ne.s32.totalorder %s115, %s131
    %p133 = scmp.eq.s32.totalorder %s18, 0
    %p134 = por %p132, %p133
    %s135 = ssub.s32 %s12, %s19
    %p136 = scmp.eq.s32.totalorder %s135, 0
    %s138 = sadd.s32 %s137, 1
    %s139 = scalar_select %p136, %s137, %s138
    %p142 = pneg %p136
    %p143 = scmp.eq.s32.totalorder %s12, 1
    %p144 = por %p142, %p143
    %p145 = scmp.ne.s32.totalorder %s137, %s140
    %p146 = scmp.eq.s32.totalorder %s12, 0
    %p147 = por %p145, %p146
    %p148 = scmp.ne.s32.totalorder %s137, %s140
    %p149 = scmp.eq.s32.totalorder %s17, 1
    %p150 = por %p148, %p149
    %p151 = scmp.ne.s32.totalorder %s140, %s141
    %p152 = scmp.eq.s32.totalorder %s17, 0
    %p153 = por %p151, %p152
    %p154 = scmp.ne.s32.totalorder %s140, %s141
    %p155 = scmp.eq.s32.totalorder %s18, 1
    %p156 = por %p154, %p155
    %p158 = scmp.ne.s32.totalorder %s141, %s157
    %p159 = scmp.eq.s32.totalorder %s18, 0
    %p160 = por %p158, %p159
    %p161 = scmp.le.s32.totalorder 1, %s12
    %p162 = scmp.lt.s32.totalorder %s12, 3
    %p163 = pnand %p161, %p162
    %p164 = pneg %p163
    // Predicated region
    $region9: #{slimmable_basic_block.4} parent=5 // pred_check
      _
    $region10: #{slimmable_basic_block.4} parent=5 // pred_check_branch
      %166 = sbr.rel (%p163) target = $region12
    $region11: #{slimmable_basic_block.4} parent=5 // pred_region
      %s167 = ssub.s32 %s12, 1
      // Predicated region
      $region13: #{slimmable_basic_block.4} parent=11 // pred_check
        %p168 = pneg %p59
      $region14: #{slimmable_basic_block.4} parent=11 // pred_check_branch
        %170 = sbr.rel (%p168) target = $region16
      $region15: #{slimmable_basic_block.4} parent=11 // pred_region
        _
      $region16: #{slimmable_basic_block.4} parent=11 // pred_fallthru
        _
      // Predicated region
      $region17: #{slimmable_basic_block.4} parent=11 // pred_check
        %p171 = pneg %p80
      $region18: #{slimmable_basic_block.4} parent=11 // pred_check_branch
        %173 = sbr.rel (%p171) target = $region20
      $region19: #{slimmable_basic_block.4} parent=11 // pred_region
        _
      $region20: #{slimmable_basic_block.4} parent=11 // pred_fallthru
        _
      // Predicated region
      $region21: #{slimmable_basic_block.4} parent=11 // pred_check
        %p174 = pneg %p101
      $region22: #{slimmable_basic_block.4} parent=11 // pred_check_branch
        %176 = sbr.rel (%p174) target = $region24
      $region23: #{slimmable_basic_block.4} parent=11 // pred_region
        _
      $region24: #{slimmable_basic_block.4} parent=11 // pred_fallthru
        _
    $region12: #{slimmable_basic_block.4} parent=5 // pred_fallthru
      _
    %p177 = scmp.lt.s32.totalorder %s12, 2
    // Predicated region
    $region25: #{slimmable_basic_block.4} parent=5 // pred_check
      %p178 = pneg %p177
    $region26: #{slimmable_basic_block.4} parent=5 // pred_check_branch
      %180 = sbr.rel (%p178) target = $region28
    $region27: #{slimmable_basic_block.4} parent=5 // pred_region
      // Predicated region
      $region29: #{slimmable_basic_block.4} parent=27 // pred_check
        %p181 = pneg %p32
      $region30: #{slimmable_basic_block.4} parent=27 // pred_check_branch
        %183 = sbr.rel (%p181) target = $region32
      $region31: #{slimmable_basic_block.4} parent=27 // pred_region
        %p184 = scmp.lt.s32.totalorder %s12, 1
        %s185 = scalar_select %p184, %s12, 1
        %s186 = smul.addr %s185, 8
        %s187 = smul.addr %s186, 4
        %s188 = scalar_lea.vmem %s0, %s187
      $region32: #{slimmable_basic_block.4} parent=27 // pred_fallthru
        _
    $region28: #{slimmable_basic_block.4} parent=5 // pred_fallthru
      _
    %p189 = scmp.le.s32.totalorder 1, %s12
    %p190 = scmp.lt.s32.totalorder %s12, 3
    %p191 = pnand %p189, %p190
    %p192 = pneg %p191
    // Predicated region
    $region33: #{slimmable_basic_block.4} parent=5 // pred_check
      _
    $region34: #{slimmable_basic_block.4} parent=5 // pred_check_branch
      %194 = sbr.rel (%p191) target = $region36
    $region35: #{slimmable_basic_block.4} parent=5 // pred_region
      %s195 = ssub.s32 %s12, 1
      %p196 = scmp.lt.s32.totalorder %s17, 1
      %s197 = scalar_select %p196, %s17, 1
      %s198 = smul.addr %s197, 8
      %s199 = smul.addr %s198, 4
      %s200 = scalar_lea.vmem %s0, %s199
      %p201 = pneg %p38
      %p202 = pneg %p35
      %p203 = pneg %p59
      %p204 = pneg %p56
      %p205 = pneg %p80
      %p206 = pneg %p77
      %p207 = pneg %p101
      %p208 = pneg %p98
      %p209 = pneg %p127
      %p210 = pneg %p124
      %p211 = scmp.lt.s32.totalorder %s17, 1
      %s212 = scalar_select %p211, %s17, 1
      %s213 = smul.addr %s212, 8
      %s214 = smul.addr %s213, 4
      %s215 = scalar_lea.vmem %s4, %s214
      %p216 = pneg %p153
      %p217 = pneg %p150
      %p218 = scmp.lt.s32.totalorder %s17, 1
      %s219 = scalar_select %p218, %s17, 1
      %s220 = smul.addr %s219, 2
      %s221 = scalar_lea.vmem %s5, %s220
      %p222 = scmp.lt.s32.totalorder %s17, 1
      %s223 = scalar_select %p222, %s17, 1
      %s224 = smul.addr %s223, 8
      %s225 = smul.addr %s224, 4
      %s226 = scalar_lea.vmem %s0, %s225
      %p227 = scmp.lt.s32.totalorder %s17, 1
      %s228 = scalar_select %p227, %s17, 1
      %s229 = smul.addr %s228, 8
      %s230 = smul.addr %s229, 4
      %s231 = scalar_lea.vmem %s4, %s230
      %p232 = scmp.lt.s32.totalorder %s17, 1
      %s233 = scalar_select %p232, %s17, 1
      %s234 = smul.addr %s233, 2
      %s235 = scalar_lea.vmem %s5, %s234
      %v237 = vld [vmem:[%s226] sm:$0xf]
      %v238 = vld [vmem:[%s226 + $0x4] sm:$0xf]
      %v239 = vld [vmem:[%s226 + $0x8] sm:$0xf]
      %v240 = vld [vmem:[%s226 + $0xc] sm:$0xf]
      %v241 = vld [vmem:[%s226 + $0x10] sm:$0xf]
      %v242 = vld [vmem:[%s226 + $0x14] sm:$0xf]
      %v243 = vld [vmem:[%s226 + $0x18] sm:$0xf]
      %v244 = vld [vmem:[%s226 + $0x1c] sm:$0xf]
      %v245 = vunpack.c.l.bf16 %v237
      %v246 = vunpack.c.l.bf16 %v238
      %v247 = vunpack.c.l.bf16 %v239
      %v248 = vunpack.c.l.bf16 %v240
      %v249 = vunpack.c.l.bf16 %v241
      %v250 = vunpack.c.l.bf16 %v242
      %v251 = vunpack.c.l.bf16 %v243
      %v252 = vunpack.c.l.bf16 %v244
      %v253 = vld [vmem:[%s1] sm:$0x1]
      %v255 = vlaneseq
      %v256 = vshrl.u32 %v255, 7
      %v257 = vsub.s32 0, %v256
      %v258 = vrot.slane %v253, %v257
      %v260 = vmul.f32 %v245, %v258
      %v261 = vmul.f32 %v246, %v258
      %v262 = vmul.f32 %v247, %v258
      %v263 = vmul.f32 %v248, %v258
      %v264 = vmul.f32 %v249, %v258
      %v265 = vmul.f32 %v250, %v258
      %v266 = vmul.f32 %v251, %v258
      %v267 = vmul.f32 %v252, %v258
      %v268 = vld [vmem:[%s2] sm:$0x1]
      %v270 = vlaneseq
      %v271 = vshrl.u32 %v270, 7
      %v272 = vsub.s32 0, %v271
      %v273 = vrot.slane %v268, %v272
      %v275 = vadd.f32 %v260, %v273
      %v276 = vadd.f32 %v261, %v273
      %v277 = vadd.f32 %v262, %v273
      %v278 = vadd.f32 %v263, %v273
      %v279 = vadd.f32 %v264, %v273
      %v280 = vadd.f32 %v265, %v273
      %v281 = vadd.f32 %v266, %v273
      %v282 = vadd.f32 %v267, %v273
      %v283 = vmax.f32 %v275, 0.0
      %v284 = vmax.f32 %v276, 0.0
      %v285 = vmax.f32 %v277, 0.0
      %v286 = vmax.f32 %v278, 0.0
      %v287 = vmax.f32 %v279, 0.0
      %v288 = vmax.f32 %v280, 0.0
      %v289 = vmax.f32 %v281, 0.0
      %v290 = vmax.f32 %v282, 0.0
      %v291 = vpack.c.bf16 %v283, %v283
      %v292 = vpack.c.bf16 %v284, %v284
      %v293 = vpack.c.bf16 %v285, %v285
      %v294 = vpack.c.bf16 %v286, %v286
      %v295 = vpack.c.bf16 %v287, %v287
      %v296 = vpack.c.bf16 %v288, %v288
      %v297 = vpack.c.bf16 %v289, %v289
      %v298 = vpack.c.bf16 %v290, %v290
      %v300 = vshrl.u32 0, 16
      %v302 = vrot.slane %v300, 7
      %v303 = vshll.u32 0, 16
      %v305 = vor.u32 %v302, %v303
      %v307 = vshrl.u32 %v291, 16
      %v309 = vrot.slane %v307, 7
      %v310 = vshll.u32 %v291, 16
      %v312 = vor.u32 %v309, %v310
      %v314 = vshrl.u32 %v292, 16
      %v316 = vrot.slane %v314, 7
      %v317 = vshll.u32 %v292, 16
      %v319 = vor.u32 %v316, %v317
      %v321 = vshrl.u32 %v293, 16
      %v323 = vrot.slane %v321, 7
      %v324 = vshll.u32 %v293, 16
      %v326 = vor.u32 %v323, %v324
      %v328 = vshrl.u32 %v294, 16
      %v330 = vrot.slane %v328, 7
      %v331 = vshll.u32 %v294, 16
      %v333 = vor.u32 %v330, %v331
      %v335 = vshrl.u32 %v295, 16
      %v337 = vrot.slane %v335, 7
      %v338 = vshll.u32 %v295, 16
      %v340 = vor.u32 %v337, %v338
      %v342 = vshrl.u32 %v296, 16
      %v344 = vrot.slane %v342, 7
      %v345 = vshll.u32 %v296, 16
      %v347 = vor.u32 %v344, %v345
      %v349 = vshrl.u32 %v297, 16
      %v351 = vrot.slane %v349, 7
      %v352 = vshll.u32 %v297, 16
      %v354 = vor.u32 %v351, %v352
      %v356 = vshrl.u32 %v298, 16
      %v358 = vrot.slane %v356, 7
      %v359 = vshll.u32 %v298, 16
      %v361 = vor.u32 %v358, %v359
      %vm371 = vcmask 1040384
      %vm372 = vsmask.f32 256
      %vm373 = vmand %vm371, %vm372
      %v374 = vsel %vm373, 0, %v305
      %v375 = vsel %vm373, 0, %v312
      %v376 = vsel %vm373, 0, %v319
      %v377 = vsel %vm373, 0, %v326
      %v378 = vsel %vm373, 0, %v333
      %v379 = vsel %vm373, 0, %v340
      %v380 = vsel %vm373, 0, %v347
      %v381 = vsel %vm373, 0, %v354
      %v382 = vsel %vm373, 0, %v361
      %vm383 = vcmask 1044480
      %vm384 = vsmask.f32 4352
      %vm385 = vmand %vm383, %vm384
      %v386 = vsel %vm385, %v374, 0
      %v387 = vsel %vm385, %v375, 0
      %v388 = vsel %vm385, %v376, 0
      %v389 = vsel %vm385, %v377, 0
      %v390 = vsel %vm385, %v378, 0
      %v391 = vsel %vm385, %v379, 0
      %v392 = vsel %vm385, %v380, 0
      %v393 = vsel %vm385, %v381, 0
      %v394 = vsel %vm385, %v382, 0
      %v396 = vshrl.u32 %v386, 16
      %v398 = vshll.u32 %v386, 16
      %v400 = vrot.slane %v398, 1
      %v401 = vor.u32 %v396, %v400
      %v403 = vshrl.u32 %v387, 16
      %v405 = vshll.u32 %v387, 16
      %v407 = vrot.slane %v405, 1
      %v408 = vor.u32 %v403, %v407
      %v410 = vshrl.u32 %v388, 16
      %v412 = vshll.u32 %v388, 16
      %v414 = vrot.slane %v412, 1
      %v415 = vor.u32 %v410, %v414
      %v417 = vshrl.u32 %v389, 16
      %v419 = vshll.u32 %v389, 16
      %v421 = vrot.slane %v419, 1
      %v422 = vor.u32 %v417, %v421
      %v424 = vshrl.u32 %v390, 16
      %v426 = vshll.u32 %v390, 16
      %v428 = vrot.slane %v426, 1
      %v429 = vor.u32 %v424, %v428
      %v431 = vshrl.u32 %v391, 16
      %v433 = vshll.u32 %v391, 16
      %v435 = vrot.slane %v433, 1
      %v436 = vor.u32 %v431, %v435
      %v438 = vshrl.u32 %v392, 16
      %v440 = vshll.u32 %v392, 16
      %v442 = vrot.slane %v440, 1
      %v443 = vor.u32 %v438, %v442
      %v445 = vshrl.u32 %v393, 16
      %v447 = vshll.u32 %v393, 16
      %v449 = vrot.slane %v447, 1
      %v450 = vor.u32 %v445, %v449
      %v459 = vrot.slane %v386, 1
      %v460 = vrot.slane %v387, 1
      %v461 = vrot.slane %v388, 1
      %v462 = vrot.slane %v389, 1
      %v463 = vrot.slane %v390, 1
      %v464 = vrot.slane %v391, 1
      %v465 = vrot.slane %v392, 1
      %v466 = vrot.slane %v393, 1
      %v467 = vunpack.c.l.b16 %v386
      %v468 = vunpack.c.l.b16 %v401
      %v469 = vunpack.c.l.b16 %v459
      %v470 = vunpack.c.l.b16 %v387
      %v471 = vunpack.c.l.b16 %v408
      %v472 = vunpack.c.l.b16 %v460
      %v473 = vunpack.c.l.b16 %v388
      %v474 = vunpack.c.l.b16 %v415
      %v475 = vunpack.c.l.b16 %v461
      %v476 = vunpack.c.l.b16 %v389
      %v477 = vunpack.c.l.b16 %v422
      %v478 = vunpack.c.l.b16 %v462
      %v479 = vunpack.c.l.b16 %v390
      %v480 = vunpack.c.l.b16 %v429
      %v481 = vunpack.c.l.b16 %v463
      %v482 = vunpack.c.l.b16 %v391
      %v483 = vunpack.c.l.b16 %v436
      %v484 = vunpack.c.l.b16 %v464
      %v485 = vunpack.c.l.b16 %v392
      %v486 = vunpack.c.l.b16 %v443
      %v487 = vunpack.c.l.b16 %v465
      %v488 = vunpack.c.l.b16 %v393
      %v489 = vunpack.c.l.b16 %v450
      %v490 = vunpack.c.l.b16 %v466
      %v491 = vld [vmem:[%s3] sm:$0xf]
      %v492 = vld [vmem:[%s3 + $0x4] sm:$0xf]
      %v493 = vld [vmem:[%s3 + $0x8] sm:$0xf]
      %v494 = vld [vmem:[%s3 + $0xc] sm:$0xf]
      %v495 = vld [vmem:[%s3 + $0x10] sm:$0xf]
      %v496 = vld [vmem:[%s3 + $0x14] sm:$0xf]
      %v497 = vld [vmem:[%s3 + $0x18] sm:$0xf]
      %v498 = vld [vmem:[%s3 + $0x1c] sm:$0xf]
      %v499 = vld [vmem:[%s3 + $0x20] sm:$0xf]
      %v500 = vld [vmem:[%s3 + $0x24] sm:$0xf]
      %v501 = vld [vmem:[%s3 + $0x28] sm:$0xf]
      %v502 = vld [vmem:[%s3 + $0x2c] sm:$0xf]
      %v503 = vld [vmem:[%s3 + $0x30] sm:$0xf]
      %v504 = vld [vmem:[%s3 + $0x34] sm:$0xf]
      %v505 = vld [vmem:[%s3 + $0x38] sm:$0xf]
      %v506 = vld [vmem:[%s3 + $0x3c] sm:$0xf]
      %v507 = vld [vmem:[%s3 + $0x40] sm:$0xf]
      %v508 = vld [vmem:[%s3 + $0x44] sm:$0xf]
      %v509 = vld [vmem:[%s3 + $0x48] sm:$0xf]
      %v510 = vld [vmem:[%s3 + $0x4c] sm:$0xf]
      %v511 = vld [vmem:[%s3 + $0x50] sm:$0xf]
      %v512 = vld [vmem:[%s3 + $0x54] sm:$0xf]
      %v513 = vld [vmem:[%s3 + $0x58] sm:$0xf]
      %v514 = vld [vmem:[%s3 + $0x5c] sm:$0xf]
      %v515 = vld [vmem:[%s3 + $0x60] sm:$0xf]
      %v516 = vld [vmem:[%s3 + $0x64] sm:$0xf]
      %v517 = vld [vmem:[%s3 + $0x68] sm:$0xf]
      %v518 = vld [vmem:[%s3 + $0x6c] sm:$0xf]
      %v519 = vld [vmem:[%s3 + $0x70] sm:$0xf]
      %v520 = vld [vmem:[%s3 + $0x74] sm:$0xf]
      %v521 = vld [vmem:[%s3 + $0x78] sm:$0xf]
      %v522 = vld [vmem:[%s3 + $0x7c] sm:$0xf]
      %v523 = vld [vmem:[%s3 + $0x80] sm:$0xf]
      %v524 = vld [vmem:[%s3 + $0x84] sm:$0xf]
      %v525 = vld [vmem:[%s3 + $0x88] sm:$0xf]
      %v526 = vld [vmem:[%s3 + $0x8c] sm:$0xf]
      %v527 = vld [vmem:[%s3 + $0x90] sm:$0xf]
      %v528 = vld [vmem:[%s3 + $0x94] sm:$0xf]
      %v529 = vld [vmem:[%s3 + $0x98] sm:$0xf]
      %v530 = vld [vmem:[%s3 + $0x9c] sm:$0xf]
      %v531 = vld [vmem:[%s3 + $0xa0] sm:$0xf]
      %v532 = vld [vmem:[%s3 + $0xa4] sm:$0xf]
      %v533 = vld [vmem:[%s3 + $0xa8] sm:$0xf]
      %v534 = vld [vmem:[%s3 + $0xac] sm:$0xf]
      %v535 = vld [vmem:[%s3 + $0xb0] sm:$0xf]
      %v536 = vld [vmem:[%s3 + $0xb4] sm:$0xf]
      %v537 = vld [vmem:[%s3 + $0xb8] sm:$0xf]
      %v538 = vld [vmem:[%s3 + $0xbc] sm:$0xf]
      %v540 = vshrl.u32 %v394, 16
      %v542 = vshll.u32 %v394, 16
      %v544 = vrot.slane %v542, 1
      %v545 = vor.u32 %v540, %v544
      %v547 = vrot.slane %v394, 1
      %v548 = vunpack.c.l.b16 %v394
      %v549 = vunpack.c.l.b16 %v545
      %v550 = vunpack.c.l.b16 %v547
      %s551 = scalar_lea.vmem %s3, 192
      %v552 = vld [vmem:[%s551] sm:$0xf]
      %v553 = vld [vmem:[%s551 + $0x4] sm:$0xf]
      %v554 = vld [vmem:[%s551 + $0x8] sm:$0xf]
      %v555 = vld [vmem:[%s551 + $0xc] sm:$0xf]
      %v556 = vld [vmem:[%s551 + $0x10] sm:$0xf]
      %v557 = vld [vmem:[%s551 + $0x14] sm:$0xf]
      %v558 = vld [vmem:[%s551 + $0x18] sm:$0xf]
      %v559 = vld [vmem:[%s551 + $0x1c] sm:$0xf]
      %v560 = vld [vmem:[%s551 + $0x20] sm:$0xf]
      %v561 = vld [vmem:[%s551 + $0x24] sm:$0xf]
      %v562 = vld [vmem:[%s551 + $0x28] sm:$0xf]
      %v563 = vld [vmem:[%s551 + $0x2c] sm:$0xf]
      %v564 = vld [vmem:[%s551 + $0x30] sm:$0xf]
      %v565 = vld [vmem:[%s551 + $0x34] sm:$0xf]
      %v566 = vld [vmem:[%s551 + $0x38] sm:$0xf]
      %v567 = vld [vmem:[%s551 + $0x3c] sm:$0xf]
      %v568 = vld [vmem:[%s551 + $0x40] sm:$0xf]
      %v569 = vld [vmem:[%s551 + $0x44] sm:$0xf]
      %v570 = vld [vmem:[%s551 + $0x48] sm:$0xf]
      %v571 = vld [vmem:[%s551 + $0x4c] sm:$0xf]
      %v572 = vld [vmem:[%s551 + $0x50] sm:$0xf]
      %v573 = vld [vmem:[%s551 + $0x54] sm:$0xf]
      %v574 = vld [vmem:[%s551 + $0x58] sm:$0xf]
      %v575 = vld [vmem:[%s551 + $0x5c] sm:$0xf]
      %v576 = vld [vmem:[%s551 + $0x60] sm:$0xf]
      %v577 = vld [vmem:[%s551 + $0x64] sm:$0xf]
      %v578 = vld [vmem:[%s551 + $0x68] sm:$0xf]
      %v579 = vld [vmem:[%s551 + $0x6c] sm:$0xf]
      %v580 = vld [vmem:[%s551 + $0x70] sm:$0xf]
      %v581 = vld [vmem:[%s551 + $0x74] sm:$0xf]
      %v582 = vld [vmem:[%s551 + $0x78] sm:$0xf]
      %v583 = vld [vmem:[%s551 + $0x7c] sm:$0xf]
      %v584 = vld [vmem:[%s551 + $0x80] sm:$0xf]
      %v585 = vld [vmem:[%s551 + $0x84] sm:$0xf]
      %v586 = vld [vmem:[%s551 + $0x88] sm:$0xf]
      %v587 = vld [vmem:[%s551 + $0x8c] sm:$0xf]
      %v588 = vld [vmem:[%s551 + $0x90] sm:$0xf]
      %v589 = vld [vmem:[%s551 + $0x94] sm:$0xf]
      %v590 = vld [vmem:[%s551 + $0x98] sm:$0xf]
      %v591 = vld [vmem:[%s551 + $0x9c] sm:$0xf]
      %v592 = vld [vmem:[%s551 + $0xa0] sm:$0xf]
      %v593 = vld [vmem:[%s551 + $0xa4] sm:$0xf]
      %v594 = vld [vmem:[%s551 + $0xa8] sm:$0xf]
      %v595 = vld [vmem:[%s551 + $0xac] sm:$0xf]
      %v596 = vld [vmem:[%s551 + $0xb0] sm:$0xf]
      %v597 = vld [vmem:[%s551 + $0xb4] sm:$0xf]
      %v598 = vld [vmem:[%s551 + $0xb8] sm:$0xf]
      %v599 = vld [vmem:[%s551 + $0xbc] sm:$0xf]
      %v600 = vpack.c.b16 %v473, %v470
      %v601 = vpack.c.b16 %v474, %v471
      %v602 = vpack.c.b16 %v475, %v472
      %v603 = vpack.c.b16 %v479, %v476
      %v604 = vpack.c.b16 %v480, %v477
      %v605 = vpack.c.b16 %v481, %v478
      %v606 = vpack.c.b16 %v485, %v482
      %v607 = vpack.c.b16 %v486, %v483
      %v608 = vpack.c.b16 %v487, %v484
      %v609 = vpack.c.b16 %v548, %v488
      %v610 = vpack.c.b16 %v549, %v489
      %v611 = vpack.c.b16 %v550, %v490
      %v672 = vunpack.c.l.b16 %v552
      %v673 = vunpack.c.l.b16 %v553
      %v674 = vunpack.c.l.b16 %v554
      %v675 = vunpack.c.l.b16 %v555
      %v676 = vunpack.c.l.b16 %v556
      %v677 = vunpack.c.l.b16 %v557
      %v678 = vunpack.c.l.b16 %v558
      %v679 = vunpack.c.l.b16 %v559
      %v680 = vunpack.c.l.b16 %v560
      %v681 = vunpack.c.l.b16 %v561
      %v682 = vunpack.c.l.b16 %v562
      %v683 = vunpack.c.l.b16 %v563
      %v684 = vunpack.c.l.b16 %v564
      %v685 = vunpack.c.l.b16 %v565
      %v686 = vunpack.c.l.b16 %v566
      %v687 = vunpack.c.l.b16 %v567
      %v688 = vunpack.c.l.b16 %v568
      %v689 = vunpack.c.l.b16 %v569
      %v690 = vunpack.c.l.b16 %v570
      %v691 = vunpack.c.l.b16 %v571
      %v692 = vunpack.c.l.b16 %v572
      %v693 = vunpack.c.l.b16 %v573
      %v694 = vunpack.c.l.b16 %v574
      %v695 = vunpack.c.l.b16 %v575
      %v696 = vunpack.c.l.b16 %v576
      %v697 = vunpack.c.l.b16 %v577
      %v698 = vunpack.c.l.b16 %v578
      %v699 = vunpack.c.l.b16 %v579
      %v700 = vunpack.c.l.b16 %v580
      %v701 = vunpack.c.l.b16 %v581
      %v702 = vunpack.c.l.b16 %v582
      %v703 = vunpack.c.l.b16 %v583
      %v704 = vunpack.c.l.b16 %v584
      %v705 = vunpack.c.l.b16 %v585
      %v706 = vunpack.c.l.b16 %v586
      %v707 = vunpack.c.l.b16 %v587
      %v708 = vunpack.c.l.b16 %v588
      %v709 = vunpack.c.l.b16 %v589
      %v710 = vunpack.c.l.b16 %v590
      %v711 = vunpack.c.l.b16 %v591
      %v712 = vunpack.c.l.b16 %v592
      %v713 = vunpack.c.l.b16 %v593
      %v714 = vunpack.c.l.b16 %v594
      %v715 = vunpack.c.l.b16 %v595
      %v716 = vunpack.c.l.b16 %v596
      %v717 = vunpack.c.l.b16 %v597
      %v718 = vunpack.c.l.b16 %v598
      %v719 = vunpack.c.l.b16 %v599
      %v720 = vpack.c.b16 %v673, %v672
      %v721 = vpack.c.b16 %v675, %v674
      %v722 = vpack.c.b16 %v677, %v676
      %v723 = vpack.c.b16 %v679, %v678
      %v724 = vpack.c.b16 %v681, %v680
      %v725 = vpack.c.b16 %v683, %v682
      %v726 = vpack.c.b16 %v685, %v684
      %v727 = vpack.c.b16 %v687, %v686
      %v728 = vpack.c.b16 %v689, %v688
      %v729 = vpack.c.b16 %v691, %v690
      %v730 = vpack.c.b16 %v693, %v692
      %v731 = vpack.c.b16 %v695, %v694
      %v732 = vpack.c.b16 %v697, %v696
      %v733 = vpack.c.b16 %v699, %v698
      %v734 = vpack.c.b16 %v701, %v700
      %v735 = vpack.c.b16 %v703, %v702
      %v736 = vpack.c.b16 %v705, %v704
      %v737 = vpack.c.b16 %v707, %v706
      %v738 = vpack.c.b16 %v709, %v708
      %v739 = vpack.c.b16 %v711, %v710
      %v740 = vpack.c.b16 %v713, %v712
      %v741 = vpack.c.b16 %v715, %v714
      %v742 = vpack.c.b16 %v717, %v716
      %v743 = vpack.c.b16 %v719, %v718
      %768 = vmatprep.subr.bf16.mxu0 0
      %769 = vmatpush1.bf16.msra.mxu0 %v727
      %770 = vmatprep.subr.bf16.mxu0 0
      %771 = vmatpush1.bf16.msra.mxu0 %v726
      %772 = vmatprep.subr.bf16.mxu0 0
      %773 = vmatpush1.bf16.msra.mxu0 %v725
      %774 = vmatprep.subr.bf16.mxu0 0
      %775 = vmatpush1.bf16.msra.mxu0 %v724
      %776 = vmatprep.subr.bf16.mxu0 0
      %777 = vmatpush1.bf16.msra.mxu0 %v723
      %778 = vmatprep.subr.bf16.mxu0 0
      %779 = vmatpush1.bf16.msra.mxu0 %v722
      %780 = vmatprep.subr.bf16.mxu0 0
      %781 = vmatpush1.bf16.msra.mxu0 %v721
      %782 = vmatprep.subr.bf16.mxu0 0
      %783 = vmatpush1.bf16.msra.mxu0 %v720
      %784 = vmatprep.subr.bf16.mxu0 0
      %785 = vmatpush2.bf16.msra.mxu0 %v735
      %786 = vmatprep.subr.bf16.mxu0 0
      %787 = vmatpush2.bf16.msra.mxu0 %v734
      %788 = vmatprep.subr.bf16.mxu0 0
      %789 = vmatpush2.bf16.msra.mxu0 %v733
      %790 = vmatprep.subr.bf16.mxu0 0
      %791 = vmatpush2.bf16.msra.mxu0 %v732
      %792 = vmatprep.subr.bf16.mxu0 0
      %793 = vmatpush2.bf16.msra.mxu0 %v731
      %794 = vmatprep.subr.bf16.mxu0 0
      %795 = vmatpush2.bf16.msra.mxu0 %v730
      %796 = vmatprep.subr.bf16.mxu0 0
      %797 = vmatpush2.bf16.msra.mxu0 %v729
      %798 = vmatprep.subr.bf16.mxu0 0
      %799 = vmatpush2.bf16.msra.mxu0 %v728
      %800 = vmatprep.mubr.bf16.mxu0 %v601
      %801 = vmatmul.mubr.bf16.gmra.mxu0 %v600
      %v802 = vpop.f32.mrf.mxu0
      %v803 = vadd.f32 0.0, %v802
      %v804 = vpop.f32.mrf.mxu0
      %v805 = vpop.f32.mrf.mxu0
      %v806 = vadd.f32 0.0, %v805
      %v807 = vpop.f32.mrf.mxu0
      %808 = vmatprep.mubr.bf16.mxu0 %v604
      %809 = vmatmul.mubr.bf16.gmra.mxu0 %v603
      %v810 = vpop.f32.mrf.mxu0
      %v811 = vadd.f32 0.0, %v810
      %v812 = vpop.f32.mrf.mxu0
      %v813 = vpop.f32.mrf.mxu0
      %v814 = vadd.f32 0.0, %v813
      %v815 = vpop.f32.mrf.mxu0
      %816 = vmatprep.mubr.bf16.mxu0 %v607
      %817 = vmatmul.mubr.bf16.gmra.mxu0 %v606
      %v818 = vpop.f32.mrf.mxu0
      %v819 = vadd.f32 0.0, %v818
      %v820 = vpop.f32.mrf.mxu0
      %v821 = vpop.f32.mrf.mxu0
      %v822 = vadd.f32 0.0, %v821
      %v823 = vpop.f32.mrf.mxu0
      %824 = vmatprep.mubr.bf16.mxu0 %v610
      %825 = vmatmul.mubr.bf16.gmra.mxu0 %v609
      %v826 = vpop.f32.mrf.mxu0
      %v827 = vadd.f32 0.0, %v826
      %v828 = vpop.f32.mrf.mxu0
      %v829 = vpop.f32.mrf.mxu0
      %v830 = vadd.f32 0.0, %v829
      %v831 = vpop.f32.mrf.mxu0
      %832 = vdwg.mxu0
      %833 = vmatprep.subr.bf16.mxu0 0
      %834 = vmatpush1.bf16.msra.mxu0 %v743
      %835 = vmatprep.subr.bf16.mxu0 0
      %836 = vmatpush1.bf16.msra.mxu0 %v742
      %837 = vmatprep.subr.bf16.mxu0 0
      %838 = vmatpush1.bf16.msra.mxu0 %v741
      %839 = vmatprep.subr.bf16.mxu0 0
      %840 = vmatpush1.bf16.msra.mxu0 %v740
      %841 = vmatprep.subr.bf16.mxu0 0
      %842 = vmatpush1.bf16.msra.mxu0 %v739
      %843 = vmatprep.subr.bf16.mxu0 0
      %844 = vmatpush1.bf16.msra.mxu0 %v738
      %845 = vmatprep.subr.bf16.mxu0 0
      %846 = vmatpush1.bf16.msra.mxu0 %v737
      %847 = vmatprep.subr.bf16.mxu0 0
      %848 = vmatpush1.bf16.msra.mxu0 %v736
      %849 = vmatprep.subr.bf16.mxu0 0
      %850 = vmatpush2.bf16.msra.mxu0 0
      %851 = vmatprep.subr.bf16.mxu0 0
      %852 = vmatpush2.bf16.msra.mxu0 0
      %853 = vmatprep.subr.bf16.mxu0 0
      %854 = vmatpush2.bf16.msra.mxu0 0
      %855 = vmatprep.subr.bf16.mxu0 0
      %856 = vmatpush2.bf16.msra.mxu0 0
      %857 = vmatprep.subr.bf16.mxu0 0
      %858 = vmatpush2.bf16.msra.mxu0 0
      %859 = vmatprep.subr.bf16.mxu0 0
      %860 = vmatpush2.bf16.msra.mxu0 0
      %861 = vmatprep.subr.bf16.mxu0 0
      %862 = vmatpush2.bf16.msra.mxu0 0
      %863 = vmatprep.subr.bf16.mxu0 0
      %864 = vmatpush2.bf16.msra.mxu0 0
      %865 = vmatprep.mubr.bf16.mxu0 0
      %866 = vmatmul.mubr.bf16.gmra.mxu0 %v602
      %v867 = vpop.f32.mrf.mxu0
      %v868 = vadd.f32 %v803, %v867
      %v869 = vpop.f32.mrf.mxu0
      %v870 = vpop.f32.mrf.mxu0
      %v871 = vadd.f32 %v806, %v870
      %v872 = vpop.f32.mrf.mxu0
      %873 = vmatprep.mubr.bf16.mxu0 0
      %874 = vmatmul.mubr.bf16.gmra.mxu0 %v605
      %v875 = vpop.f32.mrf.mxu0
      %v876 = vadd.f32 %v811, %v875
      %v877 = vpop.f32.mrf.mxu0
      %v878 = vpop.f32.mrf.mxu0
      %v879 = vadd.f32 %v814, %v878
      %v880 = vpop.f32.mrf.mxu0
      %881 = vmatprep.mubr.bf16.mxu0 0
      %882 = vmatmul.mubr.bf16.gmra.mxu0 %v608
      %v883 = vpop.f32.mrf.mxu0
      %v884 = vadd.f32 %v819, %v883
      %v885 = vpop.f32.mrf.mxu0
      %v886 = vpop.f32.mrf.mxu0
      %v887 = vadd.f32 %v822, %v886
      %v888 = vpop.f32.mrf.mxu0
      %889 = vmatprep.mubr.bf16.mxu0 0
      %890 = vmatmul.mubr.bf16.gmra.mxu0 %v611
      %v891 = vpop.f32.mrf.mxu0
      %v892 = vadd.f32 %v827, %v891
      %v893 = vpop.f32.mrf.mxu0
      %v894 = vpop.f32.mrf.mxu0
      %v895 = vadd.f32 %v830, %v894
      %v896 = vpop.f32.mrf.mxu0
      %897 = vdwg.mxu0
      %v898 = vpack.c.b16 %v470, %v467
      %v899 = vpack.c.b16 %v471, %v468
      %v900 = vpack.c.b16 %v472, %v469
      %v901 = vpack.c.b16 %v476, %v473
      %v902 = vpack.c.b16 %v477, %v474
      %v903 = vpack.c.b16 %v478, %v475
      %v904 = vpack.c.b16 %v482, %v479
      %v905 = vpack.c.b16 %v483, %v480
      %v906 = vpack.c.b16 %v484, %v481
      %v907 = vpack.c.b16 %v488, %v485
      %v908 = vpack.c.b16 %v489, %v486
      %v909 = vpack.c.b16 %v490, %v487
      %v970 = vunpack.c.l.b16 %v491
      %v971 = vunpack.c.l.b16 %v492
      %v972 = vunpack.c.l.b16 %v493
      %v973 = vunpack.c.l.b16 %v494
      %v974 = vunpack.c.l.b16 %v495
      %v975 = vunpack.c.l.b16 %v496
      %v976 = vunpack.c.l.b16 %v497
      %v977 = vunpack.c.l.b16 %v498
      %v978 = vunpack.c.l.b16 %v499
      %v979 = vunpack.c.l.b16 %v500
      %v980 = vunpack.c.l.b16 %v501
      %v981 = vunpack.c.l.b16 %v502
      %v982 = vunpack.c.l.b16 %v503
      %v983 = vunpack.c.l.b16 %v504
      %v984 = vunpack.c.l.b16 %v505
      %v985 = vunpack.c.l.b16 %v506
      %v986 = vunpack.c.l.b16 %v507
      %v987 = vunpack.c.l.b16 %v508
      %v988 = vunpack.c.l.b16 %v509
      %v989 = vunpack.c.l.b16 %v510
      %v990 = vunpack.c.l.b16 %v511
      %v991 = vunpack.c.l.b16 %v512
      %v992 = vunpack.c.l.b16 %v513
      %v993 = vunpack.c.l.b16 %v514
      %v994 = vunpack.c.l.b16 %v515
      %v995 = vunpack.c.l.b16 %v516
      %v996 = vunpack.c.l.b16 %v517
      %v997 = vunpack.c.l.b16 %v518
      %v998 = vunpack.c.l.b16 %v519
      %v999 = vunpack.c.l.b16 %v520
      %v1000 = vunpack.c.l.b16 %v521
      %v1001 = vunpack.c.l.b16 %v522
      %v1002 = vunpack.c.l.b16 %v523
      %v1003 = vunpack.c.l.b16 %v524
      %v1004 = vunpack.c.l.b16 %v525
      %v1005 = vunpack.c.l.b16 %v526
      %v1006 = vunpack.c.l.b16 %v527
      %v1007 = vunpack.c.l.b16 %v528
      %v1008 = vunpack.c.l.b16 %v529
      %v1009 = vunpack.c.l.b16 %v530
      %v1010 = vunpack.c.l.b16 %v531
      %v1011 = vunpack.c.l.b16 %v532
      %v1012 = vunpack.c.l.b16 %v533
      %v1013 = vunpack.c.l.b16 %v534
      %v1014 = vunpack.c.l.b16 %v535
      %v1015 = vunpack.c.l.b16 %v536
      %v1016 = vunpack.c.l.b16 %v537
      %v1017 = vunpack.c.l.b16 %v538
      %v1018 = vpack.c.b16 %v971, %v970
      %v1019 = vpack.c.b16 %v973, %v972
      %v1020 = vpack.c.b16 %v975, %v974
      %v1021 = vpack.c.b16 %v977, %v976
      %v1022 = vpack.c.b16 %v979, %v978
      %v1023 = vpack.c.b16 %v981, %v980
      %v1024 = vpack.c.b16 %v983, %v982
      %v1025 = vpack.c.b16 %v985, %v984
      %v1026 = vpack.c.b16 %v987, %v986
      %v1027 = vpack.c.b16 %v989, %v988
      %v1028 = vpack.c.b16 %v991, %v990
      %v1029 = vpack.c.b16 %v993, %v992
      %v1030 = vpack.c.b16 %v995, %v994
      %v1031 = vpack.c.b16 %v997, %v996
      %v1032 = vpack.c.b16 %v999, %v998
      %v1033 = vpack.c.b16 %v1001, %v1000
      %v1034 = vpack.c.b16 %v1003, %v1002
      %v1035 = vpack.c.b16 %v1005, %v1004
      %v1036 = vpack.c.b16 %v1007, %v1006
      %v1037 = vpack.c.b16 %v1009, %v1008
      %v1038 = vpack.c.b16 %v1011, %v1010
      %v1039 = vpack.c.b16 %v1013, %v1012
      %v1040 = vpack.c.b16 %v1015, %v1014
      %v1041 = vpack.c.b16 %v1017, %v1016
      %1066 = vmatprep.subr.bf16.mxu0 0
      %1067 = vmatpush1.bf16.msra.mxu0 %v1025
      %1068 = vmatprep.subr.bf16.mxu0 0
      %1069 = vmatpush1.bf16.msra.mxu0 %v1024
      %1070 = vmatprep.subr.bf16.mxu0 0
      %1071 = vmatpush1.bf16.msra.mxu0 %v1023
      %1072 = vmatprep.subr.bf16.mxu0 0
      %1073 = vmatpush1.bf16.msra.mxu0 %v1022
      %1074 = vmatprep.subr.bf16.mxu0 0
      %1075 = vmatpush1.bf16.msra.mxu0 %v1021
      %1076 = vmatprep.subr.bf16.mxu0 0
      %1077 = vmatpush1.bf16.msra.mxu0 %v1020
      %1078 = vmatprep.subr.bf16.mxu0 0
      %1079 = vmatpush1.bf16.msra.mxu0 %v1019
      %1080 = vmatprep.subr.bf16.mxu0 0
      %1081 = vmatpush1.bf16.msra.mxu0 %v1018
      %1082 = vmatprep.subr.bf16.mxu0 0
      %1083 = vmatpush2.bf16.msra.mxu0 %v1033
      %1084 = vmatprep.subr.bf16.mxu0 0
      %1085 = vmatpush2.bf16.msra.mxu0 %v1032
      %1086 = vmatprep.subr.bf16.mxu0 0
      %1087 = vmatpush2.bf16.msra.mxu0 %v1031
      %1088 = vmatprep.subr.bf16.mxu0 0
      %1089 = vmatpush2.bf16.msra.mxu0 %v1030
      %1090 = vmatprep.subr.bf16.mxu0 0
      %1091 = vmatpush2.bf16.msra.mxu0 %v1029
      %1092 = vmatprep.subr.bf16.mxu0 0
      %1093 = vmatpush2.bf16.msra.mxu0 %v1028
      %1094 = vmatprep.subr.bf16.mxu0 0
      %1095 = vmatpush2.bf16.msra.mxu0 %v1027
      %1096 = vmatprep.subr.bf16.mxu0 0
      %1097 = vmatpush2.bf16.msra.mxu0 %v1026
      %1098 = vmatprep.mubr.bf16.mxu0 %v899
      %1099 = vmatmul.mubr.bf16.gmra.mxu0 %v898
      %v1100 = vpop.f32.mrf.mxu0
      %v1101 = vadd.f32 %v868, %v1100
      %v1102 = vpop.f32.mrf.mxu0
      %v1103 = vpop.f32.mrf.mxu0
      %v1104 = vadd.f32 %v871, %v1103
      %v1105 = vpop.f32.mrf.mxu0
      %1106 = vmatprep.mubr.bf16.mxu0 %v902
      %1107 = vmatmul.mubr.bf16.gmra.mxu0 %v901
      %v1108 = vpop.f32.mrf.mxu0
      %v1109 = vadd.f32 %v876, %v1108
      %v1110 = vpop.f32.mrf.mxu0
      %v1111 = vpop.f32.mrf.mxu0
      %v1112 = vadd.f32 %v879, %v1111
      %v1113 = vpop.f32.mrf.mxu0
      %1114 = vmatprep.mubr.bf16.mxu0 %v905
      %1115 = vmatmul.mubr.bf16.gmra.mxu0 %v904
      %v1116 = vpop.f32.mrf.mxu0
      %v1117 = vadd.f32 %v884, %v1116
      %v1118 = vpop.f32.mrf.mxu0
      %v1119 = vpop.f32.mrf.mxu0
      %v1120 = vadd.f32 %v887, %v1119
      %v1121 = vpop.f32.mrf.mxu0
      %1122 = vmatprep.mubr.bf16.mxu0 %v908
      %1123 = vmatmul.mubr.bf16.gmra.mxu0 %v907
      %v1124 = vpop.f32.mrf.mxu0
      %v1125 = vadd.f32 %v892, %v1124
      %v1126 = vpop.f32.mrf.mxu0
      %v1127 = vpop.f32.mrf.mxu0
      %v1128 = vadd.f32 %v895, %v1127
      %v1129 = vpop.f32.mrf.mxu0
      %1130 = vdwg.mxu0
      %1131 = vmatprep.subr.bf16.mxu0 0
      %1132 = vmatpush1.bf16.msra.mxu0 %v1041
      %1133 = vmatprep.subr.bf16.mxu0 0
      %1134 = vmatpush1.bf16.msra.mxu0 %v1040
      %1135 = vmatprep.subr.bf16.mxu0 0
      %1136 = vmatpush1.bf16.msra.mxu0 %v1039
      %1137 = vmatprep.subr.bf16.mxu0 0
      %1138 = vmatpush1.bf16.msra.mxu0 %v1038
      %1139 = vmatprep.subr.bf16.mxu0 0
      %1140 = vmatpush1.bf16.msra.mxu0 %v1037
      %1141 = vmatprep.subr.bf16.mxu0 0
      %1142 = vmatpush1.bf16.msra.mxu0 %v1036
      %1143 = vmatprep.subr.bf16.mxu0 0
      %1144 = vmatpush1.bf16.msra.mxu0 %v1035
      %1145 = vmatprep.subr.bf16.mxu0 0
      %1146 = vmatpush1.bf16.msra.mxu0 %v1034
      %1147 = vmatprep.subr.bf16.mxu0 0
      %1148 = vmatpush2.bf16.msra.mxu0 0
      %1149 = vmatprep.subr.bf16.mxu0 0
      %1150 = vmatpush2.bf16.msra.mxu0 0
      %1151 = vmatprep.subr.bf16.mxu0 0
      %1152 = vmatpush2.bf16.msra.mxu0 0
      %1153 = vmatprep.subr.bf16.mxu0 0
      %1154 = vmatpush2.bf16.msra.mxu0 0
      %1155 = vmatprep.subr.bf16.mxu0 0
      %1156 = vmatpush2.bf16.msra.mxu0 0
      %1157 = vmatprep.subr.bf16.mxu0 0
      %1158 = vmatpush2.bf16.msra.mxu0 0
      %1159 = vmatprep.subr.bf16.mxu0 0
      %1160 = vmatpush2.bf16.msra.mxu0 0
      %1161 = vmatprep.subr.bf16.mxu0 0
      %1162 = vmatpush2.bf16.msra.mxu0 0
      %1163 = vmatprep.mubr.bf16.mxu0 0
      %1164 = vmatmul.mubr.bf16.gmra.mxu0 %v900
      %v1165 = vpop.f32.mrf.mxu0
      %v1166 = vadd.f32 %v1101, %v1165
      %v1167 = vpop.f32.mrf.mxu0
      %v1168 = vpop.f32.mrf.mxu0
      %v1169 = vadd.f32 %v1104, %v1168
      %v1170 = vpop.f32.mrf.mxu0
      %1171 = vmatprep.mubr.bf16.mxu0 0
      %1172 = vmatmul.mubr.bf16.gmra.mxu0 %v903
      %v1173 = vpop.f32.mrf.mxu0
      %v1174 = vadd.f32 %v1109, %v1173
      %v1175 = vpop.f32.mrf.mxu0
      %v1176 = vpop.f32.mrf.mxu0
      %v1177 = vadd.f32 %v1112, %v1176
      %v1178 = vpop.f32.mrf.mxu0
      %1179 = vmatprep.mubr.bf16.mxu0 0
      %1180 = vmatmul.mubr.bf16.gmra.mxu0 %v906
      %v1181 = vpop.f32.mrf.mxu0
      %v1182 = vadd.f32 %v1117, %v1181
      %v1183 = vpop.f32.mrf.mxu0
      %v1184 = vpop.f32.mrf.mxu0
      %v1185 = vadd.f32 %v1120, %v1184
      %v1186 = vpop.f32.mrf.mxu0
      %1187 = vmatprep.mubr.bf16.mxu0 0
      %1188 = vmatmul.mubr.bf16.gmra.mxu0 %v909
      %v1189 = vpop.f32.mrf.mxu0
      %v1190 = vadd.f32 %v1125, %v1189
      %v1191 = vpop.f32.mrf.mxu0
      %v1192 = vpop.f32.mrf.mxu0
      %v1193 = vadd.f32 %v1128, %v1192
      %v1194 = vpop.f32.mrf.mxu0
      %1195 = vdwg.mxu0
      %s1196 = scalar_lea.vmem %s3, 384
      %v1197 = vld [vmem:[%s1196] sm:$0xf]
      %v1198 = vld [vmem:[%s1196 + $0x4] sm:$0xf]
      %v1199 = vld [vmem:[%s1196 + $0x8] sm:$0xf]
      %v1200 = vld [vmem:[%s1196 + $0xc] sm:$0xf]
      %v1201 = vld [vmem:[%s1196 + $0x10] sm:$0xf]
      %v1202 = vld [vmem:[%s1196 + $0x14] sm:$0xf]
      %v1203 = vld [vmem:[%s1196 + $0x18] sm:$0xf]
      %v1204 = vld [vmem:[%s1196 + $0x1c] sm:$0xf]
      %v1205 = vld [vmem:[%s1196 + $0x20] sm:$0xf]
      %v1206 = vld [vmem:[%s1196 + $0x24] sm:$0xf]
      %v1207 = vld [vmem:[%s1196 + $0x28] sm:$0xf]
      %v1208 = vld [vmem:[%s1196 + $0x2c] sm:$0xf]
      %v1209 = vld [vmem:[%s1196 + $0x30] sm:$0xf]
      %v1210 = vld [vmem:[%s1196 + $0x34] sm:$0xf]
      %v1211 = vld [vmem:[%s1196 + $0x38] sm:$0xf]
      %v1212 = vld [vmem:[%s1196 + $0x3c] sm:$0xf]
      %v1213 = vld [vmem:[%s1196 + $0x40] sm:$0xf]
      %v1214 = vld [vmem:[%s1196 + $0x44] sm:$0xf]
      %v1215 = vld [vmem:[%s1196 + $0x48] sm:$0xf]
      %v1216 = vld [vmem:[%s1196 + $0x4c] sm:$0xf]
      %v1217 = vld [vmem:[%s1196 + $0x50] sm:$0xf]
      %v1218 = vld [vmem:[%s1196 + $0x54] sm:$0xf]
      %v1219 = vld [vmem:[%s1196 + $0x58] sm:$0xf]
      %v1220 = vld [vmem:[%s1196 + $0x5c] sm:$0xf]
      %v1221 = vld [vmem:[%s1196 + $0x60] sm:$0xf]
      %v1222 = vld [vmem:[%s1196 + $0x64] sm:$0xf]
      %v1223 = vld [vmem:[%s1196 + $0x68] sm:$0xf]
      %v1224 = vld [vmem:[%s1196 + $0x6c] sm:$0xf]
      %v1225 = vld [vmem:[%s1196 + $0x70] sm:$0xf]
      %v1226 = vld [vmem:[%s1196 + $0x74] sm:$0xf]
      %v1227 = vld [vmem:[%s1196 + $0x78] sm:$0xf]
      %v1228 = vld [vmem:[%s1196 + $0x7c] sm:$0xf]
      %v1229 = vld [vmem:[%s1196 + $0x80] sm:$0xf]
      %v1230 = vld [vmem:[%s1196 + $0x84] sm:$0xf]
      %v1231 = vld [vmem:[%s1196 + $0x88] sm:$0xf]
      %v1232 = vld [vmem:[%s1196 + $0x8c] sm:$0xf]
      %v1233 = vld [vmem:[%s1196 + $0x90] sm:$0xf]
      %v1234 = vld [vmem:[%s1196 + $0x94] sm:$0xf]
      %v1235 = vld [vmem:[%s1196 + $0x98] sm:$0xf]
      %v1236 = vld [vmem:[%s1196 + $0x9c] sm:$0xf]
      %v1237 = vld [vmem:[%s1196 + $0xa0] sm:$0xf]
      %v1238 = vld [vmem:[%s1196 + $0xa4] sm:$0xf]
      %v1239 = vld [vmem:[%s1196 + $0xa8] sm:$0xf]
      %v1240 = vld [vmem:[%s1196 + $0xac] sm:$0xf]
      %v1241 = vld [vmem:[%s1196 + $0xb0] sm:$0xf]
      %v1242 = vld [vmem:[%s1196 + $0xb4] sm:$0xf]
      %v1243 = vld [vmem:[%s1196 + $0xb8] sm:$0xf]
      %v1244 = vld [vmem:[%s1196 + $0xbc] sm:$0xf]
      %v1245 = vpack.c.b16 %v467, %v548
      %v1246 = vpack.c.b16 %v468, %v549
      %v1247 = vpack.c.b16 %v469, %v550
      %v1299 = vunpack.c.l.b16 %v1197
      %v1300 = vunpack.c.l.b16 %v1198
      %v1301 = vunpack.c.l.b16 %v1199
      %v1302 = vunpack.c.l.b16 %v1200
      %v1303 = vunpack.c.l.b16 %v1201
      %v1304 = vunpack.c.l.b16 %v1202
      %v1305 = vunpack.c.l.b16 %v1203
      %v1306 = vunpack.c.l.b16 %v1204
      %v1307 = vunpack.c.l.b16 %v1205
      %v1308 = vunpack.c.l.b16 %v1206
      %v1309 = vunpack.c.l.b16 %v1207
      %v1310 = vunpack.c.l.b16 %v1208
      %v1311 = vunpack.c.l.b16 %v1209
      %v1312 = vunpack.c.l.b16 %v1210
      %v1313 = vunpack.c.l.b16 %v1211
      %v1314 = vunpack.c.l.b16 %v1212
      %v1315 = vunpack.c.l.b16 %v1213
      %v1316 = vunpack.c.l.b16 %v1214
      %v1317 = vunpack.c.l.b16 %v1215
      %v1318 = vunpack.c.l.b16 %v1216
      %v1319 = vunpack.c.l.b16 %v1217
      %v1320 = vunpack.c.l.b16 %v1218
      %v1321 = vunpack.c.l.b16 %v1219
      %v1322 = vunpack.c.l.b16 %v1220
      %v1323 = vunpack.c.l.b16 %v1221
      %v1324 = vunpack.c.l.b16 %v1222
      %v1325 = vunpack.c.l.b16 %v1223
      %v1326 = vunpack.c.l.b16 %v1224
      %v1327 = vunpack.c.l.b16 %v1225
      %v1328 = vunpack.c.l.b16 %v1226
      %v1329 = vunpack.c.l.b16 %v1227
      %v1330 = vunpack.c.l.b16 %v1228
      %v1331 = vunpack.c.l.b16 %v1229
      %v1332 = vunpack.c.l.b16 %v1230
      %v1333 = vunpack.c.l.b16 %v1231
      %v1334 = vunpack.c.l.b16 %v1232
      %v1335 = vunpack.c.l.b16 %v1233
      %v1336 = vunpack.c.l.b16 %v1234
      %v1337 = vunpack.c.l.b16 %v1235
      %v1338 = vunpack.c.l.b16 %v1236
      %v1339 = vunpack.c.l.b16 %v1237
      %v1340 = vunpack.c.l.b16 %v1238
      %v1341 = vunpack.c.l.b16 %v1239
      %v1342 = vunpack.c.l.b16 %v1240
      %v1343 = vunpack.c.l.b16 %v1241
      %v1344 = vunpack.c.l.b16 %v1242
      %v1345 = vunpack.c.l.b16 %v1243
      %v1346 = vunpack.c.l.b16 %v1244
      %v1347 = vpack.c.b16 %v1300, %v1299
      %v1348 = vpack.c.b16 %v1302, %v1301
      %v1349 = vpack.c.b16 %v1304, %v1303
      %v1350 = vpack.c.b16 %v1306, %v1305
      %v1351 = vpack.c.b16 %v1308, %v1307
      %v1352 = vpack.c.b16 %v1310, %v1309
      %v1353 = vpack.c.b16 %v1312, %v1311
      %v1354 = vpack.c.b16 %v1314, %v1313
      %v1355 = vpack.c.b16 %v1316, %v1315
      %v1356 = vpack.c.b16 %v1318, %v1317
      %v1357 = vpack.c.b16 %v1320, %v1319
      %v1358 = vpack.c.b16 %v1322, %v1321
      %v1359 = vpack.c.b16 %v1324, %v1323
      %v1360 = vpack.c.b16 %v1326, %v1325
      %v1361 = vpack.c.b16 %v1328, %v1327
      %v1362 = vpack.c.b16 %v1330, %v1329
      %v1363 = vpack.c.b16 %v1332, %v1331
      %v1364 = vpack.c.b16 %v1334, %v1333
      %v1365 = vpack.c.b16 %v1336, %v1335
      %v1366 = vpack.c.b16 %v1338, %v1337
      %v1367 = vpack.c.b16 %v1340, %v1339
      %v1368 = vpack.c.b16 %v1342, %v1341
      %v1369 = vpack.c.b16 %v1344, %v1343
      %v1370 = vpack.c.b16 %v1346, %v1345
      %1395 = vmatprep.subr.bf16.mxu0 0
      %1396 = vmatpush1.bf16.msra.mxu0 %v1354
      %1397 = vmatprep.subr.bf16.mxu0 0
      %1398 = vmatpush1.bf16.msra.mxu0 %v1353
      %1399 = vmatprep.subr.bf16.mxu0 0
      %1400 = vmatpush1.bf16.msra.mxu0 %v1352
      %1401 = vmatprep.subr.bf16.mxu0 0
      %1402 = vmatpush1.bf16.msra.mxu0 %v1351
      %1403 = vmatprep.subr.bf16.mxu0 0
      %1404 = vmatpush1.bf16.msra.mxu0 %v1350
      %1405 = vmatprep.subr.bf16.mxu0 0
      %1406 = vmatpush1.bf16.msra.mxu0 %v1349
      %1407 = vmatprep.subr.bf16.mxu0 0
      %1408 = vmatpush1.bf16.msra.mxu0 %v1348
      %1409 = vmatprep.subr.bf16.mxu0 0
      %1410 = vmatpush1.bf16.msra.mxu0 %v1347
      %1411 = vmatprep.subr.bf16.mxu0 0
      %1412 = vmatpush2.bf16.msra.mxu0 %v1362
      %1413 = vmatprep.subr.bf16.mxu0 0
      %1414 = vmatpush2.bf16.msra.mxu0 %v1361
      %1415 = vmatprep.subr.bf16.mxu0 0
      %1416 = vmatpush2.bf16.msra.mxu0 %v1360
      %1417 = vmatprep.subr.bf16.mxu0 0
      %1418 = vmatpush2.bf16.msra.mxu0 %v1359
      %1419 = vmatprep.subr.bf16.mxu0 0
      %1420 = vmatpush2.bf16.msra.mxu0 %v1358
      %1421 = vmatprep.subr.bf16.mxu0 0
      %1422 = vmatpush2.bf16.msra.mxu0 %v1357
      %1423 = vmatprep.subr.bf16.mxu0 0
      %1424 = vmatpush2.bf16.msra.mxu0 %v1356
      %1425 = vmatprep.subr.bf16.mxu0 0
      %1426 = vmatpush2.bf16.msra.mxu0 %v1355
      %1427 = vmatprep.mubr.bf16.mxu0 %v902
      %1428 = vmatmul.mubr.bf16.gmra.mxu0 %v901
      %v1429 = vpop.f32.mrf.mxu0
      %v1430 = vadd.f32 0.0, %v1429
      %v1431 = vpop.f32.mrf.mxu0
      %v1432 = vpop.f32.mrf.mxu0
      %v1433 = vadd.f32 0.0, %v1432
      %v1434 = vpop.f32.mrf.mxu0
      %1435 = vmatprep.mubr.bf16.mxu0 %v905
      %1436 = vmatmul.mubr.bf16.gmra.mxu0 %v904
      %v1437 = vpop.f32.mrf.mxu0
      %v1438 = vadd.f32 0.0, %v1437
      %v1439 = vpop.f32.mrf.mxu0
      %v1440 = vpop.f32.mrf.mxu0
      %v1441 = vadd.f32 0.0, %v1440
      %v1442 = vpop.f32.mrf.mxu0
      %1443 = vmatprep.mubr.bf16.mxu0 %v908
      %1444 = vmatmul.mubr.bf16.gmra.mxu0 %v907
      %v1445 = vpop.f32.mrf.mxu0
      %v1446 = vadd.f32 0.0, %v1445
      %v1447 = vpop.f32.mrf.mxu0
      %v1448 = vpop.f32.mrf.mxu0
      %v1449 = vadd.f32 0.0, %v1448
      %v1450 = vpop.f32.mrf.mxu0
      %1451 = vmatprep.mubr.bf16.mxu0 %v1246
      %1452 = vmatmul.mubr.bf16.gmra.mxu0 %v1245
      %v1453 = vpop.f32.mrf.mxu0
      %v1454 = vadd.f32 0.0, %v1453
      %v1455 = vpop.f32.mrf.mxu0
      %v1456 = vpop.f32.mrf.mxu0
      %v1457 = vadd.f32 0.0, %v1456
      %v1458 = vpop.f32.mrf.mxu0
      %1459 = vdwg.mxu0
      %1460 = vmatprep.subr.bf16.mxu0 0
      %1461 = vmatpush1.bf16.msra.mxu0 %v1370
      %1462 = vmatprep.subr.bf16.mxu0 0
      %1463 = vmatpush1.bf16.msra.mxu0 %v1369
      %1464 = vmatprep.subr.bf16.mxu0 0
      %1465 = vmatpush1.bf16.msra.mxu0 %v1368
      %1466 = vmatprep.subr.bf16.mxu0 0
      %1467 = vmatpush1.bf16.msra.mxu0 %v1367
      %1468 = vmatprep.subr.bf16.mxu0 0
      %1469 = vmatpush1.bf16.msra.mxu0 %v1366
      %1470 = vmatprep.subr.bf16.mxu0 0
      %1471 = vmatpush1.bf16.msra.mxu0 %v1365
      %1472 = vmatprep.subr.bf16.mxu0 0
      %1473 = vmatpush1.bf16.msra.mxu0 %v1364
      %1474 = vmatprep.subr.bf16.mxu0 0
      %1475 = vmatpush1.bf16.msra.mxu0 %v1363
      %1476 = vmatprep.subr.bf16.mxu0 0
      %1477 = vmatpush2.bf16.msra.mxu0 0
      %1478 = vmatprep.subr.bf16.mxu0 0
      %1479 = vmatpush2.bf16.msra.mxu0 0
      %1480 = vmatprep.subr.bf16.mxu0 0
      %1481 = vmatpush2.bf16.msra.mxu0 0
      %1482 = vmatprep.subr.bf16.mxu0 0
      %1483 = vmatpush2.bf16.msra.mxu0 0
      %1484 = vmatprep.subr.bf16.mxu0 0
      %1485 = vmatpush2.bf16.msra.mxu0 0
      %1486 = vmatprep.subr.bf16.mxu0 0
      %1487 = vmatpush2.bf16.msra.mxu0 0
      %1488 = vmatprep.subr.bf16.mxu0 0
      %1489 = vmatpush2.bf16.msra.mxu0 0
      %1490 = vmatprep.subr.bf16.mxu0 0
      %1491 = vmatpush2.bf16.msra.mxu0 0
      %1492 = vmatprep.mubr.bf16.mxu0 0
      %1493 = vmatmul.mubr.bf16.gmra.mxu0 %v903
      %v1494 = vpop.f32.mrf.mxu0
      %v1495 = vadd.f32 %v1430, %v1494
      %v1496 = vpop.f32.mrf.mxu0
      %v1497 = vpop.f32.mrf.mxu0
      %v1498 = vadd.f32 %v1433, %v1497
      %v1499 = vpop.f32.mrf.mxu0
      %1500 = vmatprep.mubr.bf16.mxu0 0
      %1501 = vmatmul.mubr.bf16.gmra.mxu0 %v906
      %v1502 = vpop.f32.mrf.mxu0
      %v1503 = vadd.f32 %v1438, %v1502
      %v1504 = vpop.f32.mrf.mxu0
      %v1505 = vpop.f32.mrf.mxu0
      %v1506 = vadd.f32 %v1441, %v1505
      %v1507 = vpop.f32.mrf.mxu0
      %1508 = vmatprep.mubr.bf16.mxu0 0
      %1509 = vmatmul.mubr.bf16.gmra.mxu0 %v909
      %v1510 = vpop.f32.mrf.mxu0
      %v1511 = vadd.f32 %v1446, %v1510
      %v1512 = vpop.f32.mrf.mxu0
      %v1513 = vpop.f32.mrf.mxu0
      %v1514 = vadd.f32 %v1449, %v1513
      %v1515 = vpop.f32.mrf.mxu0
      %1516 = vmatprep.mubr.bf16.mxu0 0
      %1517 = vmatmul.mubr.bf16.gmra.mxu0 %v1247
      %v1518 = vpop.f32.mrf.mxu0
      %v1519 = vadd.f32 %v1454, %v1518
      %v1520 = vpop.f32.mrf.mxu0
      %v1521 = vpop.f32.mrf.mxu0
      %v1522 = vadd.f32 %v1457, %v1521
      %v1523 = vpop.f32.mrf.mxu0
      %1524 = vdwg.mxu0
      %v1525 = vadd.f32 %v1166, %v1495
      %v1526 = vadd.f32 %v1169, %v1498
      %v1527 = vadd.f32 %v1174, %v1503
      %v1528 = vadd.f32 %v1177, %v1506
      %v1529 = vadd.f32 %v1182, %v1511
      %v1530 = vadd.f32 %v1185, %v1514
      %v1531 = vadd.f32 %v1190, %v1519
      %v1532 = vadd.f32 %v1193, %v1522
      %v1533 = vpack.c.bf16 %v1525, %v1525
      %v1534 = vpack.c.bf16 %v1526, %v1526
      %v1535 = vpack.c.bf16 %v1527, %v1527
      %v1536 = vpack.c.bf16 %v1528, %v1528
      %v1537 = vpack.c.bf16 %v1529, %v1529
      %v1538 = vpack.c.bf16 %v1530, %v1530
      %v1539 = vpack.c.bf16 %v1531, %v1531
      %v1540 = vpack.c.bf16 %v1532, %v1532
      %1541 = vst [vmem:[%s231] sm:$0xf] %v1533
      %1542 = vst [vmem:[%s231 + $0x4] sm:$0xf] %v1534
      %1543 = vst [vmem:[%s231 + $0x8] sm:$0xf] %v1535
      %1544 = vst [vmem:[%s231 + $0xc] sm:$0xf] %v1536
      %1545 = vst [vmem:[%s231 + $0x10] sm:$0xf] %v1537
      %1546 = vst [vmem:[%s231 + $0x14] sm:$0xf] %v1538
      %1547 = vst [vmem:[%s231 + $0x18] sm:$0xf] %v1539
      %1548 = vst [vmem:[%s231 + $0x1c] sm:$0xf] %v1540
      %v1549 = vadd.f32 %v1525, %v1526
      %v1550 = vadd.f32 %v1549, %v1527
      %v1551 = vadd.f32 %v1550, %v1528
      %v1552 = vadd.f32 %v1551, %v1529
      %v1553 = vadd.f32 %v1552, %v1530
      %v1554 = vadd.f32 %v1553, %v1531
      %v1555 = vadd.f32 %v1554, %v1532
      %v1556 = vrot.slane %v1555, 4
      %v1557 = vadd.f32 %v1555, %v1556
      %v1558 = vrot.slane %v1557, 2
      %v1559 = vadd.f32 %v1557, %v1558
      %v1560 = vrot.slane %v1559, 1
      %v1561 = vadd.f32 %v1559, %v1560
      %v1562 = vmul.f32 %v1525, %v1525
      %v1563 = vmul.f32 %v1526, %v1526
      %v1564 = vmul.f32 %v1527, %v1527
      %v1565 = vmul.f32 %v1528, %v1528
      %v1566 = vmul.f32 %v1529, %v1529
      %v1567 = vmul.f32 %v1530, %v1530
      %v1568 = vmul.f32 %v1531, %v1531
      %v1569 = vmul.f32 %v1532, %v1532
      %v1570 = vadd.f32 %v1562, %v1563
      %v1571 = vadd.f32 %v1570, %v1564
      %v1572 = vadd.f32 %v1571, %v1565
      %v1573 = vadd.f32 %v1572, %v1566
      %v1574 = vadd.f32 %v1573, %v1567
      %v1575 = vadd.f32 %v1574, %v1568
      %v1576 = vadd.f32 %v1575, %v1569
      %v1577 = vrot.slane %v1576, 4
      %v1578 = vadd.f32 %v1576, %v1577
      %v1579 = vrot.slane %v1578, 2
      %v1580 = vadd.f32 %v1578, %v1579
      %v1581 = vrot.slane %v1580, 1
      %v1582 = vadd.f32 %v1580, %v1581
      %vm1583 = vcmask 1040384
      %v1584 = vsel %vm1583, %v1561, %v1582
      %1585 = vst [vmem:[%s235] sm:$0x3] %v1584
      %p1586 = scmp.lt.s32.totalorder %s17, 1
      %s1587 = scalar_select %p1586, %s17, 1
      %s1588 = smul.addr %s1587, 8
      %s1589 = smul.addr %s1588, 4
      %s1590 = scalar_lea.vmem %s4, %s1589
      %p1591 = scmp.lt.s32.totalorder %s17, 1
      %s1592 = scalar_select %p1591, %s17, 1
      %s1593 = smul.addr %s1592, 2
      %s1594 = scalar_lea.vmem %s5, %s1593
      // Predicated region
      $region37: #{slimmable_basic_block.4} parent=35 // pred_check
        %p1595 = pneg %p124
      $region38: #{slimmable_basic_block.4} parent=35 // pred_check_branch
        %1597 = sbr.rel (%p1595) target = $region40
      $region39: #{slimmable_basic_block.4} parent=35 // pred_region
        _
      $region40: #{slimmable_basic_block.4} parent=35 // pred_fallthru
        _
      // Predicated region
      $region41: #{slimmable_basic_block.4} parent=35 // pred_check
        %p1598 = pneg %p150
      $region42: #{slimmable_basic_block.4} parent=35 // pred_check_branch
        %1600 = sbr.rel (%p1598) target = $region44
      $region43: #{slimmable_basic_block.4} parent=35 // pred_region
        _
      $region44: #{slimmable_basic_block.4} parent=35 // pred_fallthru
        _
    $region36: #{slimmable_basic_block.4} parent=5 // pred_fallthru
      _
    %p1601 = scmp.le.s32.totalorder 2, %s12
    // Predicated region
    $region45: #{slimmable_basic_block.4} parent=5 // pred_check
      %p1602 = pneg %p1601
    $region46: #{slimmable_basic_block.4} parent=5 // pred_check_branch
      %1604 = sbr.rel (%p1602) target = $region48
    $region47: #{slimmable_basic_block.4} parent=5 // pred_region
      %s1605 = ssub.s32 %s12, 2
      // Predicated region
      $region49: #{slimmable_basic_block.4} parent=47 // pred_check
        %p1606 = pneg %p130
      $region50: #{slimmable_basic_block.4} parent=47 // pred_check_branch
        %1608 = sbr.rel (%p1606) target = $region52
      $region51: #{slimmable_basic_block.4} parent=47 // pred_region
        %p1609 = scmp.lt.s32.totalorder %s18, 1
        %s1610 = scalar_select %p1609, %s18, 1
        %s1611 = smul.addr %s1610, 8
        %s1612 = smul.addr %s1611, 4
        %s1613 = scalar_lea.vmem %s4, %s1612
      $region52: #{slimmable_basic_block.4} parent=47 // pred_fallthru
        _
      // Predicated region
      $region53: #{slimmable_basic_block.4} parent=47 // pred_check
        %p1614 = pneg %p156
      $region54: #{slimmable_basic_block.4} parent=47 // pred_check_branch
        %1616 = sbr.rel (%p1614) target = $region56
      $region55: #{slimmable_basic_block.4} parent=47 // pred_region
        %p1617 = scmp.lt.s32.totalorder %s18, 1
        %s1618 = scalar_select %p1617, %s18, 1
        %s1619 = smul.addr %s1618, 2
        %s1620 = scalar_lea.vmem %s5, %s1619
      $region56: #{slimmable_basic_block.4} parent=47 // pred_fallthru
        _
    $region48: #{slimmable_basic_block.4} parent=5 // pred_fallthru
      _
  $region6: #{slimmable_basic_block.4} parent=0 // loop_footer
    %s16 = sadd.s32 1, %s12
  $region7: #{slimmable_basic_block.4} parent=0 // loop_footer_branch
    %11 = sbr.rel target = $region3
  $region8: #{slimmable_basic_block.4} parent=0 // loop_exit
    _

</llo_original>
